<compile_context>
chip_gen: v7x
topology: tpu7x:2x2x1
jax: 0.10.0
libtpu: 0.0.40
codegen_flags: <defaults>
</compile_context>

<pallas_src>
import functools
import math

import jax
import jax.numpy as jnp
import numpy as np
from jax.experimental import pallas as pl
from jax.experimental.pallas import tpu as pltpu

_LN_EPS = 1e-5
_GN_EPS = 1e-5

_CONV_SPECS = [  # (Cin_div, Cout_div, kernel, stride) relative to latent_dim; last Cout is 2
    (1, 2, 3, 1),
    (2, 4, 5, 2),
    (4, 8, 5, 3),
    (8, None, 6, 3),
]


# ------------------------------ host-side parameter packing ------------------------------

class _Packer:
    """Packs many small f32 arrays into one (rows, lanes) blob; 8-sublane aligned offsets."""

    def __init__(self):
        self._items = []

    def add(self, name, arr):
        a = np.asarray(arr, dtype=np.float32)
        if a.ndim == 1:
            a = a[None, :]
        assert a.ndim == 2
        self._items.append((name, a))

    def pack(self):
        lanes = max(a.shape[1] for _, a in self._items)
        blocks, layout, off = [], {}, 0
        for name, a in self._items:
            r, c = a.shape
            rp = r + ((-r) % 8)                      # align every section to 8 sublanes
            blk = np.zeros((rp, lanes), np.float32)
            blk[:r, :c] = a
            blocks.append(blk)
            layout[name] = (off, r, c)
            off += rp
        return jnp.asarray(np.concatenate(blocks, axis=0)), layout


# ------------------------------ fused Pallas kernel ------------------------------

def _decoder_kernel(zq_ref, enc_ref, rec_ref, out_ref, *,
                    enc_layout, rec_layout, batch, n_tokens, nheads, nlayers, n_kps):
    f32 = jnp.float32
    d = zq_ref.shape[-1]
    hd = d // nheads
    S = n_tokens

    def enc(name):
        off, r, c = enc_layout[name]
        return enc_ref[off:off + r, :c]

    def rec(name):
        off, r, c = rec_layout[name]
        return rec_ref[off:off + r, :c]

    def layer_norm(v, g, b):
        mu = jnp.mean(v, axis=-1, keepdims=True)
        var = jnp.mean((v - mu) ** 2, axis=-1, keepdims=True)
        return (v - mu) * jax.lax.rsqrt(var + _LN_EPS) * g + b

    # ---- RoPE: x*cos + rotate_half(x)*sin; rotate_half as a signed-permutation matmul.
    #      cos/sin are pre-tiled over the (static) batch so everything stays 2-D. ----
    x = zq_ref[...]                                                   # (B*S, d)
    x = x * enc('cos') + jnp.dot(x, enc('rot'),
                                 preferred_element_type=f32) * enc('sin')

    # Block-diagonal additive bias (0 within a sample, -1e30 across samples) lets the whole
    # flattened (B*S, B*S) score matrix be computed with one matmul per head.
    attn_bias = enc('attn_bias')

    # ---- transformer encoder stack (post-LN, eval mode) ----
    for l in range(nlayers):                          # static unrolled layer loop
        qkv = jnp.dot(x, enc(f'wqkv{l}'), preferred_element_type=f32) + enc(f'bqkv{l}')
        ctx_heads = []
        for h in range(nheads):                       # static unrolled head loop
            qh = qkv[:, h * hd:(h + 1) * hd]                              # (B*S, hd)
            kh = qkv[:, d + h * hd:d + (h + 1) * hd]
            vh = qkv[:, 2 * d + h * hd:2 * d + (h + 1) * hd]
            s = jnp.einsum('qe,ke->qk', qh, kh,
                           preferred_element_type=f32) + attn_bias        # scale folded into Wq
            s = s - jnp.max(s, axis=-1, keepdims=True)
            p = jnp.exp(s)
            p = p * pl.reciprocal(jnp.sum(p, axis=-1, keepdims=True), approx=True)
            ctx_heads.append(jnp.dot(p, vh, preferred_element_type=f32))  # (B*S, hd)
        ctx = jnp.concatenate(ctx_heads, axis=-1)                         # (B*S, d)
        attn = jnp.dot(ctx, enc(f'wo{l}'), preferred_element_type=f32) + enc(f'bo{l}')
        h1 = layer_norm(x + attn, enc(f'ln1g{l}'), enc(f'ln1b{l}'))
        ff = jnp.dot(h1, enc(f'w1{l}'), preferred_element_type=f32) + enc(f'b1{l}')
        ff = jax.nn.gelu(ff)        # tanh-approx GELU (block source assumed, see TODO)
        ff = jnp.dot(ff, enc(f'w2{l}'), preferred_element_type=f32) + enc(f'b2{l}')
        x = layer_norm(h1 + ff, enc(f'ln2g{l}'), enc(f'ln2b{l}'))

    # ---- twin reconstruction branches: ConvTranspose1d as matmuls over flat (C*L) layout,
    #      GroupNorm(1,C) as per-row normalization, SiLU; final stage tanh.
    #      Each branch runs over ALL B*S tokens (rounds to the same sublane tiles as the
    #      per-branch token subsets would); the relevant rows are selected at store time. ----
    def recon(pfx):
        y = x
        for si in (1, 2, 3):
            vec = rec(f'{pfx}_v{si}')                 # rows: bias, gamma, beta (repeated per L)
            y = jnp.dot(y, rec(f'{pfx}_w{si}'), preferred_element_type=f32) + vec[0:1, :]
            mu = jnp.mean(y, axis=-1, keepdims=True)
            var = jnp.mean((y - mu) ** 2, axis=-1, keepdims=True)
            y = (y - mu) * jax.lax.rsqrt(var + _GN_EPS)
            y = y * vec[1:2, :] + vec[2:3, :]
            y = y * jax.nn.sigmoid(y)                 # SiLU
        y = jnp.dot(y, rec(f'{pfx}_w4'), preferred_element_type=f32) + rec(f'{pfx}_b4')
        return jnp.tanh(y)

    y_kps = recon('kps')                              # (B*S, 2*seq_len)
    y_bbox = recon('bbox')
    for b in range(batch):                            # static tiny unroll
        out_ref[b * S:b * S + n_kps, :] = y_kps[b * S:b * S + n_kps, :]
        out_ref[b * S + n_kps:(b + 1) * S, :] = y_bbox[b * S + n_kps:(b + 1) * S, :]


# ------------------------------ wrapper ------------------------------

def make_decoder_forward(enc_layout, rec_layout, *, nheads, nlayers, seq_len,
                         n_kps, n_bbox, latent_dim, batch, n_tokens):
    kern = functools.partial(
        _decoder_kernel, enc_layout=enc_layout, rec_layout=rec_layout,
        batch=batch, n_tokens=n_tokens, nheads=nheads, nlayers=nlayers, n_kps=n_kps)
    vmem = pl.BlockSpec(memory_space=pltpu.MemorySpace.VMEM)
    call = pl.pallas_call(
        kern,
        out_shape=jax.ShapeDtypeStruct((batch * n_tokens, 2 * seq_len), jnp.float32),
        in_specs=[vmem, vmem, vmem],
        out_specs=vmem,
    )

    @jax.jit
    def fwd(zq, enc_blob, rec_blob):
        flat = call(zq.reshape(batch * n_tokens, latent_dim), enc_blob, rec_blob)
        out = flat.reshape(batch, n_tokens, 2, seq_len)        # rows are channel-major (2, L)
        recon_kps = jnp.transpose(out[:, :n_kps], (0, 3, 1, 2))
        recon_bbox = jnp.transpose(out[:, n_kps:], (0, 3, 1, 2))
        return recon_kps, recon_bbox

    return fwd


# --------------------------- parameter construction ---------------------------

def _rope_tables(seq_len, dim, theta=10000.0):
    freqs = 1.0 / (theta ** (np.arange(0, dim, 2, dtype=np.float32) / dim))
    ang = np.outer(np.arange(seq_len, dtype=np.float32), freqs)   # (S, dim//2)
    ang = np.repeat(ang, 2, axis=-1)                              # interleaved pairs
    rot = np.zeros((dim, dim), dtype=np.float32)
    for i in range(dim // 2):
        rot[2 * i + 1, 2 * i] = -1.0    # rotate_half: out[2i]   = -x[2i+1]
        rot[2 * i, 2 * i + 1] = 1.0     #              out[2i+1] =  x[2i]
    return np.cos(ang).astype(np.float32), np.sin(ang).astype(np.float32), rot


def _init_encoder_params(key, nlayers, d, ffn):
    layers = []
    for k in jax.random.split(key, nlayers):
        ks = jax.random.split(k, 4)
        layers.append(dict(
            wqkv=np.asarray(jax.random.normal(ks[0], (d, 3 * d), jnp.float32)) / np.sqrt(d),
            bqkv=np.zeros((1, 3 * d), np.float32),
            wo=np.asarray(jax.random.normal(ks[1], (d, d), jnp.float32)) / np.sqrt(d),
            bo=np.zeros((1, d), np.float32),
            ln1_g=np.ones((1, d), np.float32), ln1_b=np.zeros((1, d), np.float32),
            w1=np.asarray(jax.random.normal(ks[2], (d, ffn), jnp.float32)) / np.sqrt(d),
            b1=np.zeros((1, ffn), np.float32),
            w2=np.asarray(jax.random.normal(ks[3], (ffn, d), jnp.float32)) / np.sqrt(ffn),
            b2=np.zeros((1, d), np.float32),
            ln2_g=np.ones((1, d), np.float32), ln2_b=np.zeros((1, d), np.float32)))
    return layers


def _build_convT_matrix(w_np, l_in, stride):
    # ConvTranspose1d (weight (Cin, Cout, K)) as a (Cin*L_in, Cout*L_out) matmul matrix.
    cin, cout, k = w_np.shape
    l_out = (l_in - 1) * stride + k
    m = np.zeros((cin, l_in, cout, l_out), dtype=np.float32)
    for i in range(l_in):
        m[:, i, :, i * stride:i * stride + k] = w_np
    return m.reshape(cin * l_in, cout * l_out), l_out


def _init_recon_params(key, latent_dim):
    stages, l_in = [], 1
    ks = jax.random.split(key, 2 * len(_CONV_SPECS))
    for idx, (cin_div, cout_div, k, stride) in enumerate(_CONV_SPECS):
        cin = latent_dim // cin_div
        cout = 2 if cout_div is None else latent_dim // cout_div
        w = np.asarray(jax.random.normal(ks[2 * idx], (cin, cout, k), jnp.float32)) / np.sqrt(cin * k)
        b = np.asarray(jax.random.normal(ks[2 * idx + 1], (cout,), jnp.float32)) * 0.02
        wbig, l_out = _build_convT_matrix(w, l_in, stride)
        bias_row = np.repeat(b, l_out)[None, :]
        if cout_div is None:                                      # final stage: no GroupNorm
            stages.append(dict(w=wbig, b=bias_row))
        else:
            gamma = np.repeat(np.ones(cout, np.float32), l_out)[None, :]
            beta = np.repeat(np.zeros(cout, np.float32), l_out)[None, :]
            stages.append(dict(w=wbig, vec=np.concatenate([bias_row, gamma, beta], axis=0)))
        l_in = l_out
    return stages, l_in


def _pack_params(enc_layers, kps_stages, bbox_stages, *, batch, n_tokens, latent_dim, nheads):
    d = latent_dim
    hd = d // nheads
    scale = 1.0 / math.sqrt(hd)
    cos, sin, rot = _rope_tables(n_tokens, d)

    ep = _Packer()
    ep.add('cos', np.tile(cos, (batch, 1)))       # pre-tiled over the flattened batch
    ep.add('sin', np.tile(sin, (batch, 1)))
    ep.add('rot', rot)
    bs = batch * n_tokens                         # block-diagonal cross-batch attention bias
    bias = np.full((bs, bs), -1e30, np.float32)
    for b in range(batch):
        bias[b * n_tokens:(b + 1) * n_tokens, b * n_tokens:(b + 1) * n_tokens] = 0.0
    ep.add('attn_bias', bias)
    for l, lyr in enumerate(enc_layers):
        wqkv = lyr['wqkv'].copy(); wqkv[:, :d] *= scale     # fold 1/sqrt(hd) into Q
        bqkv = lyr['bqkv'].copy(); bqkv[:, :d] *= scale
        ep.add(f'wqkv{l}', wqkv); ep.add(f'bqkv{l}', bqkv)
        ep.add(f'wo{l}', lyr['wo']); ep.add(f'bo{l}', lyr['bo'])
        ep.add(f'ln1g{l}', lyr['ln1_g']); ep.add(f'ln1b{l}', lyr['ln1_b'])
        ep.add(f'w1{l}', lyr['w1']); ep.add(f'b1{l}', lyr['b1'])
        ep.add(f'w2{l}', lyr['w2']); ep.add(f'b2{l}', lyr['b2'])
        ep.add(f'ln2g{l}', lyr['ln2_g']); ep.add(f'ln2b{l}', lyr['ln2_b'])
    enc_blob, enc_layout = ep.pack()

    rp = _Packer()
    for pfx, stages in (('kps', kps_stages), ('bbox', bbox_stages)):
        for si, st in enumerate(stages, start=1):
            rp.add(f'{pfx}_w{si}', st['w'])
            if 'vec' in st:
                rp.add(f'{pfx}_v{si}', st['vec'])
            else:
                rp.add(f'{pfx}_b{si}', st['b'])
    rec_blob, rec_layout = rp.pack()
    return enc_blob, enc_layout, rec_blob, rec_layout


# --------------------------------- main ---------------------------------

if __name__ == "__main__":
    latent_dim, nheads, nlayers = 32, 4, 2
    ffn_dim = 4 * latent_dim
    n_kps, n_bbox = 13, 2
    n_tokens = n_kps + n_bbox        # 15 tokens
    batch = 2

    key = jax.random.PRNGKey(0)
    k_in, k_enc, k_kps, k_bbox = jax.random.split(key, 4)

    enc_layers = _init_encoder_params(k_enc, nlayers, latent_dim, ffn_dim)
    kps_stages, seq_len = _init_recon_params(k_kps, latent_dim)
    bbox_stages, seq_len2 = _init_recon_params(k_bbox, latent_dim)
    assert seq_len == seq_len2 == 90   # config.seq_len implied by the deconv stack

    enc_blob, enc_layout, rec_blob, rec_layout = _pack_params(
        enc_layers, kps_stages, bbox_stages,
        batch=batch, n_tokens=n_tokens, latent_dim=latent_dim, nheads=nheads)

    fwd = make_decoder_forward(
        enc_layout, rec_layout, nheads=nheads, nlayers=nlayers, seq_len=seq_len,
        n_kps=n_kps, n_bbox=n_bbox, latent_dim=latent_dim, batch=batch, n_tokens=n_tokens)

    zq = jax.random.normal(k_in, (batch, n_tokens, latent_dim), dtype=jnp.float32)
    recon_kps, recon_bbox = fwd(zq, enc_blob, rec_blob)
    jax.block_until_ready((recon_kps, recon_bbox))

    assert recon_kps.shape == (batch, seq_len, n_kps, 2)
    assert recon_bbox.shape == (batch, seq_len, n_bbox, 2)
    assert bool(jnp.all(jnp.isfinite(recon_kps))) and bool(jnp.all(jnp.isfinite(recon_bbox)))
    print("KERNEL_OK")
</pallas_src>

<mosaic_0001>
module attributes {stable_mosaic.version = 11 : i64} {
  func.func @_decoder_kernel(%arg0: memref<30x32xf32, #tpu.memory_space<vmem>>, %arg1: memref<704x128xf32, #tpu.memory_space<vmem>>, %arg2: memref<608x180xf32, #tpu.memory_space<vmem>>, %arg3: memref<30x180xf32, #tpu.memory_space<vmem>>) attributes {dimension_semantics = [], scalar_prefetch = 0 : i64, scratch_operands = 0 : i64, tpu.core_type = #tpu.core_type<tc>} {
    %c0 = arith.constant 0 : index
    %c0_0 = arith.constant 0 : index
    %0 = vector.load %arg0[%c0, %c0_0] : memref<30x32xf32, #tpu.memory_space<vmem>>, vector<30x32xf32>
    %c0_1 = arith.constant 0 : index
    %c0_2 = arith.constant 0 : index
    %1 = vector.load %arg1[%c0_1, %c0_2] : memref<704x128xf32, #tpu.memory_space<vmem>>, vector<30x32xf32>
    %2 = arith.mulf %0, %1 : vector<30x32xf32>
    %c64 = arith.constant 64 : index
    %c0_3 = arith.constant 0 : index
    %3 = vector.load %arg1[%c64, %c0_3] : memref<704x128xf32, #tpu.memory_space<vmem>>, vector<32x32xf32>
    %cst = arith.constant dense<0.000000e+00> : vector<30x32xf32>
    %4 = tpu.matmul %0, %3, %cst {dimension_numbers = #tpu.dot_dimension_numbers<[1], [0], [0], [1], [0, 0, 1, 1], [], []>} : vector<30x32xf32>, vector<32x32xf32>, vector<30x32xf32> -> vector<30x32xf32>
    %c32 = arith.constant 32 : index
    %c0_4 = arith.constant 0 : index
    %5 = vector.load %arg1[%c32, %c0_4] : memref<704x128xf32, #tpu.memory_space<vmem>>, vector<30x32xf32>
    %6 = arith.mulf %4, %5 : vector<30x32xf32>
    %7 = arith.addf %2, %6 : vector<30x32xf32>
    %c96 = arith.constant 96 : index
    %c0_5 = arith.constant 0 : index
    %8 = vector.load %arg1[%c96, %c0_5] : memref<704x128xf32, #tpu.memory_space<vmem>>, vector<30x30xf32>
    %c128 = arith.constant 128 : index
    %c0_6 = arith.constant 0 : index
    %9 = vector.load %arg1[%c128, %c0_6] : memref<704x128xf32, #tpu.memory_space<vmem>>, vector<32x96xf32>
    %cst_7 = arith.constant dense<0.000000e+00> : vector<30x96xf32>
    %10 = tpu.matmul %7, %9, %cst_7 {dimension_numbers = #tpu.dot_dimension_numbers<[1], [0], [0], [1], [0, 0, 1, 1], [], []>} : vector<30x32xf32>, vector<32x96xf32>, vector<30x96xf32> -> vector<30x96xf32>
    %c160 = arith.constant 160 : index
    %c0_8 = arith.constant 0 : index
    %11 = vector.load %arg1[%c160, %c0_8] : memref<704x128xf32, #tpu.memory_space<vmem>>, vector<1x96xf32>
    %12 = vector.broadcast %11 : vector<1x96xf32> to vector<30x96xf32>
    %13 = arith.addf %10, %12 : vector<30x96xf32>
    %14 = vector.extract_strided_slice %13 {offsets = [0, 0], sizes = [30, 8], strides = [1, 1]} : vector<30x96xf32> to vector<30x8xf32>
    %15 = vector.extract_strided_slice %13 {offsets = [0, 32], sizes = [30, 8], strides = [1, 1]} : vector<30x96xf32> to vector<30x8xf32>
    %16 = vector.extract_strided_slice %13 {offsets = [0, 64], sizes = [30, 8], strides = [1, 1]} : vector<30x96xf32> to vector<30x8xf32>
    "tpu.trace_start"() <{level = 10 : i32, message = "qe,ke->qk"}> : () -> ()
    %cst_9 = arith.constant dense<0.000000e+00> : vector<30x30xf32>
    %17 = tpu.matmul %14, %15, %cst_9 {dimension_numbers = #tpu.dot_dimension_numbers<[1], [1], [0], [0], [0, 0, 1, 0], [], []>} : vector<30x8xf32>, vector<30x8xf32>, vector<30x30xf32> -> vector<30x30xf32>
    "tpu.trace_stop"() : () -> ()
    %18 = arith.addf %17, %8 : vector<30x30xf32>
    %cst_10 = arith.constant dense<0xFF800000> : vector<30xf32>
    %19 = vector.multi_reduction <maximumf>, %18, %cst_10 [1] : vector<30x30xf32> to vector<30xf32>
    %20 = vector.shape_cast %19 : vector<30xf32> to vector<30x1xf32>
    %21 = vector.broadcast %20 : vector<30x1xf32> to vector<30x30xf32>
    %22 = arith.subf %18, %21 : vector<30x30xf32>
    %23 = math.exp %22 : vector<30x30xf32>
    %cst_11 = arith.constant dense<0.000000e+00> : vector<30xf32>
    %24 = vector.multi_reduction <add>, %23, %cst_11 [1] : vector<30x30xf32> to vector<30xf32>
    %25 = vector.shape_cast %24 : vector<30xf32> to vector<30x1xf32>
    %26 = tpu.reciprocal %25 {approx = true} : vector<30x1xf32> -> vector<30x1xf32>
    %27 = vector.broadcast %26 : vector<30x1xf32> to vector<30x30xf32>
    %28 = arith.mulf %23, %27 : vector<30x30xf32>
    %cst_12 = arith.constant dense<0.000000e+00> : vector<30x8xf32>
    %29 = tpu.matmul %28, %16, %cst_12 {dimension_numbers = #tpu.dot_dimension_numbers<[1], [0], [0], [1], [0, 0, 1, 1], [], []>} : vector<30x30xf32>, vector<30x8xf32>, vector<30x8xf32> -> vector<30x8xf32>
    %30 = vector.extract_strided_slice %13 {offsets = [0, 8], sizes = [30, 8], strides = [1, 1]} : vector<30x96xf32> to vector<30x8xf32>
    %31 = vector.extract_strided_slice %13 {offsets = [0, 40], sizes = [30, 8], strides = [1, 1]} : vector<30x96xf32> to vector<30x8xf32>
    %32 = vector.extract_strided_slice %13 {offsets = [0, 72], sizes = [30, 8], strides = [1, 1]} : vector<30x96xf32> to vector<30x8xf32>
    "tpu.trace_start"() <{level = 10 : i32, message = "qe,ke->qk"}> : () -> ()
    %cst_13 = arith.constant dense<0.000000e+00> : vector<30x30xf32>
    %33 = tpu.matmul %30, %31, %cst_13 {dimension_numbers = #tpu.dot_dimension_numbers<[1], [1], [0], [0], [0, 0, 1, 0], [], []>} : vector<30x8xf32>, vector<30x8xf32>, vector<30x30xf32> -> vector<30x30xf32>
    "tpu.trace_stop"() : () -> ()
    %34 = arith.addf %33, %8 : vector<30x30xf32>
    %cst_14 = arith.constant dense<0xFF800000> : vector<30xf32>
    %35 = vector.multi_reduction <maximumf>, %34, %cst_14 [1] : vector<30x30xf32> to vector<30xf32>
    %36 = vector.shape_cast %35 : vector<30xf32> to vector<30x1xf32>
    %37 = vector.broadcast %36 : vector<30x1xf32> to vector<30x30xf32>
    %38 = arith.subf %34, %37 : vector<30x30xf32>
    %39 = math.exp %38 : vector<30x30xf32>
    %cst_15 = arith.constant dense<0.000000e+00> : vector<30xf32>
    %40 = vector.multi_reduction <add>, %39, %cst_15 [1] : vector<30x30xf32> to vector<30xf32>
    %41 = vector.shape_cast %40 : vector<30xf32> to vector<30x1xf32>
    %42 = tpu.reciprocal %41 {approx = true} : vector<30x1xf32> -> vector<30x1xf32>
    %43 = vector.broadcast %42 : vector<30x1xf32> to vector<30x30xf32>
    %44 = arith.mulf %39, %43 : vector<30x30xf32>
    %cst_16 = arith.constant dense<0.000000e+00> : vector<30x8xf32>
    %45 = tpu.matmul %44, %32, %cst_16 {dimension_numbers = #tpu.dot_dimension_numbers<[1], [0], [0], [1], [0, 0, 1, 1], [], []>} : vector<30x30xf32>, vector<30x8xf32>, vector<30x8xf32> -> vector<30x8xf32>
    %46 = vector.extract_strided_slice %13 {offsets = [0, 16], sizes = [30, 8], strides = [1, 1]} : vector<30x96xf32> to vector<30x8xf32>
    %47 = vector.extract_strided_slice %13 {offsets = [0, 48], sizes = [30, 8], strides = [1, 1]} : vector<30x96xf32> to vector<30x8xf32>
    %48 = vector.extract_strided_slice %13 {offsets = [0, 80], sizes = [30, 8], strides = [1, 1]} : vector<30x96xf32> to vector<30x8xf32>
    "tpu.trace_start"() <{level = 10 : i32, message = "qe,ke->qk"}> : () -> ()
    %cst_17 = arith.constant dense<0.000000e+00> : vector<30x30xf32>
    %49 = tpu.matmul %46, %47, %cst_17 {dimension_numbers = #tpu.dot_dimension_numbers<[1], [1], [0], [0], [0, 0, 1, 0], [], []>} : vector<30x8xf32>, vector<30x8xf32>, vector<30x30xf32> -> vector<30x30xf32>
    "tpu.trace_stop"() : () -> ()
    %50 = arith.addf %49, %8 : vector<30x30xf32>
    %cst_18 = arith.constant dense<0xFF800000> : vector<30xf32>
    %51 = vector.multi_reduction <maximumf>, %50, %cst_18 [1] : vector<30x30xf32> to vector<30xf32>
    %52 = vector.shape_cast %51 : vector<30xf32> to vector<30x1xf32>
    %53 = vector.broadcast %52 : vector<30x1xf32> to vector<30x30xf32>
    %54 = arith.subf %50, %53 : vector<30x30xf32>
    %55 = math.exp %54 : vector<30x30xf32>
    %cst_19 = arith.constant dense<0.000000e+00> : vector<30xf32>
    %56 = vector.multi_reduction <add>, %55, %cst_19 [1] : vector<30x30xf32> to vector<30xf32>
    %57 = vector.shape_cast %56 : vector<30xf32> to vector<30x1xf32>
    %58 = tpu.reciprocal %57 {approx = true} : vector<30x1xf32> -> vector<30x1xf32>
    %59 = vector.broadcast %58 : vector<30x1xf32> to vector<30x30xf32>
    %60 = arith.mulf %55, %59 : vector<30x30xf32>
    %cst_20 = arith.constant dense<0.000000e+00> : vector<30x8xf32>
    %61 = tpu.matmul %60, %48, %cst_20 {dimension_numbers = #tpu.dot_dimension_numbers<[1], [0], [0], [1], [0, 0, 1, 1], [], []>} : vector<30x30xf32>, vector<30x8xf32>, vector<30x8xf32> -> vector<30x8xf32>
    %62 = vector.extract_strided_slice %13 {offsets = [0, 24], sizes = [30, 8], strides = [1, 1]} : vector<30x96xf32> to vector<30x8xf32>
    %63 = vector.extract_strided_slice %13 {offsets = [0, 56], sizes = [30, 8], strides = [1, 1]} : vector<30x96xf32> to vector<30x8xf32>
    %64 = vector.extract_strided_slice %13 {offsets = [0, 88], sizes = [30, 8], strides = [1, 1]} : vector<30x96xf32> to vector<30x8xf32>
    "tpu.trace_start"() <{level = 10 : i32, message = "qe,ke->qk"}> : () -> ()
    %cst_21 = arith.constant dense<0.000000e+00> : vector<30x30xf32>
    %65 = tpu.matmul %62, %63, %cst_21 {dimension_numbers = #tpu.dot_dimension_numbers<[1], [1], [0], [0], [0, 0, 1, 0], [], []>} : vector<30x8xf32>, vector<30x8xf32>, vector<30x30xf32> -> vector<30x30xf32>
    "tpu.trace_stop"() : () -> ()
    %66 = arith.addf %65, %8 : vector<30x30xf32>
    %cst_22 = arith.constant dense<0xFF800000> : vector<30xf32>
    %67 = vector.multi_reduction <maximumf>, %66, %cst_22 [1] : vector<30x30xf32> to vector<30xf32>
    %68 = vector.shape_cast %67 : vector<30xf32> to vector<30x1xf32>
    %69 = vector.broadcast %68 : vector<30x1xf32> to vector<30x30xf32>
    %70 = arith.subf %66, %69 : vector<30x30xf32>
    %71 = math.exp %70 : vector<30x30xf32>
    %cst_23 = arith.constant dense<0.000000e+00> : vector<30xf32>
    %72 = vector.multi_reduction <add>, %71, %cst_23 [1] : vector<30x30xf32> to vector<30xf32>
    %73 = vector.shape_cast %72 : vector<30xf32> to vector<30x1xf32>
    %74 = tpu.reciprocal %73 {approx = true} : vector<30x1xf32> -> vector<30x1xf32>
    %75 = vector.broadcast %74 : vector<30x1xf32> to vector<30x30xf32>
    %76 = arith.mulf %71, %75 : vector<30x30xf32>
    %cst_24 = arith.constant dense<0.000000e+00> : vector<30x8xf32>
    %77 = tpu.matmul %76, %64, %cst_24 {dimension_numbers = #tpu.dot_dimension_numbers<[1], [0], [0], [1], [0, 0, 1, 1], [], []>} : vector<30x30xf32>, vector<30x8xf32>, vector<30x8xf32> -> vector<30x8xf32>
    %78 = tpu.concatenate %29, %45, %61, %77 in 1 : vector<30x8xf32>, vector<30x8xf32>, vector<30x8xf32>, vector<30x8xf32> -> vector<30x32xf32>
    %c168 = arith.constant 168 : index
    %c0_25 = arith.constant 0 : index
    %79 = vector.load %arg1[%c168, %c0_25] : memref<704x128xf32, #tpu.memory_space<vmem>>, vector<32x32xf32>
    %cst_26 = arith.constant dense<0.000000e+00> : vector<30x32xf32>
    %80 = tpu.matmul %78, %79, %cst_26 {dimension_numbers = #tpu.dot_dimension_numbers<[1], [0], [0], [1], [0, 0, 1, 1], [], []>} : vector<30x32xf32>, vector<32x32xf32>, vector<30x32xf32> -> vector<30x32xf32>
    %c200 = arith.constant 200 : index
    %c0_27 = arith.constant 0 : index
    %81 = vector.load %arg1[%c200, %c0_27] : memref<704x128xf32, #tpu.memory_space<vmem>>, vector<1x32xf32>
    %82 = vector.broadcast %81 : vector<1x32xf32> to vector<30x32xf32>
    %83 = arith.addf %80, %82 : vector<30x32xf32>
    %84 = arith.addf %7, %83 : vector<30x32xf32>
    %c208 = arith.constant 208 : index
    %c0_28 = arith.constant 0 : index
    %85 = vector.load %arg1[%c208, %c0_28] : memref<704x128xf32, #tpu.memory_space<vmem>>, vector<1x32xf32>
    %c216 = arith.constant 216 : index
    %c0_29 = arith.constant 0 : index
    %86 = vector.load %arg1[%c216, %c0_29] : memref<704x128xf32, #tpu.memory_space<vmem>>, vector<1x32xf32>
    %cst_30 = arith.constant dense<0.000000e+00> : vector<30xf32>
    %87 = vector.multi_reduction <add>, %84, %cst_30 [1] : vector<30x32xf32> to vector<30xf32>
    %88 = vector.shape_cast %87 : vector<30xf32> to vector<30x1xf32>
    %cst_31 = arith.constant 3.200000e+01 : f32
    %89 = vector.broadcast %cst_31 : f32 to vector<30x1xf32>
    %90 = arith.divf %88, %89 : vector<30x1xf32>
    %91 = vector.broadcast %90 : vector<30x1xf32> to vector<30x32xf32>
    %92 = arith.subf %84, %91 : vector<30x32xf32>
    %93 = arith.mulf %92, %92 : vector<30x32xf32>
    %cst_32 = arith.constant dense<0.000000e+00> : vector<30xf32>
    %94 = vector.multi_reduction <add>, %93, %cst_32 [1] : vector<30x32xf32> to vector<30xf32>
    %95 = vector.shape_cast %94 : vector<30xf32> to vector<30x1xf32>
    %cst_33 = arith.constant 3.200000e+01 : f32
    %96 = vector.broadcast %cst_33 : f32 to vector<30x1xf32>
    %97 = arith.divf %95, %96 : vector<30x1xf32>
    %98 = vector.broadcast %90 : vector<30x1xf32> to vector<30x32xf32>
    %99 = arith.subf %84, %98 : vector<30x32xf32>
    %cst_34 = arith.constant 9.99999974E-6 : f32
    %100 = vector.broadcast %cst_34 : f32 to vector<30x1xf32>
    %101 = arith.addf %97, %100 : vector<30x1xf32>
    %102 = math.rsqrt %101 : vector<30x1xf32>
    %103 = vector.broadcast %102 : vector<30x1xf32> to vector<30x32xf32>
    %104 = arith.mulf %99, %103 : vector<30x32xf32>
    %105 = vector.broadcast %85 : vector<1x32xf32> to vector<30x32xf32>
    %106 = arith.mulf %104, %105 : vector<30x32xf32>
    %107 = vector.broadcast %86 : vector<1x32xf32> to vector<30x32xf32>
    %108 = arith.addf %106, %107 : vector<30x32xf32>
    %c224 = arith.constant 224 : index
    %c0_35 = arith.constant 0 : index
    %109 = vector.load %arg1[%c224, %c0_35] : memref<704x128xf32, #tpu.memory_space<vmem>>, vector<32x128xf32>
    %cst_36 = arith.constant dense<0.000000e+00> : vector<30x128xf32>
    %110 = tpu.matmul %108, %109, %cst_36 {dimension_numbers = #tpu.dot_dimension_numbers<[1], [0], [0], [1], [0, 0, 1, 1], [], []>} : vector<30x32xf32>, vector<32x128xf32>, vector<30x128xf32> -> vector<30x128xf32>
    %c256 = arith.constant 256 : index
    %c0_37 = arith.constant 0 : index
    %111 = vector.load %arg1[%c256, %c0_37] : memref<704x128xf32, #tpu.memory_space<vmem>>, vector<1x128xf32>
    %112 = vector.broadcast %111 : vector<1x128xf32> to vector<30x128xf32>
    %113 = arith.addf %110, %112 : vector<30x128xf32>
    %114 = arith.mulf %113, %113 : vector<30x128xf32>
    %115 = arith.mulf %113, %114 : vector<30x128xf32>
    %cst_38 = arith.constant 4.471500e-02 : f32
    %116 = vector.broadcast %cst_38 : f32 to vector<30x128xf32>
    %117 = arith.mulf %116, %115 : vector<30x128xf32>
    %118 = arith.addf %113, %117 : vector<30x128xf32>
    %cst_39 = arith.constant 0.797884583 : f32
    %119 = vector.broadcast %cst_39 : f32 to vector<30x128xf32>
    %120 = arith.mulf %119, %118 : vector<30x128xf32>
    %121 = math.tanh %120 : vector<30x128xf32>
    %cst_40 = arith.constant 1.000000e+00 : f32
    %122 = vector.broadcast %cst_40 : f32 to vector<30x128xf32>
    %123 = arith.addf %122, %121 : vector<30x128xf32>
    %cst_41 = arith.constant 5.000000e-01 : f32
    %124 = vector.broadcast %cst_41 : f32 to vector<30x128xf32>
    %125 = arith.mulf %124, %123 : vector<30x128xf32>
    %126 = arith.mulf %113, %125 : vector<30x128xf32>
    %c264 = arith.constant 264 : index
    %c0_42 = arith.constant 0 : index
    %127 = vector.load %arg1[%c264, %c0_42] : memref<704x128xf32, #tpu.memory_space<vmem>>, vector<128x32xf32>
    %cst_43 = arith.constant dense<0.000000e+00> : vector<30x32xf32>
    %128 = tpu.matmul %126, %127, %cst_43 {dimension_numbers = #tpu.dot_dimension_numbers<[1], [0], [0], [1], [0, 0, 1, 1], [], []>} : vector<30x128xf32>, vector<128x32xf32>, vector<30x32xf32> -> vector<30x32xf32>
    %c392 = arith.constant 392 : index
    %c0_44 = arith.constant 0 : index
    %129 = vector.load %arg1[%c392, %c0_44] : memref<704x128xf32, #tpu.memory_space<vmem>>, vector<1x32xf32>
    %130 = vector.broadcast %129 : vector<1x32xf32> to vector<30x32xf32>
    %131 = arith.addf %128, %130 : vector<30x32xf32>
    %132 = arith.addf %108, %131 : vector<30x32xf32>
    %c400 = arith.constant 400 : index
    %c0_45 = arith.constant 0 : index
    %133 = vector.load %arg1[%c400, %c0_45] : memref<704x128xf32, #tpu.memory_space<vmem>>, vector<1x32xf32>
    %c408 = arith.constant 408 : index
    %c0_46 = arith.constant 0 : index
    %134 = vector.load %arg1[%c408, %c0_46] : memref<704x128xf32, #tpu.memory_space<vmem>>, vector<1x32xf32>
    %cst_47 = arith.constant dense<0.000000e+00> : vector<30xf32>
    %135 = vector.multi_reduction <add>, %132, %cst_47 [1] : vector<30x32xf32> to vector<30xf32>
    %136 = vector.shape_cast %135 : vector<30xf32> to vector<30x1xf32>
    %cst_48 = arith.constant 3.200000e+01 : f32
    %137 = vector.broadcast %cst_48 : f32 to vector<30x1xf32>
    %138 = arith.divf %136, %137 : vector<30x1xf32>
    %139 = vector.broadcast %138 : vector<30x1xf32> to vector<30x32xf32>
    %140 = arith.subf %132, %139 : vector<30x32xf32>
    %141 = arith.mulf %140, %140 : vector<30x32xf32>
    %cst_49 = arith.constant dense<0.000000e+00> : vector<30xf32>
    %142 = vector.multi_reduction <add>, %141, %cst_49 [1] : vector<30x32xf32> to vector<30xf32>
    %143 = vector.shape_cast %142 : vector<30xf32> to vector<30x1xf32>
    %cst_50 = arith.constant 3.200000e+01 : f32
    %144 = vector.broadcast %cst_50 : f32 to vector<30x1xf32>
    %145 = arith.divf %143, %144 : vector<30x1xf32>
    %146 = vector.broadcast %138 : vector<30x1xf32> to vector<30x32xf32>
    %147 = arith.subf %132, %146 : vector<30x32xf32>
    %cst_51 = arith.constant 9.99999974E-6 : f32
    %148 = vector.broadcast %cst_51 : f32 to vector<30x1xf32>
    %149 = arith.addf %145, %148 : vector<30x1xf32>
    %150 = math.rsqrt %149 : vector<30x1xf32>
    %151 = vector.broadcast %150 : vector<30x1xf32> to vector<30x32xf32>
    %152 = arith.mulf %147, %151 : vector<30x32xf32>
    %153 = vector.broadcast %133 : vector<1x32xf32> to vector<30x32xf32>
    %154 = arith.mulf %152, %153 : vector<30x32xf32>
    %155 = vector.broadcast %134 : vector<1x32xf32> to vector<30x32xf32>
    %156 = arith.addf %154, %155 : vector<30x32xf32>
    %c416 = arith.constant 416 : index
    %c0_52 = arith.constant 0 : index
    %157 = vector.load %arg1[%c416, %c0_52] : memref<704x128xf32, #tpu.memory_space<vmem>>, vector<32x96xf32>
    %cst_53 = arith.constant dense<0.000000e+00> : vector<30x96xf32>
    %158 = tpu.matmul %156, %157, %cst_53 {dimension_numbers = #tpu.dot_dimension_numbers<[1], [0], [0], [1], [0, 0, 1, 1], [], []>} : vector<30x32xf32>, vector<32x96xf32>, vector<30x96xf32> -> vector<30x96xf32>
    %c448 = arith.constant 448 : index
    %c0_54 = arith.constant 0 : index
    %159 = vector.load %arg1[%c448, %c0_54] : memref<704x128xf32, #tpu.memory_space<vmem>>, vector<1x96xf32>
    %160 = vector.broadcast %159 : vector<1x96xf32> to vector<30x96xf32>
    %161 = arith.addf %158, %160 : vector<30x96xf32>
    %162 = vector.extract_strided_slice %161 {offsets = [0, 0], sizes = [30, 8], strides = [1, 1]} : vector<30x96xf32> to vector<30x8xf32>
    %163 = vector.extract_strided_slice %161 {offsets = [0, 32], sizes = [30, 8], strides = [1, 1]} : vector<30x96xf32> to vector<30x8xf32>
    %164 = vector.extract_strided_slice %161 {offsets = [0, 64], sizes = [30, 8], strides = [1, 1]} : vector<30x96xf32> to vector<30x8xf32>
    "tpu.trace_start"() <{level = 10 : i32, message = "qe,ke->qk"}> : () -> ()
    %cst_55 = arith.constant dense<0.000000e+00> : vector<30x30xf32>
    %165 = tpu.matmul %162, %163, %cst_55 {dimension_numbers = #tpu.dot_dimension_numbers<[1], [1], [0], [0], [0, 0, 1, 0], [], []>} : vector<30x8xf32>, vector<30x8xf32>, vector<30x30xf32> -> vector<30x30xf32>
    "tpu.trace_stop"() : () -> ()
    %166 = arith.addf %165, %8 : vector<30x30xf32>
    %cst_56 = arith.constant dense<0xFF800000> : vector<30xf32>
    %167 = vector.multi_reduction <maximumf>, %166, %cst_56 [1] : vector<30x30xf32> to vector<30xf32>
    %168 = vector.shape_cast %167 : vector<30xf32> to vector<30x1xf32>
    %169 = vector.broadcast %168 : vector<30x1xf32> to vector<30x30xf32>
    %170 = arith.subf %166, %169 : vector<30x30xf32>
    %171 = math.exp %170 : vector<30x30xf32>
    %cst_57 = arith.constant dense<0.000000e+00> : vector<30xf32>
    %172 = vector.multi_reduction <add>, %171, %cst_57 [1] : vector<30x30xf32> to vector<30xf32>
    %173 = vector.shape_cast %172 : vector<30xf32> to vector<30x1xf32>
    %174 = tpu.reciprocal %173 {approx = true} : vector<30x1xf32> -> vector<30x1xf32>
    %175 = vector.broadcast %174 : vector<30x1xf32> to vector<30x30xf32>
    %176 = arith.mulf %171, %175 : vector<30x30xf32>
    %cst_58 = arith.constant dense<0.000000e+00> : vector<30x8xf32>
    %177 = tpu.matmul %176, %164, %cst_58 {dimension_numbers = #tpu.dot_dimension_numbers<[1], [0], [0], [1], [0, 0, 1, 1], [], []>} : vector<30x30xf32>, vector<30x8xf32>, vector<30x8xf32> -> vector<30x8xf32>
    %178 = vector.extract_strided_slice %161 {offsets = [0, 8], sizes = [30, 8], strides = [1, 1]} : vector<30x96xf32> to vector<30x8xf32>
    %179 = vector.extract_strided_slice %161 {offsets = [0, 40], sizes = [30, 8], strides = [1, 1]} : vector<30x96xf32> to vector<30x8xf32>
    %180 = vector.extract_strided_slice %161 {offsets = [0, 72], sizes = [30, 8], strides = [1, 1]} : vector<30x96xf32> to vector<30x8xf32>
    "tpu.trace_start"() <{level = 10 : i32, message = "qe,ke->qk"}> : () -> ()
    %cst_59 = arith.constant dense<0.000000e+00> : vector<30x30xf32>
    %181 = tpu.matmul %178, %179, %cst_59 {dimension_numbers = #tpu.dot_dimension_numbers<[1], [1], [0], [0], [0, 0, 1, 0], [], []>} : vector<30x8xf32>, vector<30x8xf32>, vector<30x30xf32> -> vector<30x30xf32>
    "tpu.trace_stop"() : () -> ()
    %182 = arith.addf %181, %8 : vector<30x30xf32>
    %cst_60 = arith.constant dense<0xFF800000> : vector<30xf32>
    %183 = vector.multi_reduction <maximumf>, %182, %cst_60 [1] : vector<30x30xf32> to vector<30xf32>
    %184 = vector.shape_cast %183 : vector<30xf32> to vector<30x1xf32>
    %185 = vector.broadcast %184 : vector<30x1xf32> to vector<30x30xf32>
    %186 = arith.subf %182, %185 : vector<30x30xf32>
    %187 = math.exp %186 : vector<30x30xf32>
    %cst_61 = arith.constant dense<0.000000e+00> : vector<30xf32>
    %188 = vector.multi_reduction <add>, %187, %cst_61 [1] : vector<30x30xf32> to vector<30xf32>
    %189 = vector.shape_cast %188 : vector<30xf32> to vector<30x1xf32>
    %190 = tpu.reciprocal %189 {approx = true} : vector<30x1xf32> -> vector<30x1xf32>
    %191 = vector.broadcast %190 : vector<30x1xf32> to vector<30x30xf32>
    %192 = arith.mulf %187, %191 : vector<30x30xf32>
    %cst_62 = arith.constant dense<0.000000e+00> : vector<30x8xf32>
    %193 = tpu.matmul %192, %180, %cst_62 {dimension_numbers = #tpu.dot_dimension_numbers<[1], [0], [0], [1], [0, 0, 1, 1], [], []>} : vector<30x30xf32>, vector<30x8xf32>, vector<30x8xf32> -> vector<30x8xf32>
    %194 = vector.extract_strided_slice %161 {offsets = [0, 16], sizes = [30, 8], strides = [1, 1]} : vector<30x96xf32> to vector<30x8xf32>
    %195 = vector.extract_strided_slice %161 {offsets = [0, 48], sizes = [30, 8], strides = [1, 1]} : vector<30x96xf32> to vector<30x8xf32>
    %196 = vector.extract_strided_slice %161 {offsets = [0, 80], sizes = [30, 8], strides = [1, 1]} : vector<30x96xf32> to vector<30x8xf32>
    "tpu.trace_start"() <{level = 10 : i32, message = "qe,ke->qk"}> : () -> ()
    %cst_63 = arith.constant dense<0.000000e+00> : vector<30x30xf32>
    %197 = tpu.matmul %194, %195, %cst_63 {dimension_numbers = #tpu.dot_dimension_numbers<[1], [1], [0], [0], [0, 0, 1, 0], [], []>} : vector<30x8xf32>, vector<30x8xf32>, vector<30x30xf32> -> vector<30x30xf32>
    "tpu.trace_stop"() : () -> ()
    %198 = arith.addf %197, %8 : vector<30x30xf32>
    %cst_64 = arith.constant dense<0xFF800000> : vector<30xf32>
    %199 = vector.multi_reduction <maximumf>, %198, %cst_64 [1] : vector<30x30xf32> to vector<30xf32>
    %200 = vector.shape_cast %199 : vector<30xf32> to vector<30x1xf32>
    %201 = vector.broadcast %200 : vector<30x1xf32> to vector<30x30xf32>
    %202 = arith.subf %198, %201 : vector<30x30xf32>
    %203 = math.exp %202 : vector<30x30xf32>
    %cst_65 = arith.constant dense<0.000000e+00> : vector<30xf32>
    %204 = vector.multi_reduction <add>, %203, %cst_65 [1] : vector<30x30xf32> to vector<30xf32>
    %205 = vector.shape_cast %204 : vector<30xf32> to vector<30x1xf32>
    %206 = tpu.reciprocal %205 {approx = true} : vector<30x1xf32> -> vector<30x1xf32>
    %207 = vector.broadcast %206 : vector<30x1xf32> to vector<30x30xf32>
    %208 = arith.mulf %203, %207 : vector<30x30xf32>
    %cst_66 = arith.constant dense<0.000000e+00> : vector<30x8xf32>
    %209 = tpu.matmul %208, %196, %cst_66 {dimension_numbers = #tpu.dot_dimension_numbers<[1], [0], [0], [1], [0, 0, 1, 1], [], []>} : vector<30x30xf32>, vector<30x8xf32>, vector<30x8xf32> -> vector<30x8xf32>
    %210 = vector.extract_strided_slice %161 {offsets = [0, 24], sizes = [30, 8], strides = [1, 1]} : vector<30x96xf32> to vector<30x8xf32>
    %211 = vector.extract_strided_slice %161 {offsets = [0, 56], sizes = [30, 8], strides = [1, 1]} : vector<30x96xf32> to vector<30x8xf32>
    %212 = vector.extract_strided_slice %161 {offsets = [0, 88], sizes = [30, 8], strides = [1, 1]} : vector<30x96xf32> to vector<30x8xf32>
    "tpu.trace_start"() <{level = 10 : i32, message = "qe,ke->qk"}> : () -> ()
    %cst_67 = arith.constant dense<0.000000e+00> : vector<30x30xf32>
    %213 = tpu.matmul %210, %211, %cst_67 {dimension_numbers = #tpu.dot_dimension_numbers<[1], [1], [0], [0], [0, 0, 1, 0], [], []>} : vector<30x8xf32>, vector<30x8xf32>, vector<30x30xf32> -> vector<30x30xf32>
    "tpu.trace_stop"() : () -> ()
    %214 = arith.addf %213, %8 : vector<30x30xf32>
    %cst_68 = arith.constant dense<0xFF800000> : vector<30xf32>
    %215 = vector.multi_reduction <maximumf>, %214, %cst_68 [1] : vector<30x30xf32> to vector<30xf32>
    %216 = vector.shape_cast %215 : vector<30xf32> to vector<30x1xf32>
    %217 = vector.broadcast %216 : vector<30x1xf32> to vector<30x30xf32>
    %218 = arith.subf %214, %217 : vector<30x30xf32>
    %219 = math.exp %218 : vector<30x30xf32>
    %cst_69 = arith.constant dense<0.000000e+00> : vector<30xf32>
    %220 = vector.multi_reduction <add>, %219, %cst_69 [1] : vector<30x30xf32> to vector<30xf32>
    %221 = vector.shape_cast %220 : vector<30xf32> to vector<30x1xf32>
    %222 = tpu.reciprocal %221 {approx = true} : vector<30x1xf32> -> vector<30x1xf32>
    %223 = vector.broadcast %222 : vector<30x1xf32> to vector<30x30xf32>
    %224 = arith.mulf %219, %223 : vector<30x30xf32>
    %cst_70 = arith.constant dense<0.000000e+00> : vector<30x8xf32>
    %225 = tpu.matmul %224, %212, %cst_70 {dimension_numbers = #tpu.dot_dimension_numbers<[1], [0], [0], [1], [0, 0, 1, 1], [], []>} : vector<30x30xf32>, vector<30x8xf32>, vector<30x8xf32> -> vector<30x8xf32>
    %226 = tpu.concatenate %177, %193, %209, %225 in 1 : vector<30x8xf32>, vector<30x8xf32>, vector<30x8xf32>, vector<30x8xf32> -> vector<30x32xf32>
    %c456 = arith.constant 456 : index
    %c0_71 = arith.constant 0 : index
    %227 = vector.load %arg1[%c456, %c0_71] : memref<704x128xf32, #tpu.memory_space<vmem>>, vector<32x32xf32>
    %cst_72 = arith.constant dense<0.000000e+00> : vector<30x32xf32>
    %228 = tpu.matmul %226, %227, %cst_72 {dimension_numbers = #tpu.dot_dimension_numbers<[1], [0], [0], [1], [0, 0, 1, 1], [], []>} : vector<30x32xf32>, vector<32x32xf32>, vector<30x32xf32> -> vector<30x32xf32>
    %c488 = arith.constant 488 : index
    %c0_73 = arith.constant 0 : index
    %229 = vector.load %arg1[%c488, %c0_73] : memref<704x128xf32, #tpu.memory_space<vmem>>, vector<1x32xf32>
    %230 = vector.broadcast %229 : vector<1x32xf32> to vector<30x32xf32>
    %231 = arith.addf %228, %230 : vector<30x32xf32>
    %232 = arith.addf %156, %231 : vector<30x32xf32>
    %c496 = arith.constant 496 : index
    %c0_74 = arith.constant 0 : index
    %233 = vector.load %arg1[%c496, %c0_74] : memref<704x128xf32, #tpu.memory_space<vmem>>, vector<1x32xf32>
    %c504 = arith.constant 504 : index
    %c0_75 = arith.constant 0 : index
    %234 = vector.load %arg1[%c504, %c0_75] : memref<704x128xf32, #tpu.memory_space<vmem>>, vector<1x32xf32>
    %cst_76 = arith.constant dense<0.000000e+00> : vector<30xf32>
    %235 = vector.multi_reduction <add>, %232, %cst_76 [1] : vector<30x32xf32> to vector<30xf32>
    %236 = vector.shape_cast %235 : vector<30xf32> to vector<30x1xf32>
    %cst_77 = arith.constant 3.200000e+01 : f32
    %237 = vector.broadcast %cst_77 : f32 to vector<30x1xf32>
    %238 = arith.divf %236, %237 : vector<30x1xf32>
    %239 = vector.broadcast %238 : vector<30x1xf32> to vector<30x32xf32>
    %240 = arith.subf %232, %239 : vector<30x32xf32>
    %241 = arith.mulf %240, %240 : vector<30x32xf32>
    %cst_78 = arith.constant dense<0.000000e+00> : vector<30xf32>
    %242 = vector.multi_reduction <add>, %241, %cst_78 [1] : vector<30x32xf32> to vector<30xf32>
    %243 = vector.shape_cast %242 : vector<30xf32> to vector<30x1xf32>
    %cst_79 = arith.constant 3.200000e+01 : f32
    %244 = vector.broadcast %cst_79 : f32 to vector<30x1xf32>
    %245 = arith.divf %243, %244 : vector<30x1xf32>
    %246 = vector.broadcast %238 : vector<30x1xf32> to vector<30x32xf32>
    %247 = arith.subf %232, %246 : vector<30x32xf32>
    %cst_80 = arith.constant 9.99999974E-6 : f32
    %248 = vector.broadcast %cst_80 : f32 to vector<30x1xf32>
    %249 = arith.addf %245, %248 : vector<30x1xf32>
    %250 = math.rsqrt %249 : vector<30x1xf32>
    %251 = vector.broadcast %250 : vector<30x1xf32> to vector<30x32xf32>
    %252 = arith.mulf %247, %251 : vector<30x32xf32>
    %253 = vector.broadcast %233 : vector<1x32xf32> to vector<30x32xf32>
    %254 = arith.mulf %252, %253 : vector<30x32xf32>
    %255 = vector.broadcast %234 : vector<1x32xf32> to vector<30x32xf32>
    %256 = arith.addf %254, %255 : vector<30x32xf32>
    %c512 = arith.constant 512 : index
    %c0_81 = arith.constant 0 : index
    %257 = vector.load %arg1[%c512, %c0_81] : memref<704x128xf32, #tpu.memory_space<vmem>>, vector<32x128xf32>
    %cst_82 = arith.constant dense<0.000000e+00> : vector<30x128xf32>
    %258 = tpu.matmul %256, %257, %cst_82 {dimension_numbers = #tpu.dot_dimension_numbers<[1], [0], [0], [1], [0, 0, 1, 1], [], []>} : vector<30x32xf32>, vector<32x128xf32>, vector<30x128xf32> -> vector<30x128xf32>
    %c544 = arith.constant 544 : index
    %c0_83 = arith.constant 0 : index
    %259 = vector.load %arg1[%c544, %c0_83] : memref<704x128xf32, #tpu.memory_space<vmem>>, vector<1x128xf32>
    %260 = vector.broadcast %259 : vector<1x128xf32> to vector<30x128xf32>
    %261 = arith.addf %258, %260 : vector<30x128xf32>
    %262 = arith.mulf %261, %261 : vector<30x128xf32>
    %263 = arith.mulf %261, %262 : vector<30x128xf32>
    %cst_84 = arith.constant 4.471500e-02 : f32
    %264 = vector.broadcast %cst_84 : f32 to vector<30x128xf32>
    %265 = arith.mulf %264, %263 : vector<30x128xf32>
    %266 = arith.addf %261, %265 : vector<30x128xf32>
    %cst_85 = arith.constant 0.797884583 : f32
    %267 = vector.broadcast %cst_85 : f32 to vector<30x128xf32>
    %268 = arith.mulf %267, %266 : vector<30x128xf32>
    %269 = math.tanh %268 : vector<30x128xf32>
    %cst_86 = arith.constant 1.000000e+00 : f32
    %270 = vector.broadcast %cst_86 : f32 to vector<30x128xf32>
    %271 = arith.addf %270, %269 : vector<30x128xf32>
    %cst_87 = arith.constant 5.000000e-01 : f32
    %272 = vector.broadcast %cst_87 : f32 to vector<30x128xf32>
    %273 = arith.mulf %272, %271 : vector<30x128xf32>
    %274 = arith.mulf %261, %273 : vector<30x128xf32>
    %c552 = arith.constant 552 : index
    %c0_88 = arith.constant 0 : index
    %275 = vector.load %arg1[%c552, %c0_88] : memref<704x128xf32, #tpu.memory_space<vmem>>, vector<128x32xf32>
    %cst_89 = arith.constant dense<0.000000e+00> : vector<30x32xf32>
    %276 = tpu.matmul %274, %275, %cst_89 {dimension_numbers = #tpu.dot_dimension_numbers<[1], [0], [0], [1], [0, 0, 1, 1], [], []>} : vector<30x128xf32>, vector<128x32xf32>, vector<30x32xf32> -> vector<30x32xf32>
    %c680 = arith.constant 680 : index
    %c0_90 = arith.constant 0 : index
    %277 = vector.load %arg1[%c680, %c0_90] : memref<704x128xf32, #tpu.memory_space<vmem>>, vector<1x32xf32>
    %278 = vector.broadcast %277 : vector<1x32xf32> to vector<30x32xf32>
    %279 = arith.addf %276, %278 : vector<30x32xf32>
    %280 = arith.addf %256, %279 : vector<30x32xf32>
    %c688 = arith.constant 688 : index
    %c0_91 = arith.constant 0 : index
    %281 = vector.load %arg1[%c688, %c0_91] : memref<704x128xf32, #tpu.memory_space<vmem>>, vector<1x32xf32>
    %c696 = arith.constant 696 : index
    %c0_92 = arith.constant 0 : index
    %282 = vector.load %arg1[%c696, %c0_92] : memref<704x128xf32, #tpu.memory_space<vmem>>, vector<1x32xf32>
    %cst_93 = arith.constant dense<0.000000e+00> : vector<30xf32>
    %283 = vector.multi_reduction <add>, %280, %cst_93 [1] : vector<30x32xf32> to vector<30xf32>
    %284 = vector.shape_cast %283 : vector<30xf32> to vector<30x1xf32>
    %cst_94 = arith.constant 3.200000e+01 : f32
    %285 = vector.broadcast %cst_94 : f32 to vector<30x1xf32>
    %286 = arith.divf %284, %285 : vector<30x1xf32>
    %287 = vector.broadcast %286 : vector<30x1xf32> to vector<30x32xf32>
    %288 = arith.subf %280, %287 : vector<30x32xf32>
    %289 = arith.mulf %288, %288 : vector<30x32xf32>
    %cst_95 = arith.constant dense<0.000000e+00> : vector<30xf32>
    %290 = vector.multi_reduction <add>, %289, %cst_95 [1] : vector<30x32xf32> to vector<30xf32>
    %291 = vector.shape_cast %290 : vector<30xf32> to vector<30x1xf32>
    %cst_96 = arith.constant 3.200000e+01 : f32
    %292 = vector.broadcast %cst_96 : f32 to vector<30x1xf32>
    %293 = arith.divf %291, %292 : vector<30x1xf32>
    %294 = vector.broadcast %286 : vector<30x1xf32> to vector<30x32xf32>
    %295 = arith.subf %280, %294 : vector<30x32xf32>
    %cst_97 = arith.constant 9.99999974E-6 : f32
    %296 = vector.broadcast %cst_97 : f32 to vector<30x1xf32>
    %297 = arith.addf %293, %296 : vector<30x1xf32>
    %298 = math.rsqrt %297 : vector<30x1xf32>
    %299 = vector.broadcast %298 : vector<30x1xf32> to vector<30x32xf32>
    %300 = arith.mulf %295, %299 : vector<30x32xf32>
    %301 = vector.broadcast %281 : vector<1x32xf32> to vector<30x32xf32>
    %302 = arith.mulf %300, %301 : vector<30x32xf32>
    %303 = vector.broadcast %282 : vector<1x32xf32> to vector<30x32xf32>
    %304 = arith.addf %302, %303 : vector<30x32xf32>
    %c32_98 = arith.constant 32 : index
    %c0_99 = arith.constant 0 : index
    %305 = vector.load %arg2[%c32_98, %c0_99] : memref<608x180xf32, #tpu.memory_space<vmem>>, vector<3x48xf32>
    %c0_100 = arith.constant 0 : index
    %c0_101 = arith.constant 0 : index
    %306 = vector.load %arg2[%c0_100, %c0_101] : memref<608x180xf32, #tpu.memory_space<vmem>>, vector<32x48xf32>
    %cst_102 = arith.constant dense<0.000000e+00> : vector<30x48xf32>
    %307 = tpu.matmul %304, %306, %cst_102 {dimension_numbers = #tpu.dot_dimension_numbers<[1], [0], [0], [1], [0, 0, 1, 1], [], []>} : vector<30x32xf32>, vector<32x48xf32>, vector<30x48xf32> -> vector<30x48xf32>
    %308 = vector.extract_strided_slice %305 {offsets = [0, 0], sizes = [1, 48], strides = [1, 1]} : vector<3x48xf32> to vector<1x48xf32>
    %309 = vector.broadcast %308 : vector<1x48xf32> to vector<30x48xf32>
    %310 = arith.addf %307, %309 : vector<30x48xf32>
    %cst_103 = arith.constant dense<0.000000e+00> : vector<30xf32>
    %311 = vector.multi_reduction <add>, %310, %cst_103 [1] : vector<30x48xf32> to vector<30xf32>
    %312 = vector.shape_cast %311 : vector<30xf32> to vector<30x1xf32>
    %cst_104 = arith.constant 4.800000e+01 : f32
    %313 = vector.broadcast %cst_104 : f32 to vector<30x1xf32>
    %314 = arith.divf %312, %313 : vector<30x1xf32>
    %315 = vector.broadcast %314 : vector<30x1xf32> to vector<30x48xf32>
    %316 = arith.subf %310, %315 : vector<30x48xf32>
    %317 = arith.mulf %316, %316 : vector<30x48xf32>
    %cst_105 = arith.constant dense<0.000000e+00> : vector<30xf32>
    %318 = vector.multi_reduction <add>, %317, %cst_105 [1] : vector<30x48xf32> to vector<30xf32>
    %319 = vector.shape_cast %318 : vector<30xf32> to vector<30x1xf32>
    %cst_106 = arith.constant 4.800000e+01 : f32
    %320 = vector.broadcast %cst_106 : f32 to vector<30x1xf32>
    %321 = arith.divf %319, %320 : vector<30x1xf32>
    %322 = vector.broadcast %314 : vector<30x1xf32> to vector<30x48xf32>
    %323 = arith.subf %310, %322 : vector<30x48xf32>
    %cst_107 = arith.constant 9.99999974E-6 : f32
    %324 = vector.broadcast %cst_107 : f32 to vector<30x1xf32>
    %325 = arith.addf %321, %324 : vector<30x1xf32>
    %326 = math.rsqrt %325 : vector<30x1xf32>
    %327 = vector.broadcast %326 : vector<30x1xf32> to vector<30x48xf32>
    %328 = arith.mulf %323, %327 : vector<30x48xf32>
    %329 = vector.extract_strided_slice %305 {offsets = [1, 0], sizes = [1, 48], strides = [1, 1]} : vector<3x48xf32> to vector<1x48xf32>
    %330 = vector.broadcast %329 : vector<1x48xf32> to vector<30x48xf32>
    %331 = arith.mulf %328, %330 : vector<30x48xf32>
    %332 = vector.extract_strided_slice %305 {offsets = [2, 0], sizes = [1, 48], strides = [1, 1]} : vector<3x48xf32> to vector<1x48xf32>
    %333 = vector.broadcast %332 : vector<1x48xf32> to vector<30x48xf32>
    %334 = arith.addf %331, %333 : vector<30x48xf32>
    %335 = arith.negf %334 : vector<30x48xf32>
    %336 = math.exp %335 : vector<30x48xf32>
    %cst_108 = arith.constant 1.000000e+00 : f32
    %337 = vector.broadcast %cst_108 : f32 to vector<30x48xf32>
    %338 = arith.addf %337, %336 : vector<30x48xf32>
    %339 = arith.divf %337, %338 : vector<30x48xf32>
    %340 = arith.mulf %334, %339 : vector<30x48xf32>
    %c88 = arith.constant 88 : index
    %c0_109 = arith.constant 0 : index
    %341 = vector.load %arg2[%c88, %c0_109] : memref<608x180xf32, #tpu.memory_space<vmem>>, vector<3x72xf32>
    %c40 = arith.constant 40 : index
    %c0_110 = arith.constant 0 : index
    %342 = vector.load %arg2[%c40, %c0_110] : memref<608x180xf32, #tpu.memory_space<vmem>>, vector<48x72xf32>
    %cst_111 = arith.constant dense<0.000000e+00> : vector<30x72xf32>
    %343 = tpu.matmul %340, %342, %cst_111 {dimension_numbers = #tpu.dot_dimension_numbers<[1], [0], [0], [1], [0, 0, 1, 1], [], []>} : vector<30x48xf32>, vector<48x72xf32>, vector<30x72xf32> -> vector<30x72xf32>
    %344 = vector.extract_strided_slice %341 {offsets = [0, 0], sizes = [1, 72], strides = [1, 1]} : vector<3x72xf32> to vector<1x72xf32>
    %345 = vector.broadcast %344 : vector<1x72xf32> to vector<30x72xf32>
    %346 = arith.addf %343, %345 : vector<30x72xf32>
    %cst_112 = arith.constant dense<0.000000e+00> : vector<30xf32>
    %347 = vector.multi_reduction <add>, %346, %cst_112 [1] : vector<30x72xf32> to vector<30xf32>
    %348 = vector.shape_cast %347 : vector<30xf32> to vector<30x1xf32>
    %cst_113 = arith.constant 7.200000e+01 : f32
    %349 = vector.broadcast %cst_113 : f32 to vector<30x1xf32>
    %350 = arith.divf %348, %349 : vector<30x1xf32>
    %351 = vector.broadcast %350 : vector<30x1xf32> to vector<30x72xf32>
    %352 = arith.subf %346, %351 : vector<30x72xf32>
    %353 = arith.mulf %352, %352 : vector<30x72xf32>
    %cst_114 = arith.constant dense<0.000000e+00> : vector<30xf32>
    %354 = vector.multi_reduction <add>, %353, %cst_114 [1] : vector<30x72xf32> to vector<30xf32>
    %355 = vector.shape_cast %354 : vector<30xf32> to vector<30x1xf32>
    %cst_115 = arith.constant 7.200000e+01 : f32
    %356 = vector.broadcast %cst_115 : f32 to vector<30x1xf32>
    %357 = arith.divf %355, %356 : vector<30x1xf32>
    %358 = vector.broadcast %350 : vector<30x1xf32> to vector<30x72xf32>
    %359 = arith.subf %346, %358 : vector<30x72xf32>
    %cst_116 = arith.constant 9.99999974E-6 : f32
    %360 = vector.broadcast %cst_116 : f32 to vector<30x1xf32>
    %361 = arith.addf %357, %360 : vector<30x1xf32>
    %362 = math.rsqrt %361 : vector<30x1xf32>
    %363 = vector.broadcast %362 : vector<30x1xf32> to vector<30x72xf32>
    %364 = arith.mulf %359, %363 : vector<30x72xf32>
    %365 = vector.extract_strided_slice %341 {offsets = [1, 0], sizes = [1, 72], strides = [1, 1]} : vector<3x72xf32> to vector<1x72xf32>
    %366 = vector.broadcast %365 : vector<1x72xf32> to vector<30x72xf32>
    %367 = arith.mulf %364, %366 : vector<30x72xf32>
    %368 = vector.extract_strided_slice %341 {offsets = [2, 0], sizes = [1, 72], strides = [1, 1]} : vector<3x72xf32> to vector<1x72xf32>
    %369 = vector.broadcast %368 : vector<1x72xf32> to vector<30x72xf32>
    %370 = arith.addf %367, %369 : vector<30x72xf32>
    %371 = arith.negf %370 : vector<30x72xf32>
    %372 = math.exp %371 : vector<30x72xf32>
    %cst_117 = arith.constant 1.000000e+00 : f32
    %373 = vector.broadcast %cst_117 : f32 to vector<30x72xf32>
    %374 = arith.addf %373, %372 : vector<30x72xf32>
    %375 = arith.divf %373, %374 : vector<30x72xf32>
    %376 = arith.mulf %370, %375 : vector<30x72xf32>
    %c168_118 = arith.constant 168 : index
    %c0_119 = arith.constant 0 : index
    %377 = vector.load %arg2[%c168_118, %c0_119] : memref<608x180xf32, #tpu.memory_space<vmem>>, vector<3x116xf32>
    %c96_120 = arith.constant 96 : index
    %c0_121 = arith.constant 0 : index
    %378 = vector.load %arg2[%c96_120, %c0_121] : memref<608x180xf32, #tpu.memory_space<vmem>>, vector<72x116xf32>
    %cst_122 = arith.constant dense<0.000000e+00> : vector<30x116xf32>
    %379 = tpu.matmul %376, %378, %cst_122 {dimension_numbers = #tpu.dot_dimension_numbers<[1], [0], [0], [1], [0, 0, 1, 1], [], []>} : vector<30x72xf32>, vector<72x116xf32>, vector<30x116xf32> -> vector<30x116xf32>
    %380 = vector.extract_strided_slice %377 {offsets = [0, 0], sizes = [1, 116], strides = [1, 1]} : vector<3x116xf32> to vector<1x116xf32>
    %381 = vector.broadcast %380 : vector<1x116xf32> to vector<30x116xf32>
    %382 = arith.addf %379, %381 : vector<30x116xf32>
    %cst_123 = arith.constant dense<0.000000e+00> : vector<30xf32>
    %383 = vector.multi_reduction <add>, %382, %cst_123 [1] : vector<30x116xf32> to vector<30xf32>
    %384 = vector.shape_cast %383 : vector<30xf32> to vector<30x1xf32>
    %cst_124 = arith.constant 1.160000e+02 : f32
    %385 = vector.broadcast %cst_124 : f32 to vector<30x1xf32>
    %386 = arith.divf %384, %385 : vector<30x1xf32>
    %387 = vector.broadcast %386 : vector<30x1xf32> to vector<30x116xf32>
    %388 = arith.subf %382, %387 : vector<30x116xf32>
    %389 = arith.mulf %388, %388 : vector<30x116xf32>
    %cst_125 = arith.constant dense<0.000000e+00> : vector<30xf32>
    %390 = vector.multi_reduction <add>, %389, %cst_125 [1] : vector<30x116xf32> to vector<30xf32>
    %391 = vector.shape_cast %390 : vector<30xf32> to vector<30x1xf32>
    %cst_126 = arith.constant 1.160000e+02 : f32
    %392 = vector.broadcast %cst_126 : f32 to vector<30x1xf32>
    %393 = arith.divf %391, %392 : vector<30x1xf32>
    %394 = vector.broadcast %386 : vector<30x1xf32> to vector<30x116xf32>
    %395 = arith.subf %382, %394 : vector<30x116xf32>
    %cst_127 = arith.constant 9.99999974E-6 : f32
    %396 = vector.broadcast %cst_127 : f32 to vector<30x1xf32>
    %397 = arith.addf %393, %396 : vector<30x1xf32>
    %398 = math.rsqrt %397 : vector<30x1xf32>
    %399 = vector.broadcast %398 : vector<30x1xf32> to vector<30x116xf32>
    %400 = arith.mulf %395, %399 : vector<30x116xf32>
    %401 = vector.extract_strided_slice %377 {offsets = [1, 0], sizes = [1, 116], strides = [1, 1]} : vector<3x116xf32> to vector<1x116xf32>
    %402 = vector.broadcast %401 : vector<1x116xf32> to vector<30x116xf32>
    %403 = arith.mulf %400, %402 : vector<30x116xf32>
    %404 = vector.extract_strided_slice %377 {offsets = [2, 0], sizes = [1, 116], strides = [1, 1]} : vector<3x116xf32> to vector<1x116xf32>
    %405 = vector.broadcast %404 : vector<1x116xf32> to vector<30x116xf32>
    %406 = arith.addf %403, %405 : vector<30x116xf32>
    %407 = arith.negf %406 : vector<30x116xf32>
    %408 = math.exp %407 : vector<30x116xf32>
    %cst_128 = arith.constant 1.000000e+00 : f32
    %409 = vector.broadcast %cst_128 : f32 to vector<30x116xf32>
    %410 = arith.addf %409, %408 : vector<30x116xf32>
    %411 = arith.divf %409, %410 : vector<30x116xf32>
    %412 = arith.mulf %406, %411 : vector<30x116xf32>
    %c176 = arith.constant 176 : index
    %c0_129 = arith.constant 0 : index
    %413 = vector.load %arg2[%c176, %c0_129] : memref<608x180xf32, #tpu.memory_space<vmem>>, vector<116x180xf32>
    %cst_130 = arith.constant dense<0.000000e+00> : vector<30x180xf32>
    %414 = tpu.matmul %412, %413, %cst_130 {dimension_numbers = #tpu.dot_dimension_numbers<[1], [0], [0], [1], [0, 0, 1, 1], [], []>} : vector<30x116xf32>, vector<116x180xf32>, vector<30x180xf32> -> vector<30x180xf32>
    %c296 = arith.constant 296 : index
    %c0_131 = arith.constant 0 : index
    %415 = vector.load %arg2[%c296, %c0_131] : memref<608x180xf32, #tpu.memory_space<vmem>>, vector<1x180xf32>
    %416 = vector.broadcast %415 : vector<1x180xf32> to vector<30x180xf32>
    %417 = arith.addf %414, %416 : vector<30x180xf32>
    %418 = math.tanh %417 : vector<30x180xf32>
    %c336 = arith.constant 336 : index
    %c0_132 = arith.constant 0 : index
    %419 = vector.load %arg2[%c336, %c0_132] : memref<608x180xf32, #tpu.memory_space<vmem>>, vector<3x48xf32>
    %c304 = arith.constant 304 : index
    %c0_133 = arith.constant 0 : index
    %420 = vector.load %arg2[%c304, %c0_133] : memref<608x180xf32, #tpu.memory_space<vmem>>, vector<32x48xf32>
    %cst_134 = arith.constant dense<0.000000e+00> : vector<30x48xf32>
    %421 = tpu.matmul %304, %420, %cst_134 {dimension_numbers = #tpu.dot_dimension_numbers<[1], [0], [0], [1], [0, 0, 1, 1], [], []>} : vector<30x32xf32>, vector<32x48xf32>, vector<30x48xf32> -> vector<30x48xf32>
    %422 = vector.extract_strided_slice %419 {offsets = [0, 0], sizes = [1, 48], strides = [1, 1]} : vector<3x48xf32> to vector<1x48xf32>
    %423 = vector.broadcast %422 : vector<1x48xf32> to vector<30x48xf32>
    %424 = arith.addf %421, %423 : vector<30x48xf32>
    %cst_135 = arith.constant dense<0.000000e+00> : vector<30xf32>
    %425 = vector.multi_reduction <add>, %424, %cst_135 [1] : vector<30x48xf32> to vector<30xf32>
    %426 = vector.shape_cast %425 : vector<30xf32> to vector<30x1xf32>
    %cst_136 = arith.constant 4.800000e+01 : f32
    %427 = vector.broadcast %cst_136 : f32 to vector<30x1xf32>
    %428 = arith.divf %426, %427 : vector<30x1xf32>
    %429 = vector.broadcast %428 : vector<30x1xf32> to vector<30x48xf32>
    %430 = arith.subf %424, %429 : vector<30x48xf32>
    %431 = arith.mulf %430, %430 : vector<30x48xf32>
    %cst_137 = arith.constant dense<0.000000e+00> : vector<30xf32>
    %432 = vector.multi_reduction <add>, %431, %cst_137 [1] : vector<30x48xf32> to vector<30xf32>
    %433 = vector.shape_cast %432 : vector<30xf32> to vector<30x1xf32>
    %cst_138 = arith.constant 4.800000e+01 : f32
    %434 = vector.broadcast %cst_138 : f32 to vector<30x1xf32>
    %435 = arith.divf %433, %434 : vector<30x1xf32>
    %436 = vector.broadcast %428 : vector<30x1xf32> to vector<30x48xf32>
    %437 = arith.subf %424, %436 : vector<30x48xf32>
    %cst_139 = arith.constant 9.99999974E-6 : f32
    %438 = vector.broadcast %cst_139 : f32 to vector<30x1xf32>
    %439 = arith.addf %435, %438 : vector<30x1xf32>
    %440 = math.rsqrt %439 : vector<30x1xf32>
    %441 = vector.broadcast %440 : vector<30x1xf32> to vector<30x48xf32>
    %442 = arith.mulf %437, %441 : vector<30x48xf32>
    %443 = vector.extract_strided_slice %419 {offsets = [1, 0], sizes = [1, 48], strides = [1, 1]} : vector<3x48xf32> to vector<1x48xf32>
    %444 = vector.broadcast %443 : vector<1x48xf32> to vector<30x48xf32>
    %445 = arith.mulf %442, %444 : vector<30x48xf32>
    %446 = vector.extract_strided_slice %419 {offsets = [2, 0], sizes = [1, 48], strides = [1, 1]} : vector<3x48xf32> to vector<1x48xf32>
    %447 = vector.broadcast %446 : vector<1x48xf32> to vector<30x48xf32>
    %448 = arith.addf %445, %447 : vector<30x48xf32>
    %449 = arith.negf %448 : vector<30x48xf32>
    %450 = math.exp %449 : vector<30x48xf32>
    %cst_140 = arith.constant 1.000000e+00 : f32
    %451 = vector.broadcast %cst_140 : f32 to vector<30x48xf32>
    %452 = arith.addf %451, %450 : vector<30x48xf32>
    %453 = arith.divf %451, %452 : vector<30x48xf32>
    %454 = arith.mulf %448, %453 : vector<30x48xf32>
    %c392_141 = arith.constant 392 : index
    %c0_142 = arith.constant 0 : index
    %455 = vector.load %arg2[%c392_141, %c0_142] : memref<608x180xf32, #tpu.memory_space<vmem>>, vector<3x72xf32>
    %c344 = arith.constant 344 : index
    %c0_143 = arith.constant 0 : index
    %456 = vector.load %arg2[%c344, %c0_143] : memref<608x180xf32, #tpu.memory_space<vmem>>, vector<48x72xf32>
    %cst_144 = arith.constant dense<0.000000e+00> : vector<30x72xf32>
    %457 = tpu.matmul %454, %456, %cst_144 {dimension_numbers = #tpu.dot_dimension_numbers<[1], [0], [0], [1], [0, 0, 1, 1], [], []>} : vector<30x48xf32>, vector<48x72xf32>, vector<30x72xf32> -> vector<30x72xf32>
    %458 = vector.extract_strided_slice %455 {offsets = [0, 0], sizes = [1, 72], strides = [1, 1]} : vector<3x72xf32> to vector<1x72xf32>
    %459 = vector.broadcast %458 : vector<1x72xf32> to vector<30x72xf32>
    %460 = arith.addf %457, %459 : vector<30x72xf32>
    %cst_145 = arith.constant dense<0.000000e+00> : vector<30xf32>
    %461 = vector.multi_reduction <add>, %460, %cst_145 [1] : vector<30x72xf32> to vector<30xf32>
    %462 = vector.shape_cast %461 : vector<30xf32> to vector<30x1xf32>
    %cst_146 = arith.constant 7.200000e+01 : f32
    %463 = vector.broadcast %cst_146 : f32 to vector<30x1xf32>
    %464 = arith.divf %462, %463 : vector<30x1xf32>
    %465 = vector.broadcast %464 : vector<30x1xf32> to vector<30x72xf32>
    %466 = arith.subf %460, %465 : vector<30x72xf32>
    %467 = arith.mulf %466, %466 : vector<30x72xf32>
    %cst_147 = arith.constant dense<0.000000e+00> : vector<30xf32>
    %468 = vector.multi_reduction <add>, %467, %cst_147 [1] : vector<30x72xf32> to vector<30xf32>
    %469 = vector.shape_cast %468 : vector<30xf32> to vector<30x1xf32>
    %cst_148 = arith.constant 7.200000e+01 : f32
    %470 = vector.broadcast %cst_148 : f32 to vector<30x1xf32>
    %471 = arith.divf %469, %470 : vector<30x1xf32>
    %472 = vector.broadcast %464 : vector<30x1xf32> to vector<30x72xf32>
    %473 = arith.subf %460, %472 : vector<30x72xf32>
    %cst_149 = arith.constant 9.99999974E-6 : f32
    %474 = vector.broadcast %cst_149 : f32 to vector<30x1xf32>
    %475 = arith.addf %471, %474 : vector<30x1xf32>
    %476 = math.rsqrt %475 : vector<30x1xf32>
    %477 = vector.broadcast %476 : vector<30x1xf32> to vector<30x72xf32>
    %478 = arith.mulf %473, %477 : vector<30x72xf32>
    %479 = vector.extract_strided_slice %455 {offsets = [1, 0], sizes = [1, 72], strides = [1, 1]} : vector<3x72xf32> to vector<1x72xf32>
    %480 = vector.broadcast %479 : vector<1x72xf32> to vector<30x72xf32>
    %481 = arith.mulf %478, %480 : vector<30x72xf32>
    %482 = vector.extract_strided_slice %455 {offsets = [2, 0], sizes = [1, 72], strides = [1, 1]} : vector<3x72xf32> to vector<1x72xf32>
    %483 = vector.broadcast %482 : vector<1x72xf32> to vector<30x72xf32>
    %484 = arith.addf %481, %483 : vector<30x72xf32>
    %485 = arith.negf %484 : vector<30x72xf32>
    %486 = math.exp %485 : vector<30x72xf32>
    %cst_150 = arith.constant 1.000000e+00 : f32
    %487 = vector.broadcast %cst_150 : f32 to vector<30x72xf32>
    %488 = arith.addf %487, %486 : vector<30x72xf32>
    %489 = arith.divf %487, %488 : vector<30x72xf32>
    %490 = arith.mulf %484, %489 : vector<30x72xf32>
    %c472 = arith.constant 472 : index
    %c0_151 = arith.constant 0 : index
    %491 = vector.load %arg2[%c472, %c0_151] : memref<608x180xf32, #tpu.memory_space<vmem>>, vector<3x116xf32>
    %c400_152 = arith.constant 400 : index
    %c0_153 = arith.constant 0 : index
    %492 = vector.load %arg2[%c400_152, %c0_153] : memref<608x180xf32, #tpu.memory_space<vmem>>, vector<72x116xf32>
    %cst_154 = arith.constant dense<0.000000e+00> : vector<30x116xf32>
    %493 = tpu.matmul %490, %492, %cst_154 {dimension_numbers = #tpu.dot_dimension_numbers<[1], [0], [0], [1], [0, 0, 1, 1], [], []>} : vector<30x72xf32>, vector<72x116xf32>, vector<30x116xf32> -> vector<30x116xf32>
    %494 = vector.extract_strided_slice %491 {offsets = [0, 0], sizes = [1, 116], strides = [1, 1]} : vector<3x116xf32> to vector<1x116xf32>
    %495 = vector.broadcast %494 : vector<1x116xf32> to vector<30x116xf32>
    %496 = arith.addf %493, %495 : vector<30x116xf32>
    %cst_155 = arith.constant dense<0.000000e+00> : vector<30xf32>
    %497 = vector.multi_reduction <add>, %496, %cst_155 [1] : vector<30x116xf32> to vector<30xf32>
    %498 = vector.shape_cast %497 : vector<30xf32> to vector<30x1xf32>
    %cst_156 = arith.constant 1.160000e+02 : f32
    %499 = vector.broadcast %cst_156 : f32 to vector<30x1xf32>
    %500 = arith.divf %498, %499 : vector<30x1xf32>
    %501 = vector.broadcast %500 : vector<30x1xf32> to vector<30x116xf32>
    %502 = arith.subf %496, %501 : vector<30x116xf32>
    %503 = arith.mulf %502, %502 : vector<30x116xf32>
    %cst_157 = arith.constant dense<0.000000e+00> : vector<30xf32>
    %504 = vector.multi_reduction <add>, %503, %cst_157 [1] : vector<30x116xf32> to vector<30xf32>
    %505 = vector.shape_cast %504 : vector<30xf32> to vector<30x1xf32>
    %cst_158 = arith.constant 1.160000e+02 : f32
    %506 = vector.broadcast %cst_158 : f32 to vector<30x1xf32>
    %507 = arith.divf %505, %506 : vector<30x1xf32>
    %508 = vector.broadcast %500 : vector<30x1xf32> to vector<30x116xf32>
    %509 = arith.subf %496, %508 : vector<30x116xf32>
    %cst_159 = arith.constant 9.99999974E-6 : f32
    %510 = vector.broadcast %cst_159 : f32 to vector<30x1xf32>
    %511 = arith.addf %507, %510 : vector<30x1xf32>
    %512 = math.rsqrt %511 : vector<30x1xf32>
    %513 = vector.broadcast %512 : vector<30x1xf32> to vector<30x116xf32>
    %514 = arith.mulf %509, %513 : vector<30x116xf32>
    %515 = vector.extract_strided_slice %491 {offsets = [1, 0], sizes = [1, 116], strides = [1, 1]} : vector<3x116xf32> to vector<1x116xf32>
    %516 = vector.broadcast %515 : vector<1x116xf32> to vector<30x116xf32>
    %517 = arith.mulf %514, %516 : vector<30x116xf32>
    %518 = vector.extract_strided_slice %491 {offsets = [2, 0], sizes = [1, 116], strides = [1, 1]} : vector<3x116xf32> to vector<1x116xf32>
    %519 = vector.broadcast %518 : vector<1x116xf32> to vector<30x116xf32>
    %520 = arith.addf %517, %519 : vector<30x116xf32>
    %521 = arith.negf %520 : vector<30x116xf32>
    %522 = math.exp %521 : vector<30x116xf32>
    %cst_160 = arith.constant 1.000000e+00 : f32
    %523 = vector.broadcast %cst_160 : f32 to vector<30x116xf32>
    %524 = arith.addf %523, %522 : vector<30x116xf32>
    %525 = arith.divf %523, %524 : vector<30x116xf32>
    %526 = arith.mulf %520, %525 : vector<30x116xf32>
    %c480 = arith.constant 480 : index
    %c0_161 = arith.constant 0 : index
    %527 = vector.load %arg2[%c480, %c0_161] : memref<608x180xf32, #tpu.memory_space<vmem>>, vector<116x180xf32>
    %cst_162 = arith.constant dense<0.000000e+00> : vector<30x180xf32>
    %528 = tpu.matmul %526, %527, %cst_162 {dimension_numbers = #tpu.dot_dimension_numbers<[1], [0], [0], [1], [0, 0, 1, 1], [], []>} : vector<30x116xf32>, vector<116x180xf32>, vector<30x180xf32> -> vector<30x180xf32>
    %c600 = arith.constant 600 : index
    %c0_163 = arith.constant 0 : index
    %529 = vector.load %arg2[%c600, %c0_163] : memref<608x180xf32, #tpu.memory_space<vmem>>, vector<1x180xf32>
    %530 = vector.broadcast %529 : vector<1x180xf32> to vector<30x180xf32>
    %531 = arith.addf %528, %530 : vector<30x180xf32>
    %532 = math.tanh %531 : vector<30x180xf32>
    %533 = vector.extract_strided_slice %418 {offsets = [0, 0], sizes = [13, 180], strides = [1, 1]} : vector<30x180xf32> to vector<13x180xf32>
    %c0_164 = arith.constant 0 : index
    %c0_165 = arith.constant 0 : index
    %534 = vector.load %arg3[%c0_164, %c0_165] : memref<30x180xf32, #tpu.memory_space<vmem>>, vector<13x180xf32>
    tpu.vector_store %arg3[%c0_164, %c0_165], %533 {strides = array<i32>} : memref<30x180xf32, #tpu.memory_space<vmem>>, vector<13x180xf32>,
    %535 = vector.extract_strided_slice %532 {offsets = [13, 0], sizes = [2, 180], strides = [1, 1]} : vector<30x180xf32> to vector<2x180xf32>
    %c13 = arith.constant 13 : index
    %c0_166 = arith.constant 0 : index
    %536 = vector.load %arg3[%c13, %c0_166] : memref<30x180xf32, #tpu.memory_space<vmem>>, vector<2x180xf32>
    tpu.vector_store %arg3[%c13, %c0_166], %535 {strides = array<i32>} : memref<30x180xf32, #tpu.memory_space<vmem>>, vector<2x180xf32>,
    %537 = vector.extract_strided_slice %418 {offsets = [15, 0], sizes = [13, 180], strides = [1, 1]} : vector<30x180xf32> to vector<13x180xf32>
    %c15 = arith.constant 15 : index
    %c0_167 = arith.constant 0 : index
    %538 = vector.load %arg3[%c15, %c0_167] : memref<30x180xf32, #tpu.memory_space<vmem>>, vector<13x180xf32>
    tpu.vector_store %arg3[%c15, %c0_167], %537 {strides = array<i32>} : memref<30x180xf32, #tpu.memory_space<vmem>>, vector<13x180xf32>,
    %539 = vector.extract_strided_slice %532 {offsets = [28, 0], sizes = [2, 180], strides = [1, 1]} : vector<30x180xf32> to vector<2x180xf32>
    %c28 = arith.constant 28 : index
    %c0_168 = arith.constant 0 : index
    %540 = vector.load %arg3[%c28, %c0_168] : memref<30x180xf32, #tpu.memory_space<vmem>>, vector<2x180xf32>
    tpu.vector_store %arg3[%c28, %c0_168], %539 {strides = array<i32>} : memref<30x180xf32, #tpu.memory_space<vmem>>, vector<2x180xf32>,
    return
  }
}

</mosaic_0001>

<llo_original>
// kernel: fwd.1
$region0: #{fwd.1}
  #allocation0 [shape = 'u32[]', space=smem, size = 0x4, offset = 0x4, fixed_abs, tag = 'smem constant byte address 0x4 - core index']
  #allocation1 [shape = 'u32[144,128]{1,0:T(1,128)}', space=vmem, size = 0x12000, scoped, tag = 'internal scratch']
  %s0 = inlined_call_operand.vmem [shape: f32[30,32], index: 0, kind: input, shape index: {}]
  %s1 = inlined_call_operand.vmem [shape: f32[704,128], index: 1, kind: input, shape index: {}]
  %s2 = inlined_call_operand.vmem [shape: f32[608,180], index: 2, kind: input, shape index: {}]
  %s3 = inlined_call_operand.vmem [shape: f32[30,180], index: 3, kind: output, shape index: {}]
  %s4 = sld [smem:[#allocation0]]
  $region22: #{fwd.1} parent=0
    _
  %s6 = ssub.s32 1, %s4
  %s7 = scalar_select 0, %s6, %s4
  // Predicated region
  $region2: #{fwd.1} parent=0 // pred_check
    _
  $region3: #{fwd.1} parent=0 // pred_check_branch
    %9 = sbr.rel (0) target = $region5
  $region4: #{fwd.1} parent=0 // pred_region
    _
  $region5: #{fwd.1} parent=0 // pred_fallthru
    _
  // Predicated region
  $region6: #{fwd.1} parent=0 // pred_check
    _
  $region7: #{fwd.1} parent=0 // pred_check_branch
    %11 = sbr.rel (0) target = $region9
  $region8: #{fwd.1} parent=0 // pred_region
    _
  $region9: #{fwd.1} parent=0 // pred_fallthru
    _
  // Predicated region
  $region10: #{fwd.1} parent=0 // pred_check
    _
  $region11: #{fwd.1} parent=0 // pred_check_branch
    %13 = sbr.rel (0) target = $region13
  $region12: #{fwd.1} parent=0 // pred_region
    _
  $region13: #{fwd.1} parent=0 // pred_fallthru
    _
  %v14 = vld [vmem:[%s0] sm:$0xff]
  %v15 = vld [vmem:[%s0 + $0x8] sm:$0xff]
  %v16 = vld [vmem:[%s0 + $0x10] sm:$0xff]
  %v17 = vld [vmem:[%s0 + $0x18] sm:$0x3f]
  %v18 = vld [vmem:[%s1] sm:$0xff]
  %v19 = vld [vmem:[%s1 + $0x8] sm:$0xff]
  %v20 = vld [vmem:[%s1 + $0x10] sm:$0xff]
  %v21 = vld [vmem:[%s1 + $0x18] sm:$0x3f]
  %v22 = vmul.f32 %v14, %v18
  %v23 = vmul.f32 %v15, %v19
  %v24 = vmul.f32 %v16, %v20
  %v25 = vmul.f32 %v17, %v21
  %v26 = vld [vmem:[%s1 + $0x40] sm:$0xff]
  %v27 = vld [vmem:[%s1 + $0x48] sm:$0xff]
  %v28 = vld [vmem:[%s1 + $0x50] sm:$0xff]
  %v29 = vld [vmem:[%s1 + $0x58] sm:$0xff]
  %vm30 = vcmask 261120
  %v32 = vsel %vm30, %v14, 0
  %v35 = vsel %vm30, %v15, 0
  %v38 = vsel %vm30, %v16, 0
  %v41 = vsel %vm30, %v17, 0
  %43 = vmatprep.subr.mxu0 0.0
  %44 = vmatpush1.msra.mxu0 %v26
  %45 = vmatprep.subr.mxu0 0.0
  %46 = vmatpush1.msra.mxu0 %v27
  %47 = vmatprep.subr.mxu0 0.0
  %48 = vmatpush1.msra.mxu0 %v28
  %49 = vmatprep.subr.mxu0 0.0
  %50 = vmatpush1.msra.mxu0 %v29
  %51 = vmatprep.subr.mxu0 0.0
  %52 = vmatpush1.msra.mxu0 0.0
  %53 = vmatprep.subr.mxu0 0.0
  %54 = vmatpush1.msra.mxu0 0.0
  %55 = vmatprep.subr.mxu0 0.0
  %56 = vmatpush1.msra.mxu0 0.0
  %57 = vmatprep.subr.mxu0 0.0
  %58 = vmatpush1.msra.mxu0 0.0
  %59 = vmatprep.subr.mxu0 0.0
  %60 = vmatpush1.msra.mxu0 0.0
  %61 = vmatprep.subr.mxu0 0.0
  %62 = vmatpush1.msra.mxu0 0.0
  %63 = vmatprep.subr.mxu0 0.0
  %64 = vmatpush1.msra.mxu0 0.0
  %65 = vmatprep.subr.mxu0 0.0
  %66 = vmatpush1.msra.mxu0 0.0
  %67 = vmatprep.subr.mxu0 0.0
  %68 = vmatpush1.msra.mxu0 0.0
  %69 = vmatprep.subr.mxu0 0.0
  %70 = vmatpush1.msra.mxu0 0.0
  %71 = vmatprep.subr.mxu0 0.0
  %72 = vmatpush1.msra.mxu0 0.0
  %73 = vmatprep.subr.mxu0 0.0
  %74 = vmatpush1.msra.mxu0 0.0
  %75 = vmatprep.subr.mxu0 0.0
  %76 = vmatpush1.msra.mxu0 0.0
  %77 = vmatprep.subr.mxu0 0.0
  %78 = vmatpush1.msra.mxu0 0.0
  %79 = vmatprep.subr.mxu0 0.0
  %80 = vmatpush1.msra.mxu0 0.0
  %81 = vmatprep.subr.mxu0 0.0
  %82 = vmatpush1.msra.mxu0 0.0
  %83 = vmatprep.subr.mxu0 0.0
  %84 = vmatpush1.msra.mxu0 0.0
  %85 = vmatprep.subr.mxu0 0.0
  %86 = vmatpush1.msra.mxu0 0.0
  %87 = vmatprep.subr.mxu0 0.0
  %88 = vmatpush1.msra.mxu0 0.0
  %89 = vmatprep.subr.mxu0 0.0
  %90 = vmatpush1.msra.mxu0 0.0
  %91 = vmatprep.subr.mxu0 0.0
  %92 = vmatpush1.msra.mxu0 0.0
  %93 = vmatprep.subr.mxu0 0.0
  %94 = vmatpush1.msra.mxu0 0.0
  %95 = vmatprep.subr.mxu0 0.0
  %96 = vmatpush1.msra.mxu0 0.0
  %97 = vmatprep.subr.mxu0 0.0
  %98 = vmatpush1.msra.mxu0 0.0
  %99 = vmatprep.subr.mxu0 0.0
  %100 = vmatpush1.msra.mxu0 0.0
  %101 = vmatprep.subr.mxu0 0.0
  %102 = vmatpush1.msra.mxu0 0.0
  %103 = vmatprep.subr.mxu0 0.0
  %104 = vmatpush1.msra.mxu0 0.0
  %105 = vmatprep.subr.mxu0 0.0
  %106 = vmatpush1.msra.mxu0 0.0
  %107 = vmatprep.mubr.f32.mxu0 0.0
  %108 = vmatmul.mubr.f32.gmra.mrb[0].mxu0 %v32
  %v109 = vpop.f32.mrb[0].mxu0
  %v110 = vadd.f32 0.0, %v109
  %v111 = vpop.f32.mrb[0].mxu0
  %112 = vmatprep.mubr.f32.mxu0 0.0
  %113 = vmatmul.mubr.f32.gmra.mrb[0].mxu0 %v35
  %v114 = vpop.f32.mrb[0].mxu0
  %v115 = vadd.f32 0.0, %v114
  %v116 = vpop.f32.mrb[0].mxu0
  %117 = vmatprep.mubr.f32.mxu0 0.0
  %118 = vmatmul.mubr.f32.gmra.mrb[0].mxu0 %v38
  %v119 = vpop.f32.mrb[0].mxu0
  %v120 = vadd.f32 0.0, %v119
  %v121 = vpop.f32.mrb[0].mxu0
  %122 = vmatprep.mubr.f32.mxu0 0.0
  %123 = vmatmul.mubr.f32.gmra.mrb[0].mxu0 %v41
  %v124 = vpop.f32.mrb[0].mxu0
  %v125 = vadd.f32 0.0, %v124
  %v126 = vpop.f32.mrb[0].mxu0
  %127 = vdwg.mxu0
  %v128 = vld [vmem:[%s1 + $0x20] sm:$0xff]
  %v129 = vld [vmem:[%s1 + $0x28] sm:$0xff]
  %v130 = vld [vmem:[%s1 + $0x30] sm:$0xff]
  %v131 = vld [vmem:[%s1 + $0x38] sm:$0x3f]
  %v132 = vmul.f32 %v110, %v128
  %v133 = vmul.f32 %v115, %v129
  %v134 = vmul.f32 %v120, %v130
  %v135 = vmul.f32 %v125, %v131
  %v136 = vadd.f32 %v22, %v132
  %v137 = vadd.f32 %v23, %v133
  %v138 = vadd.f32 %v24, %v134
  %v139 = vadd.f32 %v25, %v135
  %v140 = vld [vmem:[%s1 + $0x60] sm:$0xff]
  %v141 = vld [vmem:[%s1 + $0x68] sm:$0xff]
  %v142 = vld [vmem:[%s1 + $0x70] sm:$0xff]
  %v143 = vld [vmem:[%s1 + $0x78] sm:$0x3f]
  %v144 = vld [vmem:[%s1 + $0x80] sm:$0xff]
  %v145 = vld [vmem:[%s1 + $0x88] sm:$0xff]
  %v146 = vld [vmem:[%s1 + $0x90] sm:$0xff]
  %v147 = vld [vmem:[%s1 + $0x98] sm:$0xff]
  %v148 = vld [vmem:[%s1 + $0xa0] sm:$0x1]
  %v149 = vlaneseq
  %v150 = vshrl.u32 %v149, 7
  %v151 = vsub.s32 0, %v150
  %v152 = vrot.slane %v148, %v151
  %v154 = vsel %vm30, %v136, 0
  %v157 = vsel %vm30, %v137, 0
  %v160 = vsel %vm30, %v138, 0
  %v163 = vsel %vm30, %v139, 0
  %165 = vmatprep.subr.mxu0 0.0
  %166 = vmatpush1.msra.mxu0 %v144
  %167 = vmatprep.subr.mxu0 0.0
  %168 = vmatpush1.msra.mxu0 %v145
  %169 = vmatprep.subr.mxu0 0.0
  %170 = vmatpush1.msra.mxu0 %v146
  %171 = vmatprep.subr.mxu0 0.0
  %172 = vmatpush1.msra.mxu0 %v147
  %173 = vmatprep.subr.mxu0 0.0
  %174 = vmatpush1.msra.mxu0 0.0
  %175 = vmatprep.subr.mxu0 0.0
  %176 = vmatpush1.msra.mxu0 0.0
  %177 = vmatprep.subr.mxu0 0.0
  %178 = vmatpush1.msra.mxu0 0.0
  %179 = vmatprep.subr.mxu0 0.0
  %180 = vmatpush1.msra.mxu0 0.0
  %181 = vmatprep.subr.mxu0 0.0
  %182 = vmatpush1.msra.mxu0 0.0
  %183 = vmatprep.subr.mxu0 0.0
  %184 = vmatpush1.msra.mxu0 0.0
  %185 = vmatprep.subr.mxu0 0.0
  %186 = vmatpush1.msra.mxu0 0.0
  %187 = vmatprep.subr.mxu0 0.0
  %188 = vmatpush1.msra.mxu0 0.0
  %189 = vmatprep.subr.mxu0 0.0
  %190 = vmatpush1.msra.mxu0 0.0
  %191 = vmatprep.subr.mxu0 0.0
  %192 = vmatpush1.msra.mxu0 0.0
  %193 = vmatprep.subr.mxu0 0.0
  %194 = vmatpush1.msra.mxu0 0.0
  %195 = vmatprep.subr.mxu0 0.0
  %196 = vmatpush1.msra.mxu0 0.0
  %197 = vmatprep.subr.mxu0 0.0
  %198 = vmatpush1.msra.mxu0 0.0
  %199 = vmatprep.subr.mxu0 0.0
  %200 = vmatpush1.msra.mxu0 0.0
  %201 = vmatprep.subr.mxu0 0.0
  %202 = vmatpush1.msra.mxu0 0.0
  %203 = vmatprep.subr.mxu0 0.0
  %204 = vmatpush1.msra.mxu0 0.0
  %205 = vmatprep.subr.mxu0 0.0
  %206 = vmatpush1.msra.mxu0 0.0
  %207 = vmatprep.subr.mxu0 0.0
  %208 = vmatpush1.msra.mxu0 0.0
  %209 = vmatprep.subr.mxu0 0.0
  %210 = vmatpush1.msra.mxu0 0.0
  %211 = vmatprep.subr.mxu0 0.0
  %212 = vmatpush1.msra.mxu0 0.0
  %213 = vmatprep.subr.mxu0 0.0
  %214 = vmatpush1.msra.mxu0 0.0
  %215 = vmatprep.subr.mxu0 0.0
  %216 = vmatpush1.msra.mxu0 0.0
  %217 = vmatprep.subr.mxu0 0.0
  %218 = vmatpush1.msra.mxu0 0.0
  %219 = vmatprep.subr.mxu0 0.0
  %220 = vmatpush1.msra.mxu0 0.0
  %221 = vmatprep.subr.mxu0 0.0
  %222 = vmatpush1.msra.mxu0 0.0
  %223 = vmatprep.subr.mxu0 0.0
  %224 = vmatpush1.msra.mxu0 0.0
  %225 = vmatprep.subr.mxu0 0.0
  %226 = vmatpush1.msra.mxu0 0.0
  %227 = vmatprep.subr.mxu0 0.0
  %228 = vmatpush1.msra.mxu0 0.0
  %229 = vmatprep.mubr.f32.mxu0 0.0
  %230 = vmatmul.mubr.f32.gmra.mrb[0].mxu0 %v154
  %v231 = vpop.f32.mrb[0].mxu0
  %v232 = vadd.f32 %v152, %v231
  %v233 = vpop.f32.mrb[0].mxu0
  %234 = vmatprep.mubr.f32.mxu0 0.0
  %235 = vmatmul.mubr.f32.gmra.mrb[0].mxu0 %v157
  %v236 = vpop.f32.mrb[0].mxu0
  %v237 = vadd.f32 %v152, %v236
  %v238 = vpop.f32.mrb[0].mxu0
  %239 = vmatprep.mubr.f32.mxu0 0.0
  %240 = vmatmul.mubr.f32.gmra.mrb[0].mxu0 %v160
  %v241 = vpop.f32.mrb[0].mxu0
  %v242 = vadd.f32 %v152, %v241
  %v243 = vpop.f32.mrb[0].mxu0
  %244 = vmatprep.mubr.f32.mxu0 0.0
  %245 = vmatmul.mubr.f32.gmra.mrb[0].mxu0 %v163
  %v246 = vpop.f32.mrb[0].mxu0
  %v247 = vadd.f32 %v152, %v246
  %v248 = vpop.f32.mrb[0].mxu0
  %249 = vdwg.mxu0
  %254 = vrot.lane.b32.xlu0 %v232, 96
  %v255 = vpop.permute.xlu0 %254
  %256 = vrot.lane.b32.xlu0 %v237, 96
  %v257 = vpop.permute.xlu0 %256
  %258 = vrot.lane.b32.xlu0 %v242, 96
  %v259 = vpop.permute.xlu0 %258
  %260 = vrot.lane.b32.xlu0 %v247, 96
  %v261 = vpop.permute.xlu0 %260
  %vm262 = vcmask 64512
  %v263 = vsel %vm262, %v232, 0
  %v265 = vsel %vm262, %v237, 0
  %v267 = vsel %vm262, %v242, 0
  %v269 = vsel %vm262, %v247, 0
  %v271 = vsel %vm262, %v255, 0
  %v273 = vsel %vm262, %v257, 0
  %v275 = vsel %vm262, %v259, 0
  %v277 = vsel %vm262, %v261, 0
  %279 = vmatprep.subr.mxu0 0.0
  %280 = vmatpush1.xpose.msra.mxu0 %v271
  %281 = vmatprep.subr.mxu0 0.0
  %282 = vmatpush1.xpose.msra.mxu0 %v273
  %283 = vmatprep.subr.mxu0 0.0
  %284 = vmatpush1.xpose.msra.mxu0 %v275
  %285 = vmatprep.subr.mxu0 0.0
  %286 = vmatpush1.xpose.msra.mxu0 %v277
  %287 = vmatprep.subr.mxu0 0.0
  %288 = vmatpush1.xpose.msra.mxu0 0.0
  %289 = vmatprep.subr.mxu0 0.0
  %290 = vmatpush1.xpose.msra.mxu0 0.0
  %291 = vmatprep.subr.mxu0 0.0
  %292 = vmatpush1.xpose.msra.mxu0 0.0
  %293 = vmatprep.subr.mxu0 0.0
  %294 = vmatpush1.xpose.msra.mxu0 0.0
  %295 = vmatprep.subr.mxu0 0.0
  %296 = vmatpush1.xpose.msra.mxu0 0.0
  %297 = vmatprep.subr.mxu0 0.0
  %298 = vmatpush1.xpose.msra.mxu0 0.0
  %299 = vmatprep.subr.mxu0 0.0
  %300 = vmatpush1.xpose.msra.mxu0 0.0
  %301 = vmatprep.subr.mxu0 0.0
  %302 = vmatpush1.xpose.msra.mxu0 0.0
  %303 = vmatprep.subr.mxu0 0.0
  %304 = vmatpush1.xpose.msra.mxu0 0.0
  %305 = vmatprep.subr.mxu0 0.0
  %306 = vmatpush1.xpose.msra.mxu0 0.0
  %307 = vmatprep.subr.mxu0 0.0
  %308 = vmatpush1.xpose.msra.mxu0 0.0
  %309 = vmatprep.subr.mxu0 0.0
  %310 = vmatpush1.xpose.msra.mxu0 0.0
  %311 = vmatprep.subr.mxu0 0.0
  %312 = vmatpush1.xpose.msra.mxu0 0.0
  %313 = vmatprep.subr.mxu0 0.0
  %314 = vmatpush1.xpose.msra.mxu0 0.0
  %315 = vmatprep.subr.mxu0 0.0
  %316 = vmatpush1.xpose.msra.mxu0 0.0
  %317 = vmatprep.subr.mxu0 0.0
  %318 = vmatpush1.xpose.msra.mxu0 0.0
  %319 = vmatprep.subr.mxu0 0.0
  %320 = vmatpush1.xpose.msra.mxu0 0.0
  %321 = vmatprep.subr.mxu0 0.0
  %322 = vmatpush1.xpose.msra.mxu0 0.0
  %323 = vmatprep.subr.mxu0 0.0
  %324 = vmatpush1.xpose.msra.mxu0 0.0
  %325 = vmatprep.subr.mxu0 0.0
  %326 = vmatpush1.xpose.msra.mxu0 0.0
  %327 = vmatprep.subr.mxu0 0.0
  %328 = vmatpush1.xpose.msra.mxu0 0.0
  %329 = vmatprep.subr.mxu0 0.0
  %330 = vmatpush1.xpose.msra.mxu0 0.0
  %331 = vmatprep.subr.mxu0 0.0
  %332 = vmatpush1.xpose.msra.mxu0 0.0
  %333 = vmatprep.subr.mxu0 0.0
  %334 = vmatpush1.xpose.msra.mxu0 0.0
  %335 = vmatprep.subr.mxu0 0.0
  %336 = vmatpush1.xpose.msra.mxu0 0.0
  %337 = vmatprep.subr.mxu0 0.0
  %338 = vmatpush1.xpose.msra.mxu0 0.0
  %339 = vmatprep.subr.mxu0 0.0
  %340 = vmatpush1.xpose.msra.mxu0 0.0
  %341 = vmatprep.subr.mxu0 0.0
  %342 = vmatpush1.xpose.msra.mxu0 0.0
  %343 = vmatprep.mubr.f32.mxu0 0.0
  %344 = vmatmul.mubr.f32.gmra.mrb[0].mxu0 %v263
  %v345 = vpop.f32.mrb[0].mxu0
  %v346 = vadd.f32 %v140, %v345
  %v347 = vpop.f32.mrb[0].mxu0
  %348 = vmatprep.mubr.f32.mxu0 0.0
  %349 = vmatmul.mubr.f32.gmra.mrb[0].mxu0 %v265
  %v350 = vpop.f32.mrb[0].mxu0
  %v351 = vadd.f32 %v141, %v350
  %v352 = vpop.f32.mrb[0].mxu0
  %353 = vmatprep.mubr.f32.mxu0 0.0
  %354 = vmatmul.mubr.f32.gmra.mrb[0].mxu0 %v267
  %v355 = vpop.f32.mrb[0].mxu0
  %v356 = vadd.f32 %v142, %v355
  %v357 = vpop.f32.mrb[0].mxu0
  %358 = vmatprep.mubr.f32.mxu0 0.0
  %359 = vmatmul.mubr.f32.gmra.mrb[0].mxu0 %v269
  %v360 = vpop.f32.mrb[0].mxu0
  %v361 = vadd.f32 %v143, %v360
  %v362 = vpop.f32.mrb[0].mxu0
  %363 = vdwg.mxu0
  %vm364 = vcmask 244736
  %v365 = vsel %vm364, %v346, -inf
  %366 = vmax.xlane.f32.xlu0 %v365
  %v367 = vpop.xlane.xlu0 %366
  %v368 = vsel %vm364, %v351, -inf
  %369 = vmax.xlane.f32.xlu0 %v368
  %v370 = vpop.xlane.xlu0 %369
  %v371 = vsel %vm364, %v356, -inf
  %372 = vmax.xlane.f32.xlu0 %v371
  %v373 = vpop.xlane.xlu0 %372
  %vm374 = vcmask 242688
  %v375 = vsel %vm374, %v361, -inf
  %376 = vmax.xlane.f32.xlu0 %v375
  %v377 = vpop.xlane.xlu0 %376
  %v378 = vsub.f32 %v346, %v367
  %v379 = vsub.f32 %v351, %v370
  %v380 = vsub.f32 %v356, %v373
  %v381 = vsub.f32 %v361, %v377
  %v382 = vmul.f32 %v378, 1.442695
  %v383 = vpow.pop %v382
  %v384 = vmul.f32 %v379, 1.442695
  %v385 = vpow.pop %v384
  %v386 = vmul.f32 %v380, 1.442695
  %v387 = vpow.pop %v386
  %v388 = vmul.f32 %v381, 1.442695
  %v389 = vpow.pop %v388
  %v390 = vsel %vm364, %v383, 0.0
  %391 = vadd.xlane.f32.xlu0 %v390
  %v392 = vpop.xlane.xlu0 %391
  %v393 = vsel %vm364, %v385, 0.0
  %394 = vadd.xlane.f32.xlu0 %v393
  %v395 = vpop.xlane.xlu0 %394
  %v396 = vsel %vm364, %v387, 0.0
  %397 = vadd.xlane.f32.xlu0 %v396
  %v398 = vpop.xlane.xlu0 %397
  %v399 = vsel %vm374, %v389, 0.0
  %400 = vadd.xlane.f32.xlu0 %v399
  %v401 = vpop.xlane.xlu0 %400
  %v402 = vrcp.pop %v392
  %v403 = vrcp.pop %v395
  %v404 = vrcp.pop %v398
  %v405 = vrcp.pop %v401
  %v406 = vmul.f32 %v383, %v402
  %v407 = vmul.f32 %v385, %v403
  %v408 = vmul.f32 %v387, %v404
  %v409 = vmul.f32 %v389, %v405
  %410 = vrot.lane.b32.xlu0 %v232, 64
  %v411 = vpop.permute.xlu0 %410
  %412 = vrot.lane.b32.xlu0 %v237, 64
  %v413 = vpop.permute.xlu0 %412
  %414 = vrot.lane.b32.xlu0 %v242, 64
  %v415 = vpop.permute.xlu0 %414
  %416 = vrot.lane.b32.xlu0 %v247, 64
  %v417 = vpop.permute.xlu0 %416
  %v422 = vsel %vm364, %v406, 0
  %v425 = vsel %vm364, %v407, 0
  %v428 = vsel %vm364, %v408, 0
  %v431 = vsel %vm364, %v409, 0
  %vm433 = vcmask 1045504
  %v434 = vsel %vm433, %v417, 0
  %436 = vmatprep.subr.mxu0 0.0
  %437 = vmatpush1.msra.mxu0 %v411
  %438 = vmatprep.subr.mxu0 0.0
  %439 = vmatpush1.msra.mxu0 %v413
  %440 = vmatprep.subr.mxu0 0.0
  %441 = vmatpush1.msra.mxu0 %v415
  %442 = vmatprep.subr.mxu0 0.0
  %443 = vmatpush1.msra.mxu0 %v434
  %444 = vmatprep.subr.mxu0 0.0
  %445 = vmatpush1.msra.mxu0 0.0
  %446 = vmatprep.subr.mxu0 0.0
  %447 = vmatpush1.msra.mxu0 0.0
  %448 = vmatprep.subr.mxu0 0.0
  %449 = vmatpush1.msra.mxu0 0.0
  %450 = vmatprep.subr.mxu0 0.0
  %451 = vmatpush1.msra.mxu0 0.0
  %452 = vmatprep.subr.mxu0 0.0
  %453 = vmatpush1.msra.mxu0 0.0
  %454 = vmatprep.subr.mxu0 0.0
  %455 = vmatpush1.msra.mxu0 0.0
  %456 = vmatprep.subr.mxu0 0.0
  %457 = vmatpush1.msra.mxu0 0.0
  %458 = vmatprep.subr.mxu0 0.0
  %459 = vmatpush1.msra.mxu0 0.0
  %460 = vmatprep.subr.mxu0 0.0
  %461 = vmatpush1.msra.mxu0 0.0
  %462 = vmatprep.subr.mxu0 0.0
  %463 = vmatpush1.msra.mxu0 0.0
  %464 = vmatprep.subr.mxu0 0.0
  %465 = vmatpush1.msra.mxu0 0.0
  %466 = vmatprep.subr.mxu0 0.0
  %467 = vmatpush1.msra.mxu0 0.0
  %468 = vmatprep.subr.mxu0 0.0
  %469 = vmatpush1.msra.mxu0 0.0
  %470 = vmatprep.subr.mxu0 0.0
  %471 = vmatpush1.msra.mxu0 0.0
  %472 = vmatprep.subr.mxu0 0.0
  %473 = vmatpush1.msra.mxu0 0.0
  %474 = vmatprep.subr.mxu0 0.0
  %475 = vmatpush1.msra.mxu0 0.0
  %476 = vmatprep.subr.mxu0 0.0
  %477 = vmatpush1.msra.mxu0 0.0
  %478 = vmatprep.subr.mxu0 0.0
  %479 = vmatpush1.msra.mxu0 0.0
  %480 = vmatprep.subr.mxu0 0.0
  %481 = vmatpush1.msra.mxu0 0.0
  %482 = vmatprep.subr.mxu0 0.0
  %483 = vmatpush1.msra.mxu0 0.0
  %484 = vmatprep.subr.mxu0 0.0
  %485 = vmatpush1.msra.mxu0 0.0
  %486 = vmatprep.subr.mxu0 0.0
  %487 = vmatpush1.msra.mxu0 0.0
  %488 = vmatprep.subr.mxu0 0.0
  %489 = vmatpush1.msra.mxu0 0.0
  %490 = vmatprep.subr.mxu0 0.0
  %491 = vmatpush1.msra.mxu0 0.0
  %492 = vmatprep.subr.mxu0 0.0
  %493 = vmatpush1.msra.mxu0 0.0
  %494 = vmatprep.subr.mxu0 0.0
  %495 = vmatpush1.msra.mxu0 0.0
  %496 = vmatprep.subr.mxu0 0.0
  %497 = vmatpush1.msra.mxu0 0.0
  %498 = vmatprep.subr.mxu0 0.0
  %499 = vmatpush1.msra.mxu0 0.0
  %500 = vmatprep.mubr.f32.mxu0 0.0
  %501 = vmatmul.mubr.f32.gmra.mrb[0].mxu0 %v422
  %v502 = vpop.f32.mrb[0].mxu0
  %v503 = vadd.f32 0.0, %v502
  %v504 = vpop.f32.mrb[0].mxu0
  %505 = vmatprep.mubr.f32.mxu0 0.0
  %506 = vmatmul.mubr.f32.gmra.mrb[0].mxu0 %v425
  %v507 = vpop.f32.mrb[0].mxu0
  %v508 = vadd.f32 0.0, %v507
  %v509 = vpop.f32.mrb[0].mxu0
  %510 = vmatprep.mubr.f32.mxu0 0.0
  %511 = vmatmul.mubr.f32.gmra.mrb[0].mxu0 %v428
  %v512 = vpop.f32.mrb[0].mxu0
  %v513 = vadd.f32 0.0, %v512
  %v514 = vpop.f32.mrb[0].mxu0
  %515 = vmatprep.mubr.f32.mxu0 0.0
  %516 = vmatmul.mubr.f32.gmra.mrb[0].mxu0 %v431
  %v517 = vpop.f32.mrb[0].mxu0
  %v518 = vadd.f32 0.0, %v517
  %v519 = vpop.f32.mrb[0].mxu0
  %520 = vdwg.mxu0
  %521 = vrot.lane.b32.xlu0 %v232, 120
  %v522 = vpop.permute.xlu0 %521
  %523 = vrot.lane.b32.xlu0 %v237, 120
  %v524 = vpop.permute.xlu0 %523
  %525 = vrot.lane.b32.xlu0 %v242, 120
  %v526 = vpop.permute.xlu0 %525
  %527 = vrot.lane.b32.xlu0 %v247, 120
  %v528 = vpop.permute.xlu0 %527
  %529 = vrot.lane.b32.xlu0 %v232, 88
  %v530 = vpop.permute.xlu0 %529
  %531 = vrot.lane.b32.xlu0 %v237, 88
  %v532 = vpop.permute.xlu0 %531
  %533 = vrot.lane.b32.xlu0 %v242, 88
  %v534 = vpop.permute.xlu0 %533
  %535 = vrot.lane.b32.xlu0 %v247, 88
  %v536 = vpop.permute.xlu0 %535
  %v537 = vsel %vm262, %v522, 0
  %v539 = vsel %vm262, %v524, 0
  %v541 = vsel %vm262, %v526, 0
  %v543 = vsel %vm262, %v528, 0
  %v545 = vsel %vm262, %v530, 0
  %v547 = vsel %vm262, %v532, 0
  %v549 = vsel %vm262, %v534, 0
  %v551 = vsel %vm262, %v536, 0
  %553 = vmatprep.subr.mxu0 0.0
  %554 = vmatpush1.xpose.msra.mxu0 %v545
  %555 = vmatprep.subr.mxu0 0.0
  %556 = vmatpush1.xpose.msra.mxu0 %v547
  %557 = vmatprep.subr.mxu0 0.0
  %558 = vmatpush1.xpose.msra.mxu0 %v549
  %559 = vmatprep.subr.mxu0 0.0
  %560 = vmatpush1.xpose.msra.mxu0 %v551
  %561 = vmatprep.subr.mxu0 0.0
  %562 = vmatpush1.xpose.msra.mxu0 0.0
  %563 = vmatprep.subr.mxu0 0.0
  %564 = vmatpush1.xpose.msra.mxu0 0.0
  %565 = vmatprep.subr.mxu0 0.0
  %566 = vmatpush1.xpose.msra.mxu0 0.0
  %567 = vmatprep.subr.mxu0 0.0
  %568 = vmatpush1.xpose.msra.mxu0 0.0
  %569 = vmatprep.subr.mxu0 0.0
  %570 = vmatpush1.xpose.msra.mxu0 0.0
  %571 = vmatprep.subr.mxu0 0.0
  %572 = vmatpush1.xpose.msra.mxu0 0.0
  %573 = vmatprep.subr.mxu0 0.0
  %574 = vmatpush1.xpose.msra.mxu0 0.0
  %575 = vmatprep.subr.mxu0 0.0
  %576 = vmatpush1.xpose.msra.mxu0 0.0
  %577 = vmatprep.subr.mxu0 0.0
  %578 = vmatpush1.xpose.msra.mxu0 0.0
  %579 = vmatprep.subr.mxu0 0.0
  %580 = vmatpush1.xpose.msra.mxu0 0.0
  %581 = vmatprep.subr.mxu0 0.0
  %582 = vmatpush1.xpose.msra.mxu0 0.0
  %583 = vmatprep.subr.mxu0 0.0
  %584 = vmatpush1.xpose.msra.mxu0 0.0
  %585 = vmatprep.subr.mxu0 0.0
  %586 = vmatpush1.xpose.msra.mxu0 0.0
  %587 = vmatprep.subr.mxu0 0.0
  %588 = vmatpush1.xpose.msra.mxu0 0.0
  %589 = vmatprep.subr.mxu0 0.0
  %590 = vmatpush1.xpose.msra.mxu0 0.0
  %591 = vmatprep.subr.mxu0 0.0
  %592 = vmatpush1.xpose.msra.mxu0 0.0
  %593 = vmatprep.subr.mxu0 0.0
  %594 = vmatpush1.xpose.msra.mxu0 0.0
  %595 = vmatprep.subr.mxu0 0.0
  %596 = vmatpush1.xpose.msra.mxu0 0.0
  %597 = vmatprep.subr.mxu0 0.0
  %598 = vmatpush1.xpose.msra.mxu0 0.0
  %599 = vmatprep.subr.mxu0 0.0
  %600 = vmatpush1.xpose.msra.mxu0 0.0
  %601 = vmatprep.subr.mxu0 0.0
  %602 = vmatpush1.xpose.msra.mxu0 0.0
  %603 = vmatprep.subr.mxu0 0.0
  %604 = vmatpush1.xpose.msra.mxu0 0.0
  %605 = vmatprep.subr.mxu0 0.0
  %606 = vmatpush1.xpose.msra.mxu0 0.0
  %607 = vmatprep.subr.mxu0 0.0
  %608 = vmatpush1.xpose.msra.mxu0 0.0
  %609 = vmatprep.subr.mxu0 0.0
  %610 = vmatpush1.xpose.msra.mxu0 0.0
  %611 = vmatprep.subr.mxu0 0.0
  %612 = vmatpush1.xpose.msra.mxu0 0.0
  %613 = vmatprep.subr.mxu0 0.0
  %614 = vmatpush1.xpose.msra.mxu0 0.0
  %615 = vmatprep.subr.mxu0 0.0
  %616 = vmatpush1.xpose.msra.mxu0 0.0
  %617 = vmatprep.mubr.f32.mxu0 0.0
  %618 = vmatmul.mubr.f32.gmra.mrb[0].mxu0 %v537
  %v619 = vpop.f32.mrb[0].mxu0
  %v620 = vadd.f32 %v140, %v619
  %v621 = vpop.f32.mrb[0].mxu0
  %622 = vmatprep.mubr.f32.mxu0 0.0
  %623 = vmatmul.mubr.f32.gmra.mrb[0].mxu0 %v539
  %v624 = vpop.f32.mrb[0].mxu0
  %v625 = vadd.f32 %v141, %v624
  %v626 = vpop.f32.mrb[0].mxu0
  %627 = vmatprep.mubr.f32.mxu0 0.0
  %628 = vmatmul.mubr.f32.gmra.mrb[0].mxu0 %v541
  %v629 = vpop.f32.mrb[0].mxu0
  %v630 = vadd.f32 %v142, %v629
  %v631 = vpop.f32.mrb[0].mxu0
  %632 = vmatprep.mubr.f32.mxu0 0.0
  %633 = vmatmul.mubr.f32.gmra.mrb[0].mxu0 %v543
  %v634 = vpop.f32.mrb[0].mxu0
  %v635 = vadd.f32 %v143, %v634
  %v636 = vpop.f32.mrb[0].mxu0
  %637 = vdwg.mxu0
  %v638 = vsel %vm364, %v620, -inf
  %639 = vmax.xlane.f32.xlu0 %v638
  %v640 = vpop.xlane.xlu0 %639
  %v641 = vsel %vm364, %v625, -inf
  %642 = vmax.xlane.f32.xlu0 %v641
  %v643 = vpop.xlane.xlu0 %642
  %v644 = vsel %vm364, %v630, -inf
  %645 = vmax.xlane.f32.xlu0 %v644
  %v646 = vpop.xlane.xlu0 %645
  %v647 = vsel %vm374, %v635, -inf
  %648 = vmax.xlane.f32.xlu0 %v647
  %v649 = vpop.xlane.xlu0 %648
  %v650 = vsub.f32 %v620, %v640
  %v651 = vsub.f32 %v625, %v643
  %v652 = vsub.f32 %v630, %v646
  %v653 = vsub.f32 %v635, %v649
  %v654 = vmul.f32 %v650, 1.442695
  %v655 = vpow.pop %v654
  %v656 = vmul.f32 %v651, 1.442695
  %v657 = vpow.pop %v656
  %v658 = vmul.f32 %v652, 1.442695
  %v659 = vpow.pop %v658
  %v660 = vmul.f32 %v653, 1.442695
  %v661 = vpow.pop %v660
  %v662 = vsel %vm364, %v655, 0.0
  %663 = vadd.xlane.f32.xlu0 %v662
  %v664 = vpop.xlane.xlu0 %663
  %v665 = vsel %vm364, %v657, 0.0
  %666 = vadd.xlane.f32.xlu0 %v665
  %v667 = vpop.xlane.xlu0 %666
  %v668 = vsel %vm364, %v659, 0.0
  %669 = vadd.xlane.f32.xlu0 %v668
  %v670 = vpop.xlane.xlu0 %669
  %v671 = vsel %vm374, %v661, 0.0
  %672 = vadd.xlane.f32.xlu0 %v671
  %v673 = vpop.xlane.xlu0 %672
  %v674 = vrcp.pop %v664
  %v675 = vrcp.pop %v667
  %v676 = vrcp.pop %v670
  %v677 = vrcp.pop %v673
  %v678 = vmul.f32 %v655, %v674
  %v679 = vmul.f32 %v657, %v675
  %v680 = vmul.f32 %v659, %v676
  %v681 = vmul.f32 %v661, %v677
  %682 = vrot.lane.b32.xlu0 %v232, 56
  %v683 = vpop.permute.xlu0 %682
  %684 = vrot.lane.b32.xlu0 %v237, 56
  %v685 = vpop.permute.xlu0 %684
  %686 = vrot.lane.b32.xlu0 %v242, 56
  %v687 = vpop.permute.xlu0 %686
  %688 = vrot.lane.b32.xlu0 %v247, 56
  %v689 = vpop.permute.xlu0 %688
  %v694 = vsel %vm364, %v678, 0
  %v697 = vsel %vm364, %v679, 0
  %v700 = vsel %vm364, %v680, 0
  %v703 = vsel %vm364, %v681, 0
  %v705 = vsel %vm433, %v689, 0
  %707 = vmatprep.subr.mxu0 0.0
  %708 = vmatpush1.msra.mxu0 %v683
  %709 = vmatprep.subr.mxu0 0.0
  %710 = vmatpush1.msra.mxu0 %v685
  %711 = vmatprep.subr.mxu0 0.0
  %712 = vmatpush1.msra.mxu0 %v687
  %713 = vmatprep.subr.mxu0 0.0
  %714 = vmatpush1.msra.mxu0 %v705
  %715 = vmatprep.subr.mxu0 0.0
  %716 = vmatpush1.msra.mxu0 0.0
  %717 = vmatprep.subr.mxu0 0.0
  %718 = vmatpush1.msra.mxu0 0.0
  %719 = vmatprep.subr.mxu0 0.0
  %720 = vmatpush1.msra.mxu0 0.0
  %721 = vmatprep.subr.mxu0 0.0
  %722 = vmatpush1.msra.mxu0 0.0
  %723 = vmatprep.subr.mxu0 0.0
  %724 = vmatpush1.msra.mxu0 0.0
  %725 = vmatprep.subr.mxu0 0.0
  %726 = vmatpush1.msra.mxu0 0.0
  %727 = vmatprep.subr.mxu0 0.0
  %728 = vmatpush1.msra.mxu0 0.0
  %729 = vmatprep.subr.mxu0 0.0
  %730 = vmatpush1.msra.mxu0 0.0
  %731 = vmatprep.subr.mxu0 0.0
  %732 = vmatpush1.msra.mxu0 0.0
  %733 = vmatprep.subr.mxu0 0.0
  %734 = vmatpush1.msra.mxu0 0.0
  %735 = vmatprep.subr.mxu0 0.0
  %736 = vmatpush1.msra.mxu0 0.0
  %737 = vmatprep.subr.mxu0 0.0
  %738 = vmatpush1.msra.mxu0 0.0
  %739 = vmatprep.subr.mxu0 0.0
  %740 = vmatpush1.msra.mxu0 0.0
  %741 = vmatprep.subr.mxu0 0.0
  %742 = vmatpush1.msra.mxu0 0.0
  %743 = vmatprep.subr.mxu0 0.0
  %744 = vmatpush1.msra.mxu0 0.0
  %745 = vmatprep.subr.mxu0 0.0
  %746 = vmatpush1.msra.mxu0 0.0
  %747 = vmatprep.subr.mxu0 0.0
  %748 = vmatpush1.msra.mxu0 0.0
  %749 = vmatprep.subr.mxu0 0.0
  %750 = vmatpush1.msra.mxu0 0.0
  %751 = vmatprep.subr.mxu0 0.0
  %752 = vmatpush1.msra.mxu0 0.0
  %753 = vmatprep.subr.mxu0 0.0
  %754 = vmatpush1.msra.mxu0 0.0
  %755 = vmatprep.subr.mxu0 0.0
  %756 = vmatpush1.msra.mxu0 0.0
  %757 = vmatprep.subr.mxu0 0.0
  %758 = vmatpush1.msra.mxu0 0.0
  %759 = vmatprep.subr.mxu0 0.0
  %760 = vmatpush1.msra.mxu0 0.0
  %761 = vmatprep.subr.mxu0 0.0
  %762 = vmatpush1.msra.mxu0 0.0
  %763 = vmatprep.subr.mxu0 0.0
  %764 = vmatpush1.msra.mxu0 0.0
  %765 = vmatprep.subr.mxu0 0.0
  %766 = vmatpush1.msra.mxu0 0.0
  %767 = vmatprep.subr.mxu0 0.0
  %768 = vmatpush1.msra.mxu0 0.0
  %769 = vmatprep.subr.mxu0 0.0
  %770 = vmatpush1.msra.mxu0 0.0
  %771 = vmatprep.mubr.f32.mxu0 0.0
  %772 = vmatmul.mubr.f32.gmra.mrb[0].mxu0 %v694
  %v773 = vpop.f32.mrb[0].mxu0
  %v774 = vadd.f32 0.0, %v773
  %v775 = vpop.f32.mrb[0].mxu0
  %776 = vmatprep.mubr.f32.mxu0 0.0
  %777 = vmatmul.mubr.f32.gmra.mrb[0].mxu0 %v697
  %v778 = vpop.f32.mrb[0].mxu0
  %v779 = vadd.f32 0.0, %v778
  %v780 = vpop.f32.mrb[0].mxu0
  %781 = vmatprep.mubr.f32.mxu0 0.0
  %782 = vmatmul.mubr.f32.gmra.mrb[0].mxu0 %v700
  %v783 = vpop.f32.mrb[0].mxu0
  %v784 = vadd.f32 0.0, %v783
  %v785 = vpop.f32.mrb[0].mxu0
  %786 = vmatprep.mubr.f32.mxu0 0.0
  %787 = vmatmul.mubr.f32.gmra.mrb[0].mxu0 %v703
  %v788 = vpop.f32.mrb[0].mxu0
  %v789 = vadd.f32 0.0, %v788
  %v790 = vpop.f32.mrb[0].mxu0
  %791 = vdwg.mxu0
  %792 = vrot.lane.b32.xlu0 %v232, 112
  %v793 = vpop.permute.xlu0 %792
  %794 = vrot.lane.b32.xlu0 %v237, 112
  %v795 = vpop.permute.xlu0 %794
  %796 = vrot.lane.b32.xlu0 %v242, 112
  %v797 = vpop.permute.xlu0 %796
  %798 = vrot.lane.b32.xlu0 %v247, 112
  %v799 = vpop.permute.xlu0 %798
  %800 = vrot.lane.b32.xlu0 %v232, 80
  %v801 = vpop.permute.xlu0 %800
  %802 = vrot.lane.b32.xlu0 %v237, 80
  %v803 = vpop.permute.xlu0 %802
  %804 = vrot.lane.b32.xlu0 %v242, 80
  %v805 = vpop.permute.xlu0 %804
  %806 = vrot.lane.b32.xlu0 %v247, 80
  %v807 = vpop.permute.xlu0 %806
  %v808 = vsel %vm262, %v793, 0
  %v810 = vsel %vm262, %v795, 0
  %v812 = vsel %vm262, %v797, 0
  %v814 = vsel %vm262, %v799, 0
  %v816 = vsel %vm262, %v801, 0
  %v818 = vsel %vm262, %v803, 0
  %v820 = vsel %vm262, %v805, 0
  %v822 = vsel %vm262, %v807, 0
  %824 = vmatprep.subr.mxu0 0.0
  %825 = vmatpush1.xpose.msra.mxu0 %v816
  %826 = vmatprep.subr.mxu0 0.0
  %827 = vmatpush1.xpose.msra.mxu0 %v818
  %828 = vmatprep.subr.mxu0 0.0
  %829 = vmatpush1.xpose.msra.mxu0 %v820
  %830 = vmatprep.subr.mxu0 0.0
  %831 = vmatpush1.xpose.msra.mxu0 %v822
  %832 = vmatprep.subr.mxu0 0.0
  %833 = vmatpush1.xpose.msra.mxu0 0.0
  %834 = vmatprep.subr.mxu0 0.0
  %835 = vmatpush1.xpose.msra.mxu0 0.0
  %836 = vmatprep.subr.mxu0 0.0
  %837 = vmatpush1.xpose.msra.mxu0 0.0
  %838 = vmatprep.subr.mxu0 0.0
  %839 = vmatpush1.xpose.msra.mxu0 0.0
  %840 = vmatprep.subr.mxu0 0.0
  %841 = vmatpush1.xpose.msra.mxu0 0.0
  %842 = vmatprep.subr.mxu0 0.0
  %843 = vmatpush1.xpose.msra.mxu0 0.0
  %844 = vmatprep.subr.mxu0 0.0
  %845 = vmatpush1.xpose.msra.mxu0 0.0
  %846 = vmatprep.subr.mxu0 0.0
  %847 = vmatpush1.xpose.msra.mxu0 0.0
  %848 = vmatprep.subr.mxu0 0.0
  %849 = vmatpush1.xpose.msra.mxu0 0.0
  %850 = vmatprep.subr.mxu0 0.0
  %851 = vmatpush1.xpose.msra.mxu0 0.0
  %852 = vmatprep.subr.mxu0 0.0
  %853 = vmatpush1.xpose.msra.mxu0 0.0
  %854 = vmatprep.subr.mxu0 0.0
  %855 = vmatpush1.xpose.msra.mxu0 0.0
  %856 = vmatprep.subr.mxu0 0.0
  %857 = vmatpush1.xpose.msra.mxu0 0.0
  %858 = vmatprep.subr.mxu0 0.0
  %859 = vmatpush1.xpose.msra.mxu0 0.0
  %860 = vmatprep.subr.mxu0 0.0
  %861 = vmatpush1.xpose.msra.mxu0 0.0
  %862 = vmatprep.subr.mxu0 0.0
  %863 = vmatpush1.xpose.msra.mxu0 0.0
  %864 = vmatprep.subr.mxu0 0.0
  %865 = vmatpush1.xpose.msra.mxu0 0.0
  %866 = vmatprep.subr.mxu0 0.0
  %867 = vmatpush1.xpose.msra.mxu0 0.0
  %868 = vmatprep.subr.mxu0 0.0
  %869 = vmatpush1.xpose.msra.mxu0 0.0
  %870 = vmatprep.subr.mxu0 0.0
  %871 = vmatpush1.xpose.msra.mxu0 0.0
  %872 = vmatprep.subr.mxu0 0.0
  %873 = vmatpush1.xpose.msra.mxu0 0.0
  %874 = vmatprep.subr.mxu0 0.0
  %875 = vmatpush1.xpose.msra.mxu0 0.0
  %876 = vmatprep.subr.mxu0 0.0
  %877 = vmatpush1.xpose.msra.mxu0 0.0
  %878 = vmatprep.subr.mxu0 0.0
  %879 = vmatpush1.xpose.msra.mxu0 0.0
  %880 = vmatprep.subr.mxu0 0.0
  %881 = vmatpush1.xpose.msra.mxu0 0.0
  %882 = vmatprep.subr.mxu0 0.0
  %883 = vmatpush1.xpose.msra.mxu0 0.0
  %884 = vmatprep.subr.mxu0 0.0
  %885 = vmatpush1.xpose.msra.mxu0 0.0
  %886 = vmatprep.subr.mxu0 0.0
  %887 = vmatpush1.xpose.msra.mxu0 0.0
  %888 = vmatprep.mubr.f32.mxu0 0.0
  %889 = vmatmul.mubr.f32.gmra.mrb[0].mxu0 %v808
  %v890 = vpop.f32.mrb[0].mxu0
  %v891 = vadd.f32 %v140, %v890
  %v892 = vpop.f32.mrb[0].mxu0
  %893 = vmatprep.mubr.f32.mxu0 0.0
  %894 = vmatmul.mubr.f32.gmra.mrb[0].mxu0 %v810
  %v895 = vpop.f32.mrb[0].mxu0
  %v896 = vadd.f32 %v141, %v895
  %v897 = vpop.f32.mrb[0].mxu0
  %898 = vmatprep.mubr.f32.mxu0 0.0
  %899 = vmatmul.mubr.f32.gmra.mrb[0].mxu0 %v812
  %v900 = vpop.f32.mrb[0].mxu0
  %v901 = vadd.f32 %v142, %v900
  %v902 = vpop.f32.mrb[0].mxu0
  %903 = vmatprep.mubr.f32.mxu0 0.0
  %904 = vmatmul.mubr.f32.gmra.mrb[0].mxu0 %v814
  %v905 = vpop.f32.mrb[0].mxu0
  %v906 = vadd.f32 %v143, %v905
  %v907 = vpop.f32.mrb[0].mxu0
  %908 = vdwg.mxu0
  %v909 = vsel %vm364, %v891, -inf
  %910 = vmax.xlane.f32.xlu0 %v909
  %v911 = vpop.xlane.xlu0 %910
  %v912 = vsel %vm364, %v896, -inf
  %913 = vmax.xlane.f32.xlu0 %v912
  %v914 = vpop.xlane.xlu0 %913
  %v915 = vsel %vm364, %v901, -inf
  %916 = vmax.xlane.f32.xlu0 %v915
  %v917 = vpop.xlane.xlu0 %916
  %v918 = vsel %vm374, %v906, -inf
  %919 = vmax.xlane.f32.xlu0 %v918
  %v920 = vpop.xlane.xlu0 %919
  %v921 = vsub.f32 %v891, %v911
  %v922 = vsub.f32 %v896, %v914
  %v923 = vsub.f32 %v901, %v917
  %v924 = vsub.f32 %v906, %v920
  %v925 = vmul.f32 %v921, 1.442695
  %v926 = vpow.pop %v925
  %v927 = vmul.f32 %v922, 1.442695
  %v928 = vpow.pop %v927
  %v929 = vmul.f32 %v923, 1.442695
  %v930 = vpow.pop %v929
  %v931 = vmul.f32 %v924, 1.442695
  %v932 = vpow.pop %v931
  %v933 = vsel %vm364, %v926, 0.0
  %934 = vadd.xlane.f32.xlu0 %v933
  %v935 = vpop.xlane.xlu0 %934
  %v936 = vsel %vm364, %v928, 0.0
  %937 = vadd.xlane.f32.xlu0 %v936
  %v938 = vpop.xlane.xlu0 %937
  %v939 = vsel %vm364, %v930, 0.0
  %940 = vadd.xlane.f32.xlu0 %v939
  %v941 = vpop.xlane.xlu0 %940
  %v942 = vsel %vm374, %v932, 0.0
  %943 = vadd.xlane.f32.xlu0 %v942
  %v944 = vpop.xlane.xlu0 %943
  %v945 = vrcp.pop %v935
  %v946 = vrcp.pop %v938
  %v947 = vrcp.pop %v941
  %v948 = vrcp.pop %v944
  %v949 = vmul.f32 %v926, %v945
  %v950 = vmul.f32 %v928, %v946
  %v951 = vmul.f32 %v930, %v947
  %v952 = vmul.f32 %v932, %v948
  %953 = vrot.lane.b32.xlu0 %v232, 48
  %v954 = vpop.permute.xlu0 %953
  %955 = vrot.lane.b32.xlu0 %v237, 48
  %v956 = vpop.permute.xlu0 %955
  %957 = vrot.lane.b32.xlu0 %v242, 48
  %v958 = vpop.permute.xlu0 %957
  %959 = vrot.lane.b32.xlu0 %v247, 48
  %v960 = vpop.permute.xlu0 %959
  %v965 = vsel %vm364, %v949, 0
  %v968 = vsel %vm364, %v950, 0
  %v971 = vsel %vm364, %v951, 0
  %v974 = vsel %vm364, %v952, 0
  %v976 = vsel %vm433, %v960, 0
  %978 = vmatprep.subr.mxu0 0.0
  %979 = vmatpush1.msra.mxu0 %v954
  %980 = vmatprep.subr.mxu0 0.0
  %981 = vmatpush1.msra.mxu0 %v956
  %982 = vmatprep.subr.mxu0 0.0
  %983 = vmatpush1.msra.mxu0 %v958
  %984 = vmatprep.subr.mxu0 0.0
  %985 = vmatpush1.msra.mxu0 %v976
  %986 = vmatprep.subr.mxu0 0.0
  %987 = vmatpush1.msra.mxu0 0.0
  %988 = vmatprep.subr.mxu0 0.0
  %989 = vmatpush1.msra.mxu0 0.0
  %990 = vmatprep.subr.mxu0 0.0
  %991 = vmatpush1.msra.mxu0 0.0
  %992 = vmatprep.subr.mxu0 0.0
  %993 = vmatpush1.msra.mxu0 0.0
  %994 = vmatprep.subr.mxu0 0.0
  %995 = vmatpush1.msra.mxu0 0.0
  %996 = vmatprep.subr.mxu0 0.0
  %997 = vmatpush1.msra.mxu0 0.0
  %998 = vmatprep.subr.mxu0 0.0
  %999 = vmatpush1.msra.mxu0 0.0
  %1000 = vmatprep.subr.mxu0 0.0
  %1001 = vmatpush1.msra.mxu0 0.0
  %1002 = vmatprep.subr.mxu0 0.0
  %1003 = vmatpush1.msra.mxu0 0.0
  %1004 = vmatprep.subr.mxu0 0.0
  %1005 = vmatpush1.msra.mxu0 0.0
  %1006 = vmatprep.subr.mxu0 0.0
  %1007 = vmatpush1.msra.mxu0 0.0
  %1008 = vmatprep.subr.mxu0 0.0
  %1009 = vmatpush1.msra.mxu0 0.0
  %1010 = vmatprep.subr.mxu0 0.0
  %1011 = vmatpush1.msra.mxu0 0.0
  %1012 = vmatprep.subr.mxu0 0.0
  %1013 = vmatpush1.msra.mxu0 0.0
  %1014 = vmatprep.subr.mxu0 0.0
  %1015 = vmatpush1.msra.mxu0 0.0
  %1016 = vmatprep.subr.mxu0 0.0
  %1017 = vmatpush1.msra.mxu0 0.0
  %1018 = vmatprep.subr.mxu0 0.0
  %1019 = vmatpush1.msra.mxu0 0.0
  %1020 = vmatprep.subr.mxu0 0.0
  %1021 = vmatpush1.msra.mxu0 0.0
  %1022 = vmatprep.subr.mxu0 0.0
  %1023 = vmatpush1.msra.mxu0 0.0
  %1024 = vmatprep.subr.mxu0 0.0
  %1025 = vmatpush1.msra.mxu0 0.0
  %1026 = vmatprep.subr.mxu0 0.0
  %1027 = vmatpush1.msra.mxu0 0.0
  %1028 = vmatprep.subr.mxu0 0.0
  %1029 = vmatpush1.msra.mxu0 0.0
  %1030 = vmatprep.subr.mxu0 0.0
  %1031 = vmatpush1.msra.mxu0 0.0
  %1032 = vmatprep.subr.mxu0 0.0
  %1033 = vmatpush1.msra.mxu0 0.0
  %1034 = vmatprep.subr.mxu0 0.0
  %1035 = vmatpush1.msra.mxu0 0.0
  %1036 = vmatprep.subr.mxu0 0.0
  %1037 = vmatpush1.msra.mxu0 0.0
  %1038 = vmatprep.subr.mxu0 0.0
  %1039 = vmatpush1.msra.mxu0 0.0
  %1040 = vmatprep.subr.mxu0 0.0
  %1041 = vmatpush1.msra.mxu0 0.0
  %1042 = vmatprep.mubr.f32.mxu0 0.0
  %1043 = vmatmul.mubr.f32.gmra.mrb[0].mxu0 %v965
  %v1044 = vpop.f32.mrb[0].mxu0
  %v1045 = vadd.f32 0.0, %v1044
  %v1046 = vpop.f32.mrb[0].mxu0
  %1047 = vmatprep.mubr.f32.mxu0 0.0
  %1048 = vmatmul.mubr.f32.gmra.mrb[0].mxu0 %v968
  %v1049 = vpop.f32.mrb[0].mxu0
  %v1050 = vadd.f32 0.0, %v1049
  %v1051 = vpop.f32.mrb[0].mxu0
  %1052 = vmatprep.mubr.f32.mxu0 0.0
  %1053 = vmatmul.mubr.f32.gmra.mrb[0].mxu0 %v971
  %v1054 = vpop.f32.mrb[0].mxu0
  %v1055 = vadd.f32 0.0, %v1054
  %v1056 = vpop.f32.mrb[0].mxu0
  %1057 = vmatprep.mubr.f32.mxu0 0.0
  %1058 = vmatmul.mubr.f32.gmra.mrb[0].mxu0 %v974
  %v1059 = vpop.f32.mrb[0].mxu0
  %v1060 = vadd.f32 0.0, %v1059
  %v1061 = vpop.f32.mrb[0].mxu0
  %1062 = vdwg.mxu0
  %1063 = vrot.lane.b32.xlu0 %v232, 104
  %v1064 = vpop.permute.xlu0 %1063
  %1065 = vrot.lane.b32.xlu0 %v237, 104
  %v1066 = vpop.permute.xlu0 %1065
  %1067 = vrot.lane.b32.xlu0 %v242, 104
  %v1068 = vpop.permute.xlu0 %1067
  %1069 = vrot.lane.b32.xlu0 %v247, 104
  %v1070 = vpop.permute.xlu0 %1069
  %1071 = vrot.lane.b32.xlu0 %v232, 72
  %v1072 = vpop.permute.xlu0 %1071
  %1073 = vrot.lane.b32.xlu0 %v237, 72
  %v1074 = vpop.permute.xlu0 %1073
  %1075 = vrot.lane.b32.xlu0 %v242, 72
  %v1076 = vpop.permute.xlu0 %1075
  %1077 = vrot.lane.b32.xlu0 %v247, 72
  %v1078 = vpop.permute.xlu0 %1077
  %v1079 = vsel %vm262, %v1064, 0
  %v1081 = vsel %vm262, %v1066, 0
  %v1083 = vsel %vm262, %v1068, 0
  %v1085 = vsel %vm262, %v1070, 0
  %v1087 = vsel %vm262, %v1072, 0
  %v1089 = vsel %vm262, %v1074, 0
  %v1091 = vsel %vm262, %v1076, 0
  %v1093 = vsel %vm262, %v1078, 0
  %1095 = vmatprep.subr.mxu0 0.0
  %1096 = vmatpush1.xpose.msra.mxu0 %v1087
  %1097 = vmatprep.subr.mxu0 0.0
  %1098 = vmatpush1.xpose.msra.mxu0 %v1089
  %1099 = vmatprep.subr.mxu0 0.0
  %1100 = vmatpush1.xpose.msra.mxu0 %v1091
  %1101 = vmatprep.subr.mxu0 0.0
  %1102 = vmatpush1.xpose.msra.mxu0 %v1093
  %1103 = vmatprep.subr.mxu0 0.0
  %1104 = vmatpush1.xpose.msra.mxu0 0.0
  %1105 = vmatprep.subr.mxu0 0.0
  %1106 = vmatpush1.xpose.msra.mxu0 0.0
  %1107 = vmatprep.subr.mxu0 0.0
  %1108 = vmatpush1.xpose.msra.mxu0 0.0
  %1109 = vmatprep.subr.mxu0 0.0
  %1110 = vmatpush1.xpose.msra.mxu0 0.0
  %1111 = vmatprep.subr.mxu0 0.0
  %1112 = vmatpush1.xpose.msra.mxu0 0.0
  %1113 = vmatprep.subr.mxu0 0.0
  %1114 = vmatpush1.xpose.msra.mxu0 0.0
  %1115 = vmatprep.subr.mxu0 0.0
  %1116 = vmatpush1.xpose.msra.mxu0 0.0
  %1117 = vmatprep.subr.mxu0 0.0
  %1118 = vmatpush1.xpose.msra.mxu0 0.0
  %1119 = vmatprep.subr.mxu0 0.0
  %1120 = vmatpush1.xpose.msra.mxu0 0.0
  %1121 = vmatprep.subr.mxu0 0.0
  %1122 = vmatpush1.xpose.msra.mxu0 0.0
  %1123 = vmatprep.subr.mxu0 0.0
  %1124 = vmatpush1.xpose.msra.mxu0 0.0
  %1125 = vmatprep.subr.mxu0 0.0
  %1126 = vmatpush1.xpose.msra.mxu0 0.0
  %1127 = vmatprep.subr.mxu0 0.0
  %1128 = vmatpush1.xpose.msra.mxu0 0.0
  %1129 = vmatprep.subr.mxu0 0.0
  %1130 = vmatpush1.xpose.msra.mxu0 0.0
  %1131 = vmatprep.subr.mxu0 0.0
  %1132 = vmatpush1.xpose.msra.mxu0 0.0
  %1133 = vmatprep.subr.mxu0 0.0
  %1134 = vmatpush1.xpose.msra.mxu0 0.0
  %1135 = vmatprep.subr.mxu0 0.0
  %1136 = vmatpush1.xpose.msra.mxu0 0.0
  %1137 = vmatprep.subr.mxu0 0.0
  %1138 = vmatpush1.xpose.msra.mxu0 0.0
  %1139 = vmatprep.subr.mxu0 0.0
  %1140 = vmatpush1.xpose.msra.mxu0 0.0
  %1141 = vmatprep.subr.mxu0 0.0
  %1142 = vmatpush1.xpose.msra.mxu0 0.0
  %1143 = vmatprep.subr.mxu0 0.0
  %1144 = vmatpush1.xpose.msra.mxu0 0.0
  %1145 = vmatprep.subr.mxu0 0.0
  %1146 = vmatpush1.xpose.msra.mxu0 0.0
  %1147 = vmatprep.subr.mxu0 0.0
  %1148 = vmatpush1.xpose.msra.mxu0 0.0
  %1149 = vmatprep.subr.mxu0 0.0
  %1150 = vmatpush1.xpose.msra.mxu0 0.0
  %1151 = vmatprep.subr.mxu0 0.0
  %1152 = vmatpush1.xpose.msra.mxu0 0.0
  %1153 = vmatprep.subr.mxu0 0.0
  %1154 = vmatpush1.xpose.msra.mxu0 0.0
  %1155 = vmatprep.subr.mxu0 0.0
  %1156 = vmatpush1.xpose.msra.mxu0 0.0
  %1157 = vmatprep.subr.mxu0 0.0
  %1158 = vmatpush1.xpose.msra.mxu0 0.0
  %1159 = vmatprep.mubr.f32.mxu0 0.0
  %1160 = vmatmul.mubr.f32.gmra.mrb[0].mxu0 %v1079
  %v1161 = vpop.f32.mrb[0].mxu0
  %v1162 = vadd.f32 %v140, %v1161
  %v1163 = vpop.f32.mrb[0].mxu0
  %1164 = vmatprep.mubr.f32.mxu0 0.0
  %1165 = vmatmul.mubr.f32.gmra.mrb[0].mxu0 %v1081
  %v1166 = vpop.f32.mrb[0].mxu0
  %v1167 = vadd.f32 %v141, %v1166
  %v1168 = vpop.f32.mrb[0].mxu0
  %1169 = vmatprep.mubr.f32.mxu0 0.0
  %1170 = vmatmul.mubr.f32.gmra.mrb[0].mxu0 %v1083
  %v1171 = vpop.f32.mrb[0].mxu0
  %v1172 = vadd.f32 %v142, %v1171
  %v1173 = vpop.f32.mrb[0].mxu0
  %1174 = vmatprep.mubr.f32.mxu0 0.0
  %1175 = vmatmul.mubr.f32.gmra.mrb[0].mxu0 %v1085
  %v1176 = vpop.f32.mrb[0].mxu0
  %v1177 = vadd.f32 %v143, %v1176
  %v1178 = vpop.f32.mrb[0].mxu0
  %1179 = vdwg.mxu0
  %v1180 = vsel %vm364, %v1162, -inf
  %1181 = vmax.xlane.f32.xlu0 %v1180
  %v1182 = vpop.xlane.xlu0 %1181
  %v1183 = vsel %vm364, %v1167, -inf
  %1184 = vmax.xlane.f32.xlu0 %v1183
  %v1185 = vpop.xlane.xlu0 %1184
  %v1186 = vsel %vm364, %v1172, -inf
  %1187 = vmax.xlane.f32.xlu0 %v1186
  %v1188 = vpop.xlane.xlu0 %1187
  %v1189 = vsel %vm374, %v1177, -inf
  %1190 = vmax.xlane.f32.xlu0 %v1189
  %v1191 = vpop.xlane.xlu0 %1190
  %v1192 = vsub.f32 %v1162, %v1182
  %v1193 = vsub.f32 %v1167, %v1185
  %v1194 = vsub.f32 %v1172, %v1188
  %v1195 = vsub.f32 %v1177, %v1191
  %v1196 = vmul.f32 %v1192, 1.442695
  %v1197 = vpow.pop %v1196
  %v1198 = vmul.f32 %v1193, 1.442695
  %v1199 = vpow.pop %v1198
  %v1200 = vmul.f32 %v1194, 1.442695
  %v1201 = vpow.pop %v1200
  %v1202 = vmul.f32 %v1195, 1.442695
  %v1203 = vpow.pop %v1202
  %v1204 = vsel %vm364, %v1197, 0.0
  %1205 = vadd.xlane.f32.xlu0 %v1204
  %v1206 = vpop.xlane.xlu0 %1205
  %v1207 = vsel %vm364, %v1199, 0.0
  %1208 = vadd.xlane.f32.xlu0 %v1207
  %v1209 = vpop.xlane.xlu0 %1208
  %v1210 = vsel %vm364, %v1201, 0.0
  %1211 = vadd.xlane.f32.xlu0 %v1210
  %v1212 = vpop.xlane.xlu0 %1211
  %v1213 = vsel %vm374, %v1203, 0.0
  %1214 = vadd.xlane.f32.xlu0 %v1213
  %v1215 = vpop.xlane.xlu0 %1214
  %v1216 = vrcp.pop %v1206
  %v1217 = vrcp.pop %v1209
  %v1218 = vrcp.pop %v1212
  %v1219 = vrcp.pop %v1215
  %v1220 = vmul.f32 %v1197, %v1216
  %v1221 = vmul.f32 %v1199, %v1217
  %v1222 = vmul.f32 %v1201, %v1218
  %v1223 = vmul.f32 %v1203, %v1219
  %1224 = vrot.lane.b32.xlu0 %v232, 40
  %v1225 = vpop.permute.xlu0 %1224
  %1226 = vrot.lane.b32.xlu0 %v237, 40
  %v1227 = vpop.permute.xlu0 %1226
  %1228 = vrot.lane.b32.xlu0 %v242, 40
  %v1229 = vpop.permute.xlu0 %1228
  %1230 = vrot.lane.b32.xlu0 %v247, 40
  %v1231 = vpop.permute.xlu0 %1230
  %v1236 = vsel %vm364, %v1220, 0
  %v1239 = vsel %vm364, %v1221, 0
  %v1242 = vsel %vm364, %v1222, 0
  %v1245 = vsel %vm364, %v1223, 0
  %v1247 = vsel %vm433, %v1231, 0
  %1249 = vmatprep.subr.mxu0 0.0
  %1250 = vmatpush1.msra.mxu0 %v1225
  %1251 = vmatprep.subr.mxu0 0.0
  %1252 = vmatpush1.msra.mxu0 %v1227
  %1253 = vmatprep.subr.mxu0 0.0
  %1254 = vmatpush1.msra.mxu0 %v1229
  %1255 = vmatprep.subr.mxu0 0.0
  %1256 = vmatpush1.msra.mxu0 %v1247
  %1257 = vmatprep.subr.mxu0 0.0
  %1258 = vmatpush1.msra.mxu0 0.0
  %1259 = vmatprep.subr.mxu0 0.0
  %1260 = vmatpush1.msra.mxu0 0.0
  %1261 = vmatprep.subr.mxu0 0.0
  %1262 = vmatpush1.msra.mxu0 0.0
  %1263 = vmatprep.subr.mxu0 0.0
  %1264 = vmatpush1.msra.mxu0 0.0
  %1265 = vmatprep.subr.mxu0 0.0
  %1266 = vmatpush1.msra.mxu0 0.0
  %1267 = vmatprep.subr.mxu0 0.0
  %1268 = vmatpush1.msra.mxu0 0.0
  %1269 = vmatprep.subr.mxu0 0.0
  %1270 = vmatpush1.msra.mxu0 0.0
  %1271 = vmatprep.subr.mxu0 0.0
  %1272 = vmatpush1.msra.mxu0 0.0
  %1273 = vmatprep.subr.mxu0 0.0
  %1274 = vmatpush1.msra.mxu0 0.0
  %1275 = vmatprep.subr.mxu0 0.0
  %1276 = vmatpush1.msra.mxu0 0.0
  %1277 = vmatprep.subr.mxu0 0.0
  %1278 = vmatpush1.msra.mxu0 0.0
  %1279 = vmatprep.subr.mxu0 0.0
  %1280 = vmatpush1.msra.mxu0 0.0
  %1281 = vmatprep.subr.mxu0 0.0
  %1282 = vmatpush1.msra.mxu0 0.0
  %1283 = vmatprep.subr.mxu0 0.0
  %1284 = vmatpush1.msra.mxu0 0.0
  %1285 = vmatprep.subr.mxu0 0.0
  %1286 = vmatpush1.msra.mxu0 0.0
  %1287 = vmatprep.subr.mxu0 0.0
  %1288 = vmatpush1.msra.mxu0 0.0
  %1289 = vmatprep.subr.mxu0 0.0
  %1290 = vmatpush1.msra.mxu0 0.0
  %1291 = vmatprep.subr.mxu0 0.0
  %1292 = vmatpush1.msra.mxu0 0.0
  %1293 = vmatprep.subr.mxu0 0.0
  %1294 = vmatpush1.msra.mxu0 0.0
  %1295 = vmatprep.subr.mxu0 0.0
  %1296 = vmatpush1.msra.mxu0 0.0
  %1297 = vmatprep.subr.mxu0 0.0
  %1298 = vmatpush1.msra.mxu0 0.0
  %1299 = vmatprep.subr.mxu0 0.0
  %1300 = vmatpush1.msra.mxu0 0.0
  %1301 = vmatprep.subr.mxu0 0.0
  %1302 = vmatpush1.msra.mxu0 0.0
  %1303 = vmatprep.subr.mxu0 0.0
  %1304 = vmatpush1.msra.mxu0 0.0
  %1305 = vmatprep.subr.mxu0 0.0
  %1306 = vmatpush1.msra.mxu0 0.0
  %1307 = vmatprep.subr.mxu0 0.0
  %1308 = vmatpush1.msra.mxu0 0.0
  %1309 = vmatprep.subr.mxu0 0.0
  %1310 = vmatpush1.msra.mxu0 0.0
  %1311 = vmatprep.subr.mxu0 0.0
  %1312 = vmatpush1.msra.mxu0 0.0
  %1313 = vmatprep.mubr.f32.mxu0 0.0
  %1314 = vmatmul.mubr.f32.gmra.mrb[0].mxu0 %v1236
  %v1315 = vpop.f32.mrb[0].mxu0
  %v1316 = vadd.f32 0.0, %v1315
  %v1317 = vpop.f32.mrb[0].mxu0
  %1318 = vmatprep.mubr.f32.mxu0 0.0
  %1319 = vmatmul.mubr.f32.gmra.mrb[0].mxu0 %v1239
  %v1320 = vpop.f32.mrb[0].mxu0
  %v1321 = vadd.f32 0.0, %v1320
  %v1322 = vpop.f32.mrb[0].mxu0
  %1323 = vmatprep.mubr.f32.mxu0 0.0
  %1324 = vmatmul.mubr.f32.gmra.mrb[0].mxu0 %v1242
  %v1325 = vpop.f32.mrb[0].mxu0
  %v1326 = vadd.f32 0.0, %v1325
  %v1327 = vpop.f32.mrb[0].mxu0
  %1328 = vmatprep.mubr.f32.mxu0 0.0
  %1329 = vmatmul.mubr.f32.gmra.mrb[0].mxu0 %v1245
  %v1330 = vpop.f32.mrb[0].mxu0
  %v1331 = vadd.f32 0.0, %v1330
  %v1332 = vpop.f32.mrb[0].mxu0
  %1333 = vdwg.mxu0
  %1338 = vrot.lane.b32.xlu0 %v774, 8
  %v1339 = vpop.permute.xlu0 %1338
  %1340 = vrot.lane.b32.xlu0 %v779, 8
  %v1341 = vpop.permute.xlu0 %1340
  %1342 = vrot.lane.b32.xlu0 %v784, 8
  %v1343 = vpop.permute.xlu0 %1342
  %1344 = vrot.lane.b32.xlu0 %v789, 8
  %v1345 = vpop.permute.xlu0 %1344
  %1354 = vrot.lane.b32.xlu0 %v1045, 16
  %v1355 = vpop.permute.xlu0 %1354
  %1356 = vrot.lane.b32.xlu0 %v1050, 16
  %v1357 = vpop.permute.xlu0 %1356
  %1358 = vrot.lane.b32.xlu0 %v1055, 16
  %v1359 = vpop.permute.xlu0 %1358
  %1360 = vrot.lane.b32.xlu0 %v1060, 16
  %v1361 = vpop.permute.xlu0 %1360
  %1370 = vrot.lane.b32.xlu0 %v1316, 24
  %v1371 = vpop.permute.xlu0 %1370
  %1372 = vrot.lane.b32.xlu0 %v1321, 24
  %v1373 = vpop.permute.xlu0 %1372
  %1374 = vrot.lane.b32.xlu0 %v1326, 24
  %v1375 = vpop.permute.xlu0 %1374
  %1376 = vrot.lane.b32.xlu0 %v1331, 24
  %v1377 = vpop.permute.xlu0 %1376
  %v1382 = vsel %vm262, %v503, %v1339
  %v1383 = vsel %vm262, %v508, %v1341
  %v1384 = vsel %vm262, %v513, %v1343
  %v1385 = vsel %vm262, %v518, %v1345
  %vm1386 = vcmask 130048
  %v1387 = vsel %vm1386, %v1382, %v1355
  %v1388 = vsel %vm1386, %v1383, %v1357
  %v1389 = vsel %vm1386, %v1384, %v1359
  %v1390 = vsel %vm1386, %v1385, %v1361
  %vm1391 = vcmask 195584
  %v1392 = vsel %vm1391, %v1387, %v1371
  %v1393 = vsel %vm1391, %v1388, %v1373
  %v1394 = vsel %vm1391, %v1389, %v1375
  %v1395 = vsel %vm1391, %v1390, %v1377
  %v1396 = vld [vmem:[%s1 + $0xa8] sm:$0xff]
  %v1397 = vld [vmem:[%s1 + $0xb0] sm:$0xff]
  %v1398 = vld [vmem:[%s1 + $0xb8] sm:$0xff]
  %v1399 = vld [vmem:[%s1 + $0xc0] sm:$0xff]
  %v1400 = vld [vmem:[%s1 + $0xc8] sm:$0x1]
  %v1401 = vlaneseq
  %v1402 = vshrl.u32 %v1401, 7
  %v1403 = vsub.s32 0, %v1402
  %v1404 = vrot.slane %v1400, %v1403
  %v1406 = vsel %vm30, %v1392, 0
  %v1409 = vsel %vm30, %v1393, 0
  %v1412 = vsel %vm30, %v1394, 0
  %v1415 = vsel %vm30, %v1395, 0
  %1417 = vmatprep.subr.mxu0 0.0
  %1418 = vmatpush1.msra.mxu0 %v1396
  %1419 = vmatprep.subr.mxu0 0.0
  %1420 = vmatpush1.msra.mxu0 %v1397
  %1421 = vmatprep.subr.mxu0 0.0
  %1422 = vmatpush1.msra.mxu0 %v1398
  %1423 = vmatprep.subr.mxu0 0.0
  %1424 = vmatpush1.msra.mxu0 %v1399
  %1425 = vmatprep.subr.mxu0 0.0
  %1426 = vmatpush1.msra.mxu0 0.0
  %1427 = vmatprep.subr.mxu0 0.0
  %1428 = vmatpush1.msra.mxu0 0.0
  %1429 = vmatprep.subr.mxu0 0.0
  %1430 = vmatpush1.msra.mxu0 0.0
  %1431 = vmatprep.subr.mxu0 0.0
  %1432 = vmatpush1.msra.mxu0 0.0
  %1433 = vmatprep.subr.mxu0 0.0
  %1434 = vmatpush1.msra.mxu0 0.0
  %1435 = vmatprep.subr.mxu0 0.0
  %1436 = vmatpush1.msra.mxu0 0.0
  %1437 = vmatprep.subr.mxu0 0.0
  %1438 = vmatpush1.msra.mxu0 0.0
  %1439 = vmatprep.subr.mxu0 0.0
  %1440 = vmatpush1.msra.mxu0 0.0
  %1441 = vmatprep.subr.mxu0 0.0
  %1442 = vmatpush1.msra.mxu0 0.0
  %1443 = vmatprep.subr.mxu0 0.0
  %1444 = vmatpush1.msra.mxu0 0.0
  %1445 = vmatprep.subr.mxu0 0.0
  %1446 = vmatpush1.msra.mxu0 0.0
  %1447 = vmatprep.subr.mxu0 0.0
  %1448 = vmatpush1.msra.mxu0 0.0
  %1449 = vmatprep.subr.mxu0 0.0
  %1450 = vmatpush1.msra.mxu0 0.0
  %1451 = vmatprep.subr.mxu0 0.0
  %1452 = vmatpush1.msra.mxu0 0.0
  %1453 = vmatprep.subr.mxu0 0.0
  %1454 = vmatpush1.msra.mxu0 0.0
  %1455 = vmatprep.subr.mxu0 0.0
  %1456 = vmatpush1.msra.mxu0 0.0
  %1457 = vmatprep.subr.mxu0 0.0
  %1458 = vmatpush1.msra.mxu0 0.0
  %1459 = vmatprep.subr.mxu0 0.0
  %1460 = vmatpush1.msra.mxu0 0.0
  %1461 = vmatprep.subr.mxu0 0.0
  %1462 = vmatpush1.msra.mxu0 0.0
  %1463 = vmatprep.subr.mxu0 0.0
  %1464 = vmatpush1.msra.mxu0 0.0
  %1465 = vmatprep.subr.mxu0 0.0
  %1466 = vmatpush1.msra.mxu0 0.0
  %1467 = vmatprep.subr.mxu0 0.0
  %1468 = vmatpush1.msra.mxu0 0.0
  %1469 = vmatprep.subr.mxu0 0.0
  %1470 = vmatpush1.msra.mxu0 0.0
  %1471 = vmatprep.subr.mxu0 0.0
  %1472 = vmatpush1.msra.mxu0 0.0
  %1473 = vmatprep.subr.mxu0 0.0
  %1474 = vmatpush1.msra.mxu0 0.0
  %1475 = vmatprep.subr.mxu0 0.0
  %1476 = vmatpush1.msra.mxu0 0.0
  %1477 = vmatprep.subr.mxu0 0.0
  %1478 = vmatpush1.msra.mxu0 0.0
  %1479 = vmatprep.subr.mxu0 0.0
  %1480 = vmatpush1.msra.mxu0 0.0
  %1481 = vmatprep.mubr.f32.mxu0 0.0
  %1482 = vmatmul.mubr.f32.gmra.mrb[0].mxu0 %v1406
  %v1483 = vpop.f32.mrb[0].mxu0
  %v1484 = vadd.f32 %v1404, %v1483
  %v1485 = vpop.f32.mrb[0].mxu0
  %1486 = vmatprep.mubr.f32.mxu0 0.0
  %1487 = vmatmul.mubr.f32.gmra.mrb[0].mxu0 %v1409
  %v1488 = vpop.f32.mrb[0].mxu0
  %v1489 = vadd.f32 %v1404, %v1488
  %v1490 = vpop.f32.mrb[0].mxu0
  %1491 = vmatprep.mubr.f32.mxu0 0.0
  %1492 = vmatmul.mubr.f32.gmra.mrb[0].mxu0 %v1412
  %v1493 = vpop.f32.mrb[0].mxu0
  %v1494 = vadd.f32 %v1404, %v1493
  %v1495 = vpop.f32.mrb[0].mxu0
  %1496 = vmatprep.mubr.f32.mxu0 0.0
  %1497 = vmatmul.mubr.f32.gmra.mrb[0].mxu0 %v1415
  %v1498 = vpop.f32.mrb[0].mxu0
  %v1499 = vadd.f32 %v1404, %v1498
  %v1500 = vpop.f32.mrb[0].mxu0
  %1501 = vdwg.mxu0
  %v1502 = vadd.f32 %v136, %v1484
  %v1503 = vadd.f32 %v137, %v1489
  %v1504 = vadd.f32 %v138, %v1494
  %v1505 = vadd.f32 %v139, %v1499
  %v1506 = vld [vmem:[%s1 + $0xd0] sm:$0x1]
  %v1507 = vld [vmem:[%s1 + $0xd8] sm:$0x1]
  %v1508 = vsel %vm30, %v1502, 0.0
  %1509 = vadd.xlane.f32.xlu0 %v1508
  %v1510 = vpop.xlane.xlu0 %1509
  %v1511 = vsel %vm30, %v1503, 0.0
  %1512 = vadd.xlane.f32.xlu0 %v1511
  %v1513 = vpop.xlane.xlu0 %1512
  %v1514 = vsel %vm30, %v1504, 0.0
  %1515 = vadd.xlane.f32.xlu0 %v1514
  %v1516 = vpop.xlane.xlu0 %1515
  %vm1517 = vcmask 259072
  %v1518 = vsel %vm1517, %v1505, 0.0
  %1519 = vadd.xlane.f32.xlu0 %v1518
  %v1520 = vpop.xlane.xlu0 %1519
  %v1521 = vrcp.pop 32.0
  %v1522 = vmul.f32 %v1510, %v1521
  %v1523 = vmul.f32 %v1513, %v1521
  %v1524 = vmul.f32 %v1516, %v1521
  %v1525 = vmul.f32 %v1520, %v1521
  %v1526 = vsub.f32 %v1502, %v1522
  %v1527 = vsub.f32 %v1503, %v1523
  %v1528 = vsub.f32 %v1504, %v1524
  %v1529 = vsub.f32 %v1505, %v1525
  %v1530 = vmul.f32 %v1526, %v1526
  %v1531 = vmul.f32 %v1527, %v1527
  %v1532 = vmul.f32 %v1528, %v1528
  %v1533 = vmul.f32 %v1529, %v1529
  %v1534 = vsel %vm30, %v1530, 0.0
  %1535 = vadd.xlane.f32.xlu0 %v1534
  %v1536 = vpop.xlane.xlu0 %1535
  %v1537 = vsel %vm30, %v1531, 0.0
  %1538 = vadd.xlane.f32.xlu0 %v1537
  %v1539 = vpop.xlane.xlu0 %1538
  %v1540 = vsel %vm30, %v1532, 0.0
  %1541 = vadd.xlane.f32.xlu0 %v1540
  %v1542 = vpop.xlane.xlu0 %1541
  %v1543 = vsel %vm1517, %v1533, 0.0
  %1544 = vadd.xlane.f32.xlu0 %v1543
  %v1545 = vpop.xlane.xlu0 %1544
  %v1546 = vmul.f32 %v1536, %v1521
  %v1547 = vmul.f32 %v1539, %v1521
  %v1548 = vmul.f32 %v1542, %v1521
  %v1549 = vmul.f32 %v1545, %v1521
  %v1550 = vadd.f32 %v1546, 1e-05
  %v1551 = vadd.f32 %v1547, 1e-05
  %v1552 = vadd.f32 %v1548, 1e-05
  %v1553 = vadd.f32 %v1549, 1e-05
  %v1554 = vrsqrt.pop %v1550
  %v1555 = vrsqrt.pop %v1551
  %v1556 = vrsqrt.pop %v1552
  %v1557 = vrsqrt.pop %v1553
  %v1558 = vmul.f32 %v1526, %v1554
  %v1559 = vmul.f32 %v1527, %v1555
  %v1560 = vmul.f32 %v1528, %v1556
  %v1561 = vmul.f32 %v1529, %v1557
  %v1562 = vlaneseq
  %v1563 = vshrl.u32 %v1562, 7
  %v1564 = vsub.s32 0, %v1563
  %v1565 = vrot.slane %v1506, %v1564
  %v1566 = vmul.f32 %v1558, %v1565
  %v1567 = vmul.f32 %v1559, %v1565
  %v1568 = vmul.f32 %v1560, %v1565
  %v1569 = vmul.f32 %v1561, %v1565
  %v1570 = vlaneseq
  %v1571 = vshrl.u32 %v1570, 7
  %v1572 = vsub.s32 0, %v1571
  %v1573 = vrot.slane %v1507, %v1572
  %v1574 = vadd.f32 %v1566, %v1573
  %v1575 = vadd.f32 %v1567, %v1573
  %v1576 = vadd.f32 %v1568, %v1573
  %v1577 = vadd.f32 %v1569, %v1573
  %v1578 = vld [vmem:[%s1 + $0xe0] sm:$0xff]
  %v1579 = vld [vmem:[%s1 + $0xe8] sm:$0xff]
  %v1580 = vld [vmem:[%s1 + $0xf0] sm:$0xff]
  %v1581 = vld [vmem:[%s1 + $0xf8] sm:$0xff]
  %v1582 = vld [vmem:[%s1 + $0x100] sm:$0x1]
  %v1583 = vlaneseq
  %v1584 = vshrl.u32 %v1583, 7
  %v1585 = vsub.s32 0, %v1584
  %v1586 = vrot.slane %v1582, %v1585
  %v1588 = vsel %vm30, %v1574, 0
  %v1591 = vsel %vm30, %v1575, 0
  %v1594 = vsel %vm30, %v1576, 0
  %v1597 = vsel %vm30, %v1577, 0
  %1599 = vmatprep.subr.mxu0 0.0
  %1600 = vmatpush1.msra.mxu0 %v1578
  %1601 = vmatprep.subr.mxu0 0.0
  %1602 = vmatpush1.msra.mxu0 %v1579
  %1603 = vmatprep.subr.mxu0 0.0
  %1604 = vmatpush1.msra.mxu0 %v1580
  %1605 = vmatprep.subr.mxu0 0.0
  %1606 = vmatpush1.msra.mxu0 %v1581
  %1607 = vmatprep.subr.mxu0 0.0
  %1608 = vmatpush1.msra.mxu0 0.0
  %1609 = vmatprep.subr.mxu0 0.0
  %1610 = vmatpush1.msra.mxu0 0.0
  %1611 = vmatprep.subr.mxu0 0.0
  %1612 = vmatpush1.msra.mxu0 0.0
  %1613 = vmatprep.subr.mxu0 0.0
  %1614 = vmatpush1.msra.mxu0 0.0
  %1615 = vmatprep.subr.mxu0 0.0
  %1616 = vmatpush1.msra.mxu0 0.0
  %1617 = vmatprep.subr.mxu0 0.0
  %1618 = vmatpush1.msra.mxu0 0.0
  %1619 = vmatprep.subr.mxu0 0.0
  %1620 = vmatpush1.msra.mxu0 0.0
  %1621 = vmatprep.subr.mxu0 0.0
  %1622 = vmatpush1.msra.mxu0 0.0
  %1623 = vmatprep.subr.mxu0 0.0
  %1624 = vmatpush1.msra.mxu0 0.0
  %1625 = vmatprep.subr.mxu0 0.0
  %1626 = vmatpush1.msra.mxu0 0.0
  %1627 = vmatprep.subr.mxu0 0.0
  %1628 = vmatpush1.msra.mxu0 0.0
  %1629 = vmatprep.subr.mxu0 0.0
  %1630 = vmatpush1.msra.mxu0 0.0
  %1631 = vmatprep.subr.mxu0 0.0
  %1632 = vmatpush1.msra.mxu0 0.0
  %1633 = vmatprep.subr.mxu0 0.0
  %1634 = vmatpush1.msra.mxu0 0.0
  %1635 = vmatprep.subr.mxu0 0.0
  %1636 = vmatpush1.msra.mxu0 0.0
  %1637 = vmatprep.subr.mxu0 0.0
  %1638 = vmatpush1.msra.mxu0 0.0
  %1639 = vmatprep.subr.mxu0 0.0
  %1640 = vmatpush1.msra.mxu0 0.0
  %1641 = vmatprep.subr.mxu0 0.0
  %1642 = vmatpush1.msra.mxu0 0.0
  %1643 = vmatprep.subr.mxu0 0.0
  %1644 = vmatpush1.msra.mxu0 0.0
  %1645 = vmatprep.subr.mxu0 0.0
  %1646 = vmatpush1.msra.mxu0 0.0
  %1647 = vmatprep.subr.mxu0 0.0
  %1648 = vmatpush1.msra.mxu0 0.0
  %1649 = vmatprep.subr.mxu0 0.0
  %1650 = vmatpush1.msra.mxu0 0.0
  %1651 = vmatprep.subr.mxu0 0.0
  %1652 = vmatpush1.msra.mxu0 0.0
  %1653 = vmatprep.subr.mxu0 0.0
  %1654 = vmatpush1.msra.mxu0 0.0
  %1655 = vmatprep.subr.mxu0 0.0
  %1656 = vmatpush1.msra.mxu0 0.0
  %1657 = vmatprep.subr.mxu0 0.0
  %1658 = vmatpush1.msra.mxu0 0.0
  %1659 = vmatprep.subr.mxu0 0.0
  %1660 = vmatpush1.msra.mxu0 0.0
  %1661 = vmatprep.subr.mxu0 0.0
  %1662 = vmatpush1.msra.mxu0 0.0
  %1663 = vmatprep.mubr.f32.mxu0 0.0
  %1664 = vmatmul.mubr.f32.gmra.mrb[0].mxu0 %v1588
  %v1665 = vpop.f32.mrb[0].mxu0
  %v1666 = vadd.f32 %v1586, %v1665
  %v1667 = vpop.f32.mrb[0].mxu0
  %1668 = vmatprep.mubr.f32.mxu0 0.0
  %1669 = vmatmul.mubr.f32.gmra.mrb[0].mxu0 %v1591
  %v1670 = vpop.f32.mrb[0].mxu0
  %v1671 = vadd.f32 %v1586, %v1670
  %v1672 = vpop.f32.mrb[0].mxu0
  %1673 = vmatprep.mubr.f32.mxu0 0.0
  %1674 = vmatmul.mubr.f32.gmra.mrb[0].mxu0 %v1594
  %v1675 = vpop.f32.mrb[0].mxu0
  %v1676 = vadd.f32 %v1586, %v1675
  %v1677 = vpop.f32.mrb[0].mxu0
  %1678 = vmatprep.mubr.f32.mxu0 0.0
  %1679 = vmatmul.mubr.f32.gmra.mrb[0].mxu0 %v1597
  %v1680 = vpop.f32.mrb[0].mxu0
  %v1681 = vadd.f32 %v1586, %v1680
  %v1682 = vpop.f32.mrb[0].mxu0
  %1683 = vdwg.mxu0
  %v1684 = vmul.f32 %v1666, %v1666
  %v1685 = vmul.f32 %v1671, %v1671
  %v1686 = vmul.f32 %v1676, %v1676
  %v1687 = vmul.f32 %v1681, %v1681
  %v1688 = vmul.f32 %v1666, %v1684
  %v1689 = vmul.f32 %v1671, %v1685
  %v1690 = vmul.f32 %v1676, %v1686
  %v1691 = vmul.f32 %v1681, %v1687
  %v1692 = vmul.f32 %v1688, 0.044715
  %v1693 = vmul.f32 %v1689, 0.044715
  %v1694 = vmul.f32 %v1690, 0.044715
  %v1695 = vmul.f32 %v1691, 0.044715
  %v1696 = vadd.f32 %v1666, %v1692
  %v1697 = vadd.f32 %v1671, %v1693
  %v1698 = vadd.f32 %v1676, %v1694
  %v1699 = vadd.f32 %v1681, %v1695
  %v1700 = vmul.f32 %v1696, 0.7978846
  %v1701 = vmul.f32 %v1697, 0.7978846
  %v1702 = vmul.f32 %v1698, 0.7978846
  %v1703 = vmul.f32 %v1699, 0.7978846
  %v1704 = vtanh.pop %v1700
  %v1705 = vtanh.pop %v1701
  %v1706 = vtanh.pop %v1702
  %v1707 = vtanh.pop %v1703
  %v1708 = vadd.f32 %v1704, 1.0
  %v1709 = vadd.f32 %v1705, 1.0
  %v1710 = vadd.f32 %v1706, 1.0
  %v1711 = vadd.f32 %v1707, 1.0
  %v1712 = vmul.f32 %v1708, 0.5
  %v1713 = vmul.f32 %v1709, 0.5
  %v1714 = vmul.f32 %v1710, 0.5
  %v1715 = vmul.f32 %v1711, 0.5
  %v1716 = vmul.f32 %v1666, %v1712
  %v1717 = vmul.f32 %v1671, %v1713
  %v1718 = vmul.f32 %v1676, %v1714
  %v1719 = vmul.f32 %v1681, %v1715
  %v1720 = vld [vmem:[%s1 + $0x108] sm:$0xff]
  %v1721 = vld [vmem:[%s1 + $0x110] sm:$0xff]
  %v1722 = vld [vmem:[%s1 + $0x118] sm:$0xff]
  %v1723 = vld [vmem:[%s1 + $0x120] sm:$0xff]
  %v1724 = vld [vmem:[%s1 + $0x128] sm:$0xff]
  %v1725 = vld [vmem:[%s1 + $0x130] sm:$0xff]
  %v1726 = vld [vmem:[%s1 + $0x138] sm:$0xff]
  %v1727 = vld [vmem:[%s1 + $0x140] sm:$0xff]
  %v1728 = vld [vmem:[%s1 + $0x148] sm:$0xff]
  %v1729 = vld [vmem:[%s1 + $0x150] sm:$0xff]
  %v1730 = vld [vmem:[%s1 + $0x158] sm:$0xff]
  %v1731 = vld [vmem:[%s1 + $0x160] sm:$0xff]
  %v1732 = vld [vmem:[%s1 + $0x168] sm:$0xff]
  %v1733 = vld [vmem:[%s1 + $0x170] sm:$0xff]
  %v1734 = vld [vmem:[%s1 + $0x178] sm:$0xff]
  %v1735 = vld [vmem:[%s1 + $0x180] sm:$0xff]
  %v1736 = vld [vmem:[%s1 + $0x188] sm:$0x1]
  %v1737 = vlaneseq
  %v1738 = vshrl.u32 %v1737, 7
  %v1739 = vsub.s32 0, %v1738
  %v1740 = vrot.slane %v1736, %v1739
  %1741 = vmatprep.subr.mxu0 0.0
  %1742 = vmatpush1.msra.mxu0 %v1720
  %1743 = vmatprep.subr.mxu0 0.0
  %1744 = vmatpush1.msra.mxu0 %v1721
  %1745 = vmatprep.subr.mxu0 0.0
  %1746 = vmatpush1.msra.mxu0 %v1722
  %1747 = vmatprep.subr.mxu0 0.0
  %1748 = vmatpush1.msra.mxu0 %v1723
  %1749 = vmatprep.subr.mxu0 0.0
  %1750 = vmatpush1.msra.mxu0 %v1724
  %1751 = vmatprep.subr.mxu0 0.0
  %1752 = vmatpush1.msra.mxu0 %v1725
  %1753 = vmatprep.subr.mxu0 0.0
  %1754 = vmatpush1.msra.mxu0 %v1726
  %1755 = vmatprep.subr.mxu0 0.0
  %1756 = vmatpush1.msra.mxu0 %v1727
  %1757 = vmatprep.subr.mxu0 0.0
  %1758 = vmatpush1.msra.mxu0 %v1728
  %1759 = vmatprep.subr.mxu0 0.0
  %1760 = vmatpush1.msra.mxu0 %v1729
  %1761 = vmatprep.subr.mxu0 0.0
  %1762 = vmatpush1.msra.mxu0 %v1730
  %1763 = vmatprep.subr.mxu0 0.0
  %1764 = vmatpush1.msra.mxu0 %v1731
  %1765 = vmatprep.subr.mxu0 0.0
  %1766 = vmatpush1.msra.mxu0 %v1732
  %1767 = vmatprep.subr.mxu0 0.0
  %1768 = vmatpush1.msra.mxu0 %v1733
  %1769 = vmatprep.subr.mxu0 0.0
  %1770 = vmatpush1.msra.mxu0 %v1734
  %1771 = vmatprep.subr.mxu0 0.0
  %1772 = vmatpush1.msra.mxu0 %v1735
  %1773 = vmatprep.subr.mxu0 0.0
  %1774 = vmatpush1.msra.mxu0 0.0
  %1775 = vmatprep.subr.mxu0 0.0
  %1776 = vmatpush1.msra.mxu0 0.0
  %1777 = vmatprep.subr.mxu0 0.0
  %1778 = vmatpush1.msra.mxu0 0.0
  %1779 = vmatprep.subr.mxu0 0.0
  %1780 = vmatpush1.msra.mxu0 0.0
  %1781 = vmatprep.subr.mxu0 0.0
  %1782 = vmatpush1.msra.mxu0 0.0
  %1783 = vmatprep.subr.mxu0 0.0
  %1784 = vmatpush1.msra.mxu0 0.0
  %1785 = vmatprep.subr.mxu0 0.0
  %1786 = vmatpush1.msra.mxu0 0.0
  %1787 = vmatprep.subr.mxu0 0.0
  %1788 = vmatpush1.msra.mxu0 0.0
  %1789 = vmatprep.subr.mxu0 0.0
  %1790 = vmatpush1.msra.mxu0 0.0
  %1791 = vmatprep.subr.mxu0 0.0
  %1792 = vmatpush1.msra.mxu0 0.0
  %1793 = vmatprep.subr.mxu0 0.0
  %1794 = vmatpush1.msra.mxu0 0.0
  %1795 = vmatprep.subr.mxu0 0.0
  %1796 = vmatpush1.msra.mxu0 0.0
  %1797 = vmatprep.subr.mxu0 0.0
  %1798 = vmatpush1.msra.mxu0 0.0
  %1799 = vmatprep.subr.mxu0 0.0
  %1800 = vmatpush1.msra.mxu0 0.0
  %1801 = vmatprep.subr.mxu0 0.0
  %1802 = vmatpush1.msra.mxu0 0.0
  %1803 = vmatprep.subr.mxu0 0.0
  %1804 = vmatpush1.msra.mxu0 0.0
  %1805 = vmatprep.mubr.f32.mxu0 0.0
  %1806 = vmatmul.mubr.f32.gmra.mrb[0].mxu0 %v1716
  %v1807 = vpop.f32.mrb[0].mxu0
  %v1808 = vadd.f32 %v1740, %v1807
  %v1809 = vpop.f32.mrb[0].mxu0
  %1810 = vmatprep.mubr.f32.mxu0 0.0
  %1811 = vmatmul.mubr.f32.gmra.mrb[0].mxu0 %v1717
  %v1812 = vpop.f32.mrb[0].mxu0
  %v1813 = vadd.f32 %v1740, %v1812
  %v1814 = vpop.f32.mrb[0].mxu0
  %1815 = vmatprep.mubr.f32.mxu0 0.0
  %1816 = vmatmul.mubr.f32.gmra.mrb[0].mxu0 %v1718
  %v1817 = vpop.f32.mrb[0].mxu0
  %v1818 = vadd.f32 %v1740, %v1817
  %v1819 = vpop.f32.mrb[0].mxu0
  %1820 = vmatprep.mubr.f32.mxu0 0.0
  %1821 = vmatmul.mubr.f32.gmra.mrb[0].mxu0 %v1719
  %v1822 = vpop.f32.mrb[0].mxu0
  %v1823 = vadd.f32 %v1740, %v1822
  %v1824 = vpop.f32.mrb[0].mxu0
  %1825 = vdwg.mxu0
  %v1826 = vadd.f32 %v1574, %v1808
  %v1827 = vadd.f32 %v1575, %v1813
  %v1828 = vadd.f32 %v1576, %v1818
  %v1829 = vadd.f32 %v1577, %v1823
  %v1830 = vld [vmem:[%s1 + $0x190] sm:$0x1]
  %v1831 = vld [vmem:[%s1 + $0x198] sm:$0x1]
  %v1832 = vsel %vm30, %v1826, 0.0
  %1833 = vadd.xlane.f32.xlu0 %v1832
  %v1834 = vpop.xlane.xlu0 %1833
  %v1835 = vsel %vm30, %v1827, 0.0
  %1836 = vadd.xlane.f32.xlu0 %v1835
  %v1837 = vpop.xlane.xlu0 %1836
  %v1838 = vsel %vm30, %v1828, 0.0
  %1839 = vadd.xlane.f32.xlu0 %v1838
  %v1840 = vpop.xlane.xlu0 %1839
  %v1841 = vsel %vm1517, %v1829, 0.0
  %1842 = vadd.xlane.f32.xlu0 %v1841
  %v1843 = vpop.xlane.xlu0 %1842
  %v1844 = vmul.f32 %v1834, %v1521
  %v1845 = vmul.f32 %v1837, %v1521
  %v1846 = vmul.f32 %v1840, %v1521
  %v1847 = vmul.f32 %v1843, %v1521
  %v1848 = vsub.f32 %v1826, %v1844
  %v1849 = vsub.f32 %v1827, %v1845
  %v1850 = vsub.f32 %v1828, %v1846
  %v1851 = vsub.f32 %v1829, %v1847
  %v1852 = vmul.f32 %v1848, %v1848
  %v1853 = vmul.f32 %v1849, %v1849
  %v1854 = vmul.f32 %v1850, %v1850
  %v1855 = vmul.f32 %v1851, %v1851
  %v1856 = vsel %vm30, %v1852, 0.0
  %1857 = vadd.xlane.f32.xlu0 %v1856
  %v1858 = vpop.xlane.xlu0 %1857
  %v1859 = vsel %vm30, %v1853, 0.0
  %1860 = vadd.xlane.f32.xlu0 %v1859
  %v1861 = vpop.xlane.xlu0 %1860
  %v1862 = vsel %vm30, %v1854, 0.0
  %1863 = vadd.xlane.f32.xlu0 %v1862
  %v1864 = vpop.xlane.xlu0 %1863
  %v1865 = vsel %vm1517, %v1855, 0.0
  %1866 = vadd.xlane.f32.xlu0 %v1865
  %v1867 = vpop.xlane.xlu0 %1866
  %v1868 = vmul.f32 %v1858, %v1521
  %v1869 = vmul.f32 %v1861, %v1521
  %v1870 = vmul.f32 %v1864, %v1521
  %v1871 = vmul.f32 %v1867, %v1521
  %v1872 = vadd.f32 %v1868, 1e-05
  %v1873 = vadd.f32 %v1869, 1e-05
  %v1874 = vadd.f32 %v1870, 1e-05
  %v1875 = vadd.f32 %v1871, 1e-05
  %v1876 = vrsqrt.pop %v1872
  %v1877 = vrsqrt.pop %v1873
  %v1878 = vrsqrt.pop %v1874
  %v1879 = vrsqrt.pop %v1875
  %v1880 = vmul.f32 %v1848, %v1876
  %v1881 = vmul.f32 %v1849, %v1877
  %v1882 = vmul.f32 %v1850, %v1878
  %v1883 = vmul.f32 %v1851, %v1879
  %v1884 = vlaneseq
  %v1885 = vshrl.u32 %v1884, 7
  %v1886 = vsub.s32 0, %v1885
  %v1887 = vrot.slane %v1830, %v1886
  %v1888 = vmul.f32 %v1880, %v1887
  %v1889 = vmul.f32 %v1881, %v1887
  %v1890 = vmul.f32 %v1882, %v1887
  %v1891 = vmul.f32 %v1883, %v1887
  %v1892 = vlaneseq
  %v1893 = vshrl.u32 %v1892, 7
  %v1894 = vsub.s32 0, %v1893
  %v1895 = vrot.slane %v1831, %v1894
  %v1896 = vadd.f32 %v1888, %v1895
  %v1897 = vadd.f32 %v1889, %v1895
  %v1898 = vadd.f32 %v1890, %v1895
  %v1899 = vadd.f32 %v1891, %v1895
  %v1900 = vld [vmem:[%s1 + $0x1a0] sm:$0xff]
  %v1901 = vld [vmem:[%s1 + $0x1a8] sm:$0xff]
  %v1902 = vld [vmem:[%s1 + $0x1b0] sm:$0xff]
  %v1903 = vld [vmem:[%s1 + $0x1b8] sm:$0xff]
  %v1904 = vld [vmem:[%s1 + $0x1c0] sm:$0x1]
  %v1905 = vlaneseq
  %v1906 = vshrl.u32 %v1905, 7
  %v1907 = vsub.s32 0, %v1906
  %v1908 = vrot.slane %v1904, %v1907
  %v1910 = vsel %vm30, %v1896, 0
  %v1913 = vsel %vm30, %v1897, 0
  %v1916 = vsel %vm30, %v1898, 0
  %v1919 = vsel %vm30, %v1899, 0
  %1921 = vmatprep.subr.mxu0 0.0
  %1922 = vmatpush1.msra.mxu0 %v1900
  %1923 = vmatprep.subr.mxu0 0.0
  %1924 = vmatpush1.msra.mxu0 %v1901
  %1925 = vmatprep.subr.mxu0 0.0
  %1926 = vmatpush1.msra.mxu0 %v1902
  %1927 = vmatprep.subr.mxu0 0.0
  %1928 = vmatpush1.msra.mxu0 %v1903
  %1929 = vmatprep.subr.mxu0 0.0
  %1930 = vmatpush1.msra.mxu0 0.0
  %1931 = vmatprep.subr.mxu0 0.0
  %1932 = vmatpush1.msra.mxu0 0.0
  %1933 = vmatprep.subr.mxu0 0.0
  %1934 = vmatpush1.msra.mxu0 0.0
  %1935 = vmatprep.subr.mxu0 0.0
  %1936 = vmatpush1.msra.mxu0 0.0
  %1937 = vmatprep.subr.mxu0 0.0
  %1938 = vmatpush1.msra.mxu0 0.0
  %1939 = vmatprep.subr.mxu0 0.0
  %1940 = vmatpush1.msra.mxu0 0.0
  %1941 = vmatprep.subr.mxu0 0.0
  %1942 = vmatpush1.msra.mxu0 0.0
  %1943 = vmatprep.subr.mxu0 0.0
  %1944 = vmatpush1.msra.mxu0 0.0
  %1945 = vmatprep.subr.mxu0 0.0
  %1946 = vmatpush1.msra.mxu0 0.0
  %1947 = vmatprep.subr.mxu0 0.0
  %1948 = vmatpush1.msra.mxu0 0.0
  %1949 = vmatprep.subr.mxu0 0.0
  %1950 = vmatpush1.msra.mxu0 0.0
  %1951 = vmatprep.subr.mxu0 0.0
  %1952 = vmatpush1.msra.mxu0 0.0
  %1953 = vmatprep.subr.mxu0 0.0
  %1954 = vmatpush1.msra.mxu0 0.0
  %1955 = vmatprep.subr.mxu0 0.0
  %1956 = vmatpush1.msra.mxu0 0.0
  %1957 = vmatprep.subr.mxu0 0.0
  %1958 = vmatpush1.msra.mxu0 0.0
  %1959 = vmatprep.subr.mxu0 0.0
  %1960 = vmatpush1.msra.mxu0 0.0
  %1961 = vmatprep.subr.mxu0 0.0
  %1962 = vmatpush1.msra.mxu0 0.0
  %1963 = vmatprep.subr.mxu0 0.0
  %1964 = vmatpush1.msra.mxu0 0.0
  %1965 = vmatprep.subr.mxu0 0.0
  %1966 = vmatpush1.msra.mxu0 0.0
  %1967 = vmatprep.subr.mxu0 0.0
  %1968 = vmatpush1.msra.mxu0 0.0
  %1969 = vmatprep.subr.mxu0 0.0
  %1970 = vmatpush1.msra.mxu0 0.0
  %1971 = vmatprep.subr.mxu0 0.0
  %1972 = vmatpush1.msra.mxu0 0.0
  %1973 = vmatprep.subr.mxu0 0.0
  %1974 = vmatpush1.msra.mxu0 0.0
  %1975 = vmatprep.subr.mxu0 0.0
  %1976 = vmatpush1.msra.mxu0 0.0
  %1977 = vmatprep.subr.mxu0 0.0
  %1978 = vmatpush1.msra.mxu0 0.0
  %1979 = vmatprep.subr.mxu0 0.0
  %1980 = vmatpush1.msra.mxu0 0.0
  %1981 = vmatprep.subr.mxu0 0.0
  %1982 = vmatpush1.msra.mxu0 0.0
  %1983 = vmatprep.subr.mxu0 0.0
  %1984 = vmatpush1.msra.mxu0 0.0
  %1985 = vmatprep.mubr.f32.mxu0 0.0
  %1986 = vmatmul.mubr.f32.gmra.mrb[0].mxu0 %v1910
  %v1987 = vpop.f32.mrb[0].mxu0
  %v1988 = vadd.f32 %v1908, %v1987
  %v1989 = vpop.f32.mrb[0].mxu0
  %1990 = vmatprep.mubr.f32.mxu0 0.0
  %1991 = vmatmul.mubr.f32.gmra.mrb[0].mxu0 %v1913
  %v1992 = vpop.f32.mrb[0].mxu0
  %v1993 = vadd.f32 %v1908, %v1992
  %v1994 = vpop.f32.mrb[0].mxu0
  %1995 = vmatprep.mubr.f32.mxu0 0.0
  %1996 = vmatmul.mubr.f32.gmra.mrb[0].mxu0 %v1916
  %v1997 = vpop.f32.mrb[0].mxu0
  %v1998 = vadd.f32 %v1908, %v1997
  %v1999 = vpop.f32.mrb[0].mxu0
  %2000 = vmatprep.mubr.f32.mxu0 0.0
  %2001 = vmatmul.mubr.f32.gmra.mrb[0].mxu0 %v1919
  %v2002 = vpop.f32.mrb[0].mxu0
  %v2003 = vadd.f32 %v1908, %v2002
  %v2004 = vpop.f32.mrb[0].mxu0
  %2005 = vdwg.mxu0
  %2010 = vrot.lane.b32.xlu0 %v1988, 96
  %v2011 = vpop.permute.xlu0 %2010
  %2012 = vrot.lane.b32.xlu0 %v1993, 96
  %v2013 = vpop.permute.xlu0 %2012
  %2014 = vrot.lane.b32.xlu0 %v1998, 96
  %v2015 = vpop.permute.xlu0 %2014
  %2016 = vrot.lane.b32.xlu0 %v2003, 96
  %v2017 = vpop.permute.xlu0 %2016
  %v2018 = vsel %vm262, %v1988, 0
  %v2020 = vsel %vm262, %v1993, 0
  %v2022 = vsel %vm262, %v1998, 0
  %v2024 = vsel %vm262, %v2003, 0
  %v2026 = vsel %vm262, %v2011, 0
  %v2028 = vsel %vm262, %v2013, 0
  %v2030 = vsel %vm262, %v2015, 0
  %v2032 = vsel %vm262, %v2017, 0
  %2034 = vmatprep.subr.mxu0 0.0
  %2035 = vmatpush1.xpose.msra.mxu0 %v2026
  %2036 = vmatprep.subr.mxu0 0.0
  %2037 = vmatpush1.xpose.msra.mxu0 %v2028
  %2038 = vmatprep.subr.mxu0 0.0
  %2039 = vmatpush1.xpose.msra.mxu0 %v2030
  %2040 = vmatprep.subr.mxu0 0.0
  %2041 = vmatpush1.xpose.msra.mxu0 %v2032
  %2042 = vmatprep.subr.mxu0 0.0
  %2043 = vmatpush1.xpose.msra.mxu0 0.0
  %2044 = vmatprep.subr.mxu0 0.0
  %2045 = vmatpush1.xpose.msra.mxu0 0.0
  %2046 = vmatprep.subr.mxu0 0.0
  %2047 = vmatpush1.xpose.msra.mxu0 0.0
  %2048 = vmatprep.subr.mxu0 0.0
  %2049 = vmatpush1.xpose.msra.mxu0 0.0
  %2050 = vmatprep.subr.mxu0 0.0
  %2051 = vmatpush1.xpose.msra.mxu0 0.0
  %2052 = vmatprep.subr.mxu0 0.0
  %2053 = vmatpush1.xpose.msra.mxu0 0.0
  %2054 = vmatprep.subr.mxu0 0.0
  %2055 = vmatpush1.xpose.msra.mxu0 0.0
  %2056 = vmatprep.subr.mxu0 0.0
  %2057 = vmatpush1.xpose.msra.mxu0 0.0
  %2058 = vmatprep.subr.mxu0 0.0
  %2059 = vmatpush1.xpose.msra.mxu0 0.0
  %2060 = vmatprep.subr.mxu0 0.0
  %2061 = vmatpush1.xpose.msra.mxu0 0.0
  %2062 = vmatprep.subr.mxu0 0.0
  %2063 = vmatpush1.xpose.msra.mxu0 0.0
  %2064 = vmatprep.subr.mxu0 0.0
  %2065 = vmatpush1.xpose.msra.mxu0 0.0
  %2066 = vmatprep.subr.mxu0 0.0
  %2067 = vmatpush1.xpose.msra.mxu0 0.0
  %2068 = vmatprep.subr.mxu0 0.0
  %2069 = vmatpush1.xpose.msra.mxu0 0.0
  %2070 = vmatprep.subr.mxu0 0.0
  %2071 = vmatpush1.xpose.msra.mxu0 0.0
  %2072 = vmatprep.subr.mxu0 0.0
  %2073 = vmatpush1.xpose.msra.mxu0 0.0
  %2074 = vmatprep.subr.mxu0 0.0
  %2075 = vmatpush1.xpose.msra.mxu0 0.0
  %2076 = vmatprep.subr.mxu0 0.0
  %2077 = vmatpush1.xpose.msra.mxu0 0.0
  %2078 = vmatprep.subr.mxu0 0.0
  %2079 = vmatpush1.xpose.msra.mxu0 0.0
  %2080 = vmatprep.subr.mxu0 0.0
  %2081 = vmatpush1.xpose.msra.mxu0 0.0
  %2082 = vmatprep.subr.mxu0 0.0
  %2083 = vmatpush1.xpose.msra.mxu0 0.0
  %2084 = vmatprep.subr.mxu0 0.0
  %2085 = vmatpush1.xpose.msra.mxu0 0.0
  %2086 = vmatprep.subr.mxu0 0.0
  %2087 = vmatpush1.xpose.msra.mxu0 0.0
  %2088 = vmatprep.subr.mxu0 0.0
  %2089 = vmatpush1.xpose.msra.mxu0 0.0
  %2090 = vmatprep.subr.mxu0 0.0
  %2091 = vmatpush1.xpose.msra.mxu0 0.0
  %2092 = vmatprep.subr.mxu0 0.0
  %2093 = vmatpush1.xpose.msra.mxu0 0.0
  %2094 = vmatprep.subr.mxu0 0.0
  %2095 = vmatpush1.xpose.msra.mxu0 0.0
  %2096 = vmatprep.subr.mxu0 0.0
  %2097 = vmatpush1.xpose.msra.mxu0 0.0
  %2098 = vmatprep.mubr.f32.mxu0 0.0
  %2099 = vmatmul.mubr.f32.gmra.mrb[0].mxu0 %v2018
  %v2100 = vpop.f32.mrb[0].mxu0
  %v2101 = vadd.f32 %v140, %v2100
  %v2102 = vpop.f32.mrb[0].mxu0
  %2103 = vmatprep.mubr.f32.mxu0 0.0
  %2104 = vmatmul.mubr.f32.gmra.mrb[0].mxu0 %v2020
  %v2105 = vpop.f32.mrb[0].mxu0
  %v2106 = vadd.f32 %v141, %v2105
  %v2107 = vpop.f32.mrb[0].mxu0
  %2108 = vmatprep.mubr.f32.mxu0 0.0
  %2109 = vmatmul.mubr.f32.gmra.mrb[0].mxu0 %v2022
  %v2110 = vpop.f32.mrb[0].mxu0
  %v2111 = vadd.f32 %v142, %v2110
  %v2112 = vpop.f32.mrb[0].mxu0
  %2113 = vmatprep.mubr.f32.mxu0 0.0
  %2114 = vmatmul.mubr.f32.gmra.mrb[0].mxu0 %v2024
  %v2115 = vpop.f32.mrb[0].mxu0
  %v2116 = vadd.f32 %v143, %v2115
  %v2117 = vpop.f32.mrb[0].mxu0
  %2118 = vdwg.mxu0
  %v2119 = vsel %vm364, %v2101, -inf
  %2120 = vmax.xlane.f32.xlu0 %v2119
  %v2121 = vpop.xlane.xlu0 %2120
  %v2122 = vsel %vm364, %v2106, -inf
  %2123 = vmax.xlane.f32.xlu0 %v2122
  %v2124 = vpop.xlane.xlu0 %2123
  %v2125 = vsel %vm364, %v2111, -inf
  %2126 = vmax.xlane.f32.xlu0 %v2125
  %v2127 = vpop.xlane.xlu0 %2126
  %v2128 = vsel %vm374, %v2116, -inf
  %2129 = vmax.xlane.f32.xlu0 %v2128
  %v2130 = vpop.xlane.xlu0 %2129
  %v2131 = vsub.f32 %v2101, %v2121
  %v2132 = vsub.f32 %v2106, %v2124
  %v2133 = vsub.f32 %v2111, %v2127
  %v2134 = vsub.f32 %v2116, %v2130
  %v2135 = vmul.f32 %v2131, 1.442695
  %v2136 = vpow.pop %v2135
  %v2137 = vmul.f32 %v2132, 1.442695
  %v2138 = vpow.pop %v2137
  %v2139 = vmul.f32 %v2133, 1.442695
  %v2140 = vpow.pop %v2139
  %v2141 = vmul.f32 %v2134, 1.442695
  %v2142 = vpow.pop %v2141
  %v2143 = vsel %vm364, %v2136, 0.0
  %2144 = vadd.xlane.f32.xlu0 %v2143
  %v2145 = vpop.xlane.xlu0 %2144
  %v2146 = vsel %vm364, %v2138, 0.0
  %2147 = vadd.xlane.f32.xlu0 %v2146
  %v2148 = vpop.xlane.xlu0 %2147
  %v2149 = vsel %vm364, %v2140, 0.0
  %2150 = vadd.xlane.f32.xlu0 %v2149
  %v2151 = vpop.xlane.xlu0 %2150
  %v2152 = vsel %vm374, %v2142, 0.0
  %2153 = vadd.xlane.f32.xlu0 %v2152
  %v2154 = vpop.xlane.xlu0 %2153
  %v2155 = vrcp.pop %v2145
  %v2156 = vrcp.pop %v2148
  %v2157 = vrcp.pop %v2151
  %v2158 = vrcp.pop %v2154
  %v2159 = vmul.f32 %v2136, %v2155
  %v2160 = vmul.f32 %v2138, %v2156
  %v2161 = vmul.f32 %v2140, %v2157
  %v2162 = vmul.f32 %v2142, %v2158
  %2163 = vrot.lane.b32.xlu0 %v1988, 64
  %v2164 = vpop.permute.xlu0 %2163
  %2165 = vrot.lane.b32.xlu0 %v1993, 64
  %v2166 = vpop.permute.xlu0 %2165
  %2167 = vrot.lane.b32.xlu0 %v1998, 64
  %v2168 = vpop.permute.xlu0 %2167
  %2169 = vrot.lane.b32.xlu0 %v2003, 64
  %v2170 = vpop.permute.xlu0 %2169
  %v2175 = vsel %vm364, %v2159, 0
  %v2178 = vsel %vm364, %v2160, 0
  %v2181 = vsel %vm364, %v2161, 0
  %v2184 = vsel %vm364, %v2162, 0
  %v2186 = vsel %vm433, %v2170, 0
  %2188 = vmatprep.subr.mxu0 0.0
  %2189 = vmatpush1.msra.mxu0 %v2164
  %2190 = vmatprep.subr.mxu0 0.0
  %2191 = vmatpush1.msra.mxu0 %v2166
  %2192 = vmatprep.subr.mxu0 0.0
  %2193 = vmatpush1.msra.mxu0 %v2168
  %2194 = vmatprep.subr.mxu0 0.0
  %2195 = vmatpush1.msra.mxu0 %v2186
  %2196 = vmatprep.subr.mxu0 0.0
  %2197 = vmatpush1.msra.mxu0 0.0
  %2198 = vmatprep.subr.mxu0 0.0
  %2199 = vmatpush1.msra.mxu0 0.0
  %2200 = vmatprep.subr.mxu0 0.0
  %2201 = vmatpush1.msra.mxu0 0.0
  %2202 = vmatprep.subr.mxu0 0.0
  %2203 = vmatpush1.msra.mxu0 0.0
  %2204 = vmatprep.subr.mxu0 0.0
  %2205 = vmatpush1.msra.mxu0 0.0
  %2206 = vmatprep.subr.mxu0 0.0
  %2207 = vmatpush1.msra.mxu0 0.0
  %2208 = vmatprep.subr.mxu0 0.0
  %2209 = vmatpush1.msra.mxu0 0.0
  %2210 = vmatprep.subr.mxu0 0.0
  %2211 = vmatpush1.msra.mxu0 0.0
  %2212 = vmatprep.subr.mxu0 0.0
  %2213 = vmatpush1.msra.mxu0 0.0
  %2214 = vmatprep.subr.mxu0 0.0
  %2215 = vmatpush1.msra.mxu0 0.0
  %2216 = vmatprep.subr.mxu0 0.0
  %2217 = vmatpush1.msra.mxu0 0.0
  %2218 = vmatprep.subr.mxu0 0.0
  %2219 = vmatpush1.msra.mxu0 0.0
  %2220 = vmatprep.subr.mxu0 0.0
  %2221 = vmatpush1.msra.mxu0 0.0
  %2222 = vmatprep.subr.mxu0 0.0
  %2223 = vmatpush1.msra.mxu0 0.0
  %2224 = vmatprep.subr.mxu0 0.0
  %2225 = vmatpush1.msra.mxu0 0.0
  %2226 = vmatprep.subr.mxu0 0.0
  %2227 = vmatpush1.msra.mxu0 0.0
  %2228 = vmatprep.subr.mxu0 0.0
  %2229 = vmatpush1.msra.mxu0 0.0
  %2230 = vmatprep.subr.mxu0 0.0
  %2231 = vmatpush1.msra.mxu0 0.0
  %2232 = vmatprep.subr.mxu0 0.0
  %2233 = vmatpush1.msra.mxu0 0.0
  %2234 = vmatprep.subr.mxu0 0.0
  %2235 = vmatpush1.msra.mxu0 0.0
  %2236 = vmatprep.subr.mxu0 0.0
  %2237 = vmatpush1.msra.mxu0 0.0
  %2238 = vmatprep.subr.mxu0 0.0
  %2239 = vmatpush1.msra.mxu0 0.0
  %2240 = vmatprep.subr.mxu0 0.0
  %2241 = vmatpush1.msra.mxu0 0.0
  %2242 = vmatprep.subr.mxu0 0.0
  %2243 = vmatpush1.msra.mxu0 0.0
  %2244 = vmatprep.subr.mxu0 0.0
  %2245 = vmatpush1.msra.mxu0 0.0
  %2246 = vmatprep.subr.mxu0 0.0
  %2247 = vmatpush1.msra.mxu0 0.0
  %2248 = vmatprep.subr.mxu0 0.0
  %2249 = vmatpush1.msra.mxu0 0.0
  %2250 = vmatprep.subr.mxu0 0.0
  %2251 = vmatpush1.msra.mxu0 0.0
  %2252 = vmatprep.mubr.f32.mxu0 0.0
  %2253 = vmatmul.mubr.f32.gmra.mrb[0].mxu0 %v2175
  %v2254 = vpop.f32.mrb[0].mxu0
  %v2255 = vadd.f32 0.0, %v2254
  %v2256 = vpop.f32.mrb[0].mxu0
  %2257 = vmatprep.mubr.f32.mxu0 0.0
  %2258 = vmatmul.mubr.f32.gmra.mrb[0].mxu0 %v2178
  %v2259 = vpop.f32.mrb[0].mxu0
  %v2260 = vadd.f32 0.0, %v2259
  %v2261 = vpop.f32.mrb[0].mxu0
  %2262 = vmatprep.mubr.f32.mxu0 0.0
  %2263 = vmatmul.mubr.f32.gmra.mrb[0].mxu0 %v2181
  %v2264 = vpop.f32.mrb[0].mxu0
  %v2265 = vadd.f32 0.0, %v2264
  %v2266 = vpop.f32.mrb[0].mxu0
  %2267 = vmatprep.mubr.f32.mxu0 0.0
  %2268 = vmatmul.mubr.f32.gmra.mrb[0].mxu0 %v2184
  %v2269 = vpop.f32.mrb[0].mxu0
  %v2270 = vadd.f32 0.0, %v2269
  %v2271 = vpop.f32.mrb[0].mxu0
  %2272 = vdwg.mxu0
  %2273 = vrot.lane.b32.xlu0 %v1988, 120
  %v2274 = vpop.permute.xlu0 %2273
  %2275 = vrot.lane.b32.xlu0 %v1993, 120
  %v2276 = vpop.permute.xlu0 %2275
  %2277 = vrot.lane.b32.xlu0 %v1998, 120
  %v2278 = vpop.permute.xlu0 %2277
  %2279 = vrot.lane.b32.xlu0 %v2003, 120
  %v2280 = vpop.permute.xlu0 %2279
  %2281 = vrot.lane.b32.xlu0 %v1988, 88
  %v2282 = vpop.permute.xlu0 %2281
  %2283 = vrot.lane.b32.xlu0 %v1993, 88
  %v2284 = vpop.permute.xlu0 %2283
  %2285 = vrot.lane.b32.xlu0 %v1998, 88
  %v2286 = vpop.permute.xlu0 %2285
  %2287 = vrot.lane.b32.xlu0 %v2003, 88
  %v2288 = vpop.permute.xlu0 %2287
  %v2289 = vsel %vm262, %v2274, 0
  %v2291 = vsel %vm262, %v2276, 0
  %v2293 = vsel %vm262, %v2278, 0
  %v2295 = vsel %vm262, %v2280, 0
  %v2297 = vsel %vm262, %v2282, 0
  %v2299 = vsel %vm262, %v2284, 0
  %v2301 = vsel %vm262, %v2286, 0
  %v2303 = vsel %vm262, %v2288, 0
  %2305 = vmatprep.subr.mxu0 0.0
  %2306 = vmatpush1.xpose.msra.mxu0 %v2297
  %2307 = vmatprep.subr.mxu0 0.0
  %2308 = vmatpush1.xpose.msra.mxu0 %v2299
  %2309 = vmatprep.subr.mxu0 0.0
  %2310 = vmatpush1.xpose.msra.mxu0 %v2301
  %2311 = vmatprep.subr.mxu0 0.0
  %2312 = vmatpush1.xpose.msra.mxu0 %v2303
  %2313 = vmatprep.subr.mxu0 0.0
  %2314 = vmatpush1.xpose.msra.mxu0 0.0
  %2315 = vmatprep.subr.mxu0 0.0
  %2316 = vmatpush1.xpose.msra.mxu0 0.0
  %2317 = vmatprep.subr.mxu0 0.0
  %2318 = vmatpush1.xpose.msra.mxu0 0.0
  %2319 = vmatprep.subr.mxu0 0.0
  %2320 = vmatpush1.xpose.msra.mxu0 0.0
  %2321 = vmatprep.subr.mxu0 0.0
  %2322 = vmatpush1.xpose.msra.mxu0 0.0
  %2323 = vmatprep.subr.mxu0 0.0
  %2324 = vmatpush1.xpose.msra.mxu0 0.0
  %2325 = vmatprep.subr.mxu0 0.0
  %2326 = vmatpush1.xpose.msra.mxu0 0.0
  %2327 = vmatprep.subr.mxu0 0.0
  %2328 = vmatpush1.xpose.msra.mxu0 0.0
  %2329 = vmatprep.subr.mxu0 0.0
  %2330 = vmatpush1.xpose.msra.mxu0 0.0
  %2331 = vmatprep.subr.mxu0 0.0
  %2332 = vmatpush1.xpose.msra.mxu0 0.0
  %2333 = vmatprep.subr.mxu0 0.0
  %2334 = vmatpush1.xpose.msra.mxu0 0.0
  %2335 = vmatprep.subr.mxu0 0.0
  %2336 = vmatpush1.xpose.msra.mxu0 0.0
  %2337 = vmatprep.subr.mxu0 0.0
  %2338 = vmatpush1.xpose.msra.mxu0 0.0
  %2339 = vmatprep.subr.mxu0 0.0
  %2340 = vmatpush1.xpose.msra.mxu0 0.0
  %2341 = vmatprep.subr.mxu0 0.0
  %2342 = vmatpush1.xpose.msra.mxu0 0.0
  %2343 = vmatprep.subr.mxu0 0.0
  %2344 = vmatpush1.xpose.msra.mxu0 0.0
  %2345 = vmatprep.subr.mxu0 0.0
  %2346 = vmatpush1.xpose.msra.mxu0 0.0
  %2347 = vmatprep.subr.mxu0 0.0
  %2348 = vmatpush1.xpose.msra.mxu0 0.0
  %2349 = vmatprep.subr.mxu0 0.0
  %2350 = vmatpush1.xpose.msra.mxu0 0.0
  %2351 = vmatprep.subr.mxu0 0.0
  %2352 = vmatpush1.xpose.msra.mxu0 0.0
  %2353 = vmatprep.subr.mxu0 0.0
  %2354 = vmatpush1.xpose.msra.mxu0 0.0
  %2355 = vmatprep.subr.mxu0 0.0
  %2356 = vmatpush1.xpose.msra.mxu0 0.0
  %2357 = vmatprep.subr.mxu0 0.0
  %2358 = vmatpush1.xpose.msra.mxu0 0.0
  %2359 = vmatprep.subr.mxu0 0.0
  %2360 = vmatpush1.xpose.msra.mxu0 0.0
  %2361 = vmatprep.subr.mxu0 0.0
  %2362 = vmatpush1.xpose.msra.mxu0 0.0
  %2363 = vmatprep.subr.mxu0 0.0
  %2364 = vmatpush1.xpose.msra.mxu0 0.0
  %2365 = vmatprep.subr.mxu0 0.0
  %2366 = vmatpush1.xpose.msra.mxu0 0.0
  %2367 = vmatprep.subr.mxu0 0.0
  %2368 = vmatpush1.xpose.msra.mxu0 0.0
  %2369 = vmatprep.mubr.f32.mxu0 0.0
  %2370 = vmatmul.mubr.f32.gmra.mrb[0].mxu0 %v2289
  %v2371 = vpop.f32.mrb[0].mxu0
  %v2372 = vadd.f32 %v140, %v2371
  %v2373 = vpop.f32.mrb[0].mxu0
  %2374 = vmatprep.mubr.f32.mxu0 0.0
  %2375 = vmatmul.mubr.f32.gmra.mrb[0].mxu0 %v2291
  %v2376 = vpop.f32.mrb[0].mxu0
  %v2377 = vadd.f32 %v141, %v2376
  %v2378 = vpop.f32.mrb[0].mxu0
  %2379 = vmatprep.mubr.f32.mxu0 0.0
  %2380 = vmatmul.mubr.f32.gmra.mrb[0].mxu0 %v2293
  %v2381 = vpop.f32.mrb[0].mxu0
  %v2382 = vadd.f32 %v142, %v2381
  %v2383 = vpop.f32.mrb[0].mxu0
  %2384 = vmatprep.mubr.f32.mxu0 0.0
  %2385 = vmatmul.mubr.f32.gmra.mrb[0].mxu0 %v2295
  %v2386 = vpop.f32.mrb[0].mxu0
  %v2387 = vadd.f32 %v143, %v2386
  %v2388 = vpop.f32.mrb[0].mxu0
  %2389 = vdwg.mxu0
  %v2390 = vsel %vm364, %v2372, -inf
  %2391 = vmax.xlane.f32.xlu0 %v2390
  %v2392 = vpop.xlane.xlu0 %2391
  %v2393 = vsel %vm364, %v2377, -inf
  %2394 = vmax.xlane.f32.xlu0 %v2393
  %v2395 = vpop.xlane.xlu0 %2394
  %v2396 = vsel %vm364, %v2382, -inf
  %2397 = vmax.xlane.f32.xlu0 %v2396
  %v2398 = vpop.xlane.xlu0 %2397
  %v2399 = vsel %vm374, %v2387, -inf
  %2400 = vmax.xlane.f32.xlu0 %v2399
  %v2401 = vpop.xlane.xlu0 %2400
  %v2402 = vsub.f32 %v2372, %v2392
  %v2403 = vsub.f32 %v2377, %v2395
  %v2404 = vsub.f32 %v2382, %v2398
  %v2405 = vsub.f32 %v2387, %v2401
  %v2406 = vmul.f32 %v2402, 1.442695
  %v2407 = vpow.pop %v2406
  %v2408 = vmul.f32 %v2403, 1.442695
  %v2409 = vpow.pop %v2408
  %v2410 = vmul.f32 %v2404, 1.442695
  %v2411 = vpow.pop %v2410
  %v2412 = vmul.f32 %v2405, 1.442695
  %v2413 = vpow.pop %v2412
  %v2414 = vsel %vm364, %v2407, 0.0
  %2415 = vadd.xlane.f32.xlu0 %v2414
  %v2416 = vpop.xlane.xlu0 %2415
  %v2417 = vsel %vm364, %v2409, 0.0
  %2418 = vadd.xlane.f32.xlu0 %v2417
  %v2419 = vpop.xlane.xlu0 %2418
  %v2420 = vsel %vm364, %v2411, 0.0
  %2421 = vadd.xlane.f32.xlu0 %v2420
  %v2422 = vpop.xlane.xlu0 %2421
  %v2423 = vsel %vm374, %v2413, 0.0
  %2424 = vadd.xlane.f32.xlu0 %v2423
  %v2425 = vpop.xlane.xlu0 %2424
  %v2426 = vrcp.pop %v2416
  %v2427 = vrcp.pop %v2419
  %v2428 = vrcp.pop %v2422
  %v2429 = vrcp.pop %v2425
  %v2430 = vmul.f32 %v2407, %v2426
  %v2431 = vmul.f32 %v2409, %v2427
  %v2432 = vmul.f32 %v2411, %v2428
  %v2433 = vmul.f32 %v2413, %v2429
  %2434 = vrot.lane.b32.xlu0 %v1988, 56
  %v2435 = vpop.permute.xlu0 %2434
  %2436 = vrot.lane.b32.xlu0 %v1993, 56
  %v2437 = vpop.permute.xlu0 %2436
  %2438 = vrot.lane.b32.xlu0 %v1998, 56
  %v2439 = vpop.permute.xlu0 %2438
  %2440 = vrot.lane.b32.xlu0 %v2003, 56
  %v2441 = vpop.permute.xlu0 %2440
  %v2446 = vsel %vm364, %v2430, 0
  %v2449 = vsel %vm364, %v2431, 0
  %v2452 = vsel %vm364, %v2432, 0
  %v2455 = vsel %vm364, %v2433, 0
  %v2457 = vsel %vm433, %v2441, 0
  %2459 = vmatprep.subr.mxu0 0.0
  %2460 = vmatpush1.msra.mxu0 %v2435
  %2461 = vmatprep.subr.mxu0 0.0
  %2462 = vmatpush1.msra.mxu0 %v2437
  %2463 = vmatprep.subr.mxu0 0.0
  %2464 = vmatpush1.msra.mxu0 %v2439
  %2465 = vmatprep.subr.mxu0 0.0
  %2466 = vmatpush1.msra.mxu0 %v2457
  %2467 = vmatprep.subr.mxu0 0.0
  %2468 = vmatpush1.msra.mxu0 0.0
  %2469 = vmatprep.subr.mxu0 0.0
  %2470 = vmatpush1.msra.mxu0 0.0
  %2471 = vmatprep.subr.mxu0 0.0
  %2472 = vmatpush1.msra.mxu0 0.0
  %2473 = vmatprep.subr.mxu0 0.0
  %2474 = vmatpush1.msra.mxu0 0.0
  %2475 = vmatprep.subr.mxu0 0.0
  %2476 = vmatpush1.msra.mxu0 0.0
  %2477 = vmatprep.subr.mxu0 0.0
  %2478 = vmatpush1.msra.mxu0 0.0
  %2479 = vmatprep.subr.mxu0 0.0
  %2480 = vmatpush1.msra.mxu0 0.0
  %2481 = vmatprep.subr.mxu0 0.0
  %2482 = vmatpush1.msra.mxu0 0.0
  %2483 = vmatprep.subr.mxu0 0.0
  %2484 = vmatpush1.msra.mxu0 0.0
  %2485 = vmatprep.subr.mxu0 0.0
  %2486 = vmatpush1.msra.mxu0 0.0
  %2487 = vmatprep.subr.mxu0 0.0
  %2488 = vmatpush1.msra.mxu0 0.0
  %2489 = vmatprep.subr.mxu0 0.0
  %2490 = vmatpush1.msra.mxu0 0.0
  %2491 = vmatprep.subr.mxu0 0.0
  %2492 = vmatpush1.msra.mxu0 0.0
  %2493 = vmatprep.subr.mxu0 0.0
  %2494 = vmatpush1.msra.mxu0 0.0
  %2495 = vmatprep.subr.mxu0 0.0
  %2496 = vmatpush1.msra.mxu0 0.0
  %2497 = vmatprep.subr.mxu0 0.0
  %2498 = vmatpush1.msra.mxu0 0.0
  %2499 = vmatprep.subr.mxu0 0.0
  %2500 = vmatpush1.msra.mxu0 0.0
  %2501 = vmatprep.subr.mxu0 0.0
  %2502 = vmatpush1.msra.mxu0 0.0
  %2503 = vmatprep.subr.mxu0 0.0
  %2504 = vmatpush1.msra.mxu0 0.0
  %2505 = vmatprep.subr.mxu0 0.0
  %2506 = vmatpush1.msra.mxu0 0.0
  %2507 = vmatprep.subr.mxu0 0.0
  %2508 = vmatpush1.msra.mxu0 0.0
  %2509 = vmatprep.subr.mxu0 0.0
  %2510 = vmatpush1.msra.mxu0 0.0
  %2511 = vmatprep.subr.mxu0 0.0
  %2512 = vmatpush1.msra.mxu0 0.0
  %2513 = vmatprep.subr.mxu0 0.0
  %2514 = vmatpush1.msra.mxu0 0.0
  %2515 = vmatprep.subr.mxu0 0.0
  %2516 = vmatpush1.msra.mxu0 0.0
  %2517 = vmatprep.subr.mxu0 0.0
  %2518 = vmatpush1.msra.mxu0 0.0
  %2519 = vmatprep.subr.mxu0 0.0
  %2520 = vmatpush1.msra.mxu0 0.0
  %2521 = vmatprep.subr.mxu0 0.0
  %2522 = vmatpush1.msra.mxu0 0.0
  %2523 = vmatprep.mubr.f32.mxu0 0.0
  %2524 = vmatmul.mubr.f32.gmra.mrb[0].mxu0 %v2446
  %v2525 = vpop.f32.mrb[0].mxu0
  %v2526 = vadd.f32 0.0, %v2525
  %v2527 = vpop.f32.mrb[0].mxu0
  %2528 = vmatprep.mubr.f32.mxu0 0.0
  %2529 = vmatmul.mubr.f32.gmra.mrb[0].mxu0 %v2449
  %v2530 = vpop.f32.mrb[0].mxu0
  %v2531 = vadd.f32 0.0, %v2530
  %v2532 = vpop.f32.mrb[0].mxu0
  %2533 = vmatprep.mubr.f32.mxu0 0.0
  %2534 = vmatmul.mubr.f32.gmra.mrb[0].mxu0 %v2452
  %v2535 = vpop.f32.mrb[0].mxu0
  %v2536 = vadd.f32 0.0, %v2535
  %v2537 = vpop.f32.mrb[0].mxu0
  %2538 = vmatprep.mubr.f32.mxu0 0.0
  %2539 = vmatmul.mubr.f32.gmra.mrb[0].mxu0 %v2455
  %v2540 = vpop.f32.mrb[0].mxu0
  %v2541 = vadd.f32 0.0, %v2540
  %v2542 = vpop.f32.mrb[0].mxu0
  %2543 = vdwg.mxu0
  %2544 = vrot.lane.b32.xlu0 %v1988, 112
  %v2545 = vpop.permute.xlu0 %2544
  %2546 = vrot.lane.b32.xlu0 %v1993, 112
  %v2547 = vpop.permute.xlu0 %2546
  %2548 = vrot.lane.b32.xlu0 %v1998, 112
  %v2549 = vpop.permute.xlu0 %2548
  %2550 = vrot.lane.b32.xlu0 %v2003, 112
  %v2551 = vpop.permute.xlu0 %2550
  %2552 = vrot.lane.b32.xlu0 %v1988, 80
  %v2553 = vpop.permute.xlu0 %2552
  %2554 = vrot.lane.b32.xlu0 %v1993, 80
  %v2555 = vpop.permute.xlu0 %2554
  %2556 = vrot.lane.b32.xlu0 %v1998, 80
  %v2557 = vpop.permute.xlu0 %2556
  %2558 = vrot.lane.b32.xlu0 %v2003, 80
  %v2559 = vpop.permute.xlu0 %2558
  %v2560 = vsel %vm262, %v2545, 0
  %v2562 = vsel %vm262, %v2547, 0
  %v2564 = vsel %vm262, %v2549, 0
  %v2566 = vsel %vm262, %v2551, 0
  %v2568 = vsel %vm262, %v2553, 0
  %v2570 = vsel %vm262, %v2555, 0
  %v2572 = vsel %vm262, %v2557, 0
  %v2574 = vsel %vm262, %v2559, 0
  %2576 = vmatprep.subr.mxu0 0.0
  %2577 = vmatpush1.xpose.msra.mxu0 %v2568
  %2578 = vmatprep.subr.mxu0 0.0
  %2579 = vmatpush1.xpose.msra.mxu0 %v2570
  %2580 = vmatprep.subr.mxu0 0.0
  %2581 = vmatpush1.xpose.msra.mxu0 %v2572
  %2582 = vmatprep.subr.mxu0 0.0
  %2583 = vmatpush1.xpose.msra.mxu0 %v2574
  %2584 = vmatprep.subr.mxu0 0.0
  %2585 = vmatpush1.xpose.msra.mxu0 0.0
  %2586 = vmatprep.subr.mxu0 0.0
  %2587 = vmatpush1.xpose.msra.mxu0 0.0
  %2588 = vmatprep.subr.mxu0 0.0
  %2589 = vmatpush1.xpose.msra.mxu0 0.0
  %2590 = vmatprep.subr.mxu0 0.0
  %2591 = vmatpush1.xpose.msra.mxu0 0.0
  %2592 = vmatprep.subr.mxu0 0.0
  %2593 = vmatpush1.xpose.msra.mxu0 0.0
  %2594 = vmatprep.subr.mxu0 0.0
  %2595 = vmatpush1.xpose.msra.mxu0 0.0
  %2596 = vmatprep.subr.mxu0 0.0
  %2597 = vmatpush1.xpose.msra.mxu0 0.0
  %2598 = vmatprep.subr.mxu0 0.0
  %2599 = vmatpush1.xpose.msra.mxu0 0.0
  %2600 = vmatprep.subr.mxu0 0.0
  %2601 = vmatpush1.xpose.msra.mxu0 0.0
  %2602 = vmatprep.subr.mxu0 0.0
  %2603 = vmatpush1.xpose.msra.mxu0 0.0
  %2604 = vmatprep.subr.mxu0 0.0
  %2605 = vmatpush1.xpose.msra.mxu0 0.0
  %2606 = vmatprep.subr.mxu0 0.0
  %2607 = vmatpush1.xpose.msra.mxu0 0.0
  %2608 = vmatprep.subr.mxu0 0.0
  %2609 = vmatpush1.xpose.msra.mxu0 0.0
  %2610 = vmatprep.subr.mxu0 0.0
  %2611 = vmatpush1.xpose.msra.mxu0 0.0
  %2612 = vmatprep.subr.mxu0 0.0
  %2613 = vmatpush1.xpose.msra.mxu0 0.0
  %2614 = vmatprep.subr.mxu0 0.0
  %2615 = vmatpush1.xpose.msra.mxu0 0.0
  %2616 = vmatprep.subr.mxu0 0.0
  %2617 = vmatpush1.xpose.msra.mxu0 0.0
  %2618 = vmatprep.subr.mxu0 0.0
  %2619 = vmatpush1.xpose.msra.mxu0 0.0
  %2620 = vmatprep.subr.mxu0 0.0
  %2621 = vmatpush1.xpose.msra.mxu0 0.0
  %2622 = vmatprep.subr.mxu0 0.0
  %2623 = vmatpush1.xpose.msra.mxu0 0.0
  %2624 = vmatprep.subr.mxu0 0.0
  %2625 = vmatpush1.xpose.msra.mxu0 0.0
  %2626 = vmatprep.subr.mxu0 0.0
  %2627 = vmatpush1.xpose.msra.mxu0 0.0
  %2628 = vmatprep.subr.mxu0 0.0
  %2629 = vmatpush1.xpose.msra.mxu0 0.0
  %2630 = vmatprep.subr.mxu0 0.0
  %2631 = vmatpush1.xpose.msra.mxu0 0.0
  %2632 = vmatprep.subr.mxu0 0.0
  %2633 = vmatpush1.xpose.msra.mxu0 0.0
  %2634 = vmatprep.subr.mxu0 0.0
  %2635 = vmatpush1.xpose.msra.mxu0 0.0
  %2636 = vmatprep.subr.mxu0 0.0
  %2637 = vmatpush1.xpose.msra.mxu0 0.0
  %2638 = vmatprep.subr.mxu0 0.0
  %2639 = vmatpush1.xpose.msra.mxu0 0.0
  %2640 = vmatprep.mubr.f32.mxu0 0.0
  %2641 = vmatmul.mubr.f32.gmra.mrb[0].mxu0 %v2560
  %v2642 = vpop.f32.mrb[0].mxu0
  %v2643 = vadd.f32 %v140, %v2642
  %v2644 = vpop.f32.mrb[0].mxu0
  %2645 = vmatprep.mubr.f32.mxu0 0.0
  %2646 = vmatmul.mubr.f32.gmra.mrb[0].mxu0 %v2562
  %v2647 = vpop.f32.mrb[0].mxu0
  %v2648 = vadd.f32 %v141, %v2647
  %v2649 = vpop.f32.mrb[0].mxu0
  %2650 = vmatprep.mubr.f32.mxu0 0.0
  %2651 = vmatmul.mubr.f32.gmra.mrb[0].mxu0 %v2564
  %v2652 = vpop.f32.mrb[0].mxu0
  %v2653 = vadd.f32 %v142, %v2652
  %v2654 = vpop.f32.mrb[0].mxu0
  %2655 = vmatprep.mubr.f32.mxu0 0.0
  %2656 = vmatmul.mubr.f32.gmra.mrb[0].mxu0 %v2566
  %v2657 = vpop.f32.mrb[0].mxu0
  %v2658 = vadd.f32 %v143, %v2657
  %v2659 = vpop.f32.mrb[0].mxu0
  %2660 = vdwg.mxu0
  %v2661 = vsel %vm364, %v2643, -inf
  %2662 = vmax.xlane.f32.xlu0 %v2661
  %v2663 = vpop.xlane.xlu0 %2662
  %v2664 = vsel %vm364, %v2648, -inf
  %2665 = vmax.xlane.f32.xlu0 %v2664
  %v2666 = vpop.xlane.xlu0 %2665
  %v2667 = vsel %vm364, %v2653, -inf
  %2668 = vmax.xlane.f32.xlu0 %v2667
  %v2669 = vpop.xlane.xlu0 %2668
  %v2670 = vsel %vm374, %v2658, -inf
  %2671 = vmax.xlane.f32.xlu0 %v2670
  %v2672 = vpop.xlane.xlu0 %2671
  %v2673 = vsub.f32 %v2643, %v2663
  %v2674 = vsub.f32 %v2648, %v2666
  %v2675 = vsub.f32 %v2653, %v2669
  %v2676 = vsub.f32 %v2658, %v2672
  %v2677 = vmul.f32 %v2673, 1.442695
  %v2678 = vpow.pop %v2677
  %v2679 = vmul.f32 %v2674, 1.442695
  %v2680 = vpow.pop %v2679
  %v2681 = vmul.f32 %v2675, 1.442695
  %v2682 = vpow.pop %v2681
  %v2683 = vmul.f32 %v2676, 1.442695
  %v2684 = vpow.pop %v2683
  %v2685 = vsel %vm364, %v2678, 0.0
  %2686 = vadd.xlane.f32.xlu0 %v2685
  %v2687 = vpop.xlane.xlu0 %2686
  %v2688 = vsel %vm364, %v2680, 0.0
  %2689 = vadd.xlane.f32.xlu0 %v2688
  %v2690 = vpop.xlane.xlu0 %2689
  %v2691 = vsel %vm364, %v2682, 0.0
  %2692 = vadd.xlane.f32.xlu0 %v2691
  %v2693 = vpop.xlane.xlu0 %2692
  %v2694 = vsel %vm374, %v2684, 0.0
  %2695 = vadd.xlane.f32.xlu0 %v2694
  %v2696 = vpop.xlane.xlu0 %2695
  %v2697 = vrcp.pop %v2687
  %v2698 = vrcp.pop %v2690
  %v2699 = vrcp.pop %v2693
  %v2700 = vrcp.pop %v2696
  %v2701 = vmul.f32 %v2678, %v2697
  %v2702 = vmul.f32 %v2680, %v2698
  %v2703 = vmul.f32 %v2682, %v2699
  %v2704 = vmul.f32 %v2684, %v2700
  %2705 = vrot.lane.b32.xlu0 %v1988, 48
  %v2706 = vpop.permute.xlu0 %2705
  %2707 = vrot.lane.b32.xlu0 %v1993, 48
  %v2708 = vpop.permute.xlu0 %2707
  %2709 = vrot.lane.b32.xlu0 %v1998, 48
  %v2710 = vpop.permute.xlu0 %2709
  %2711 = vrot.lane.b32.xlu0 %v2003, 48
  %v2712 = vpop.permute.xlu0 %2711
  %v2717 = vsel %vm364, %v2701, 0
  %v2720 = vsel %vm364, %v2702, 0
  %v2723 = vsel %vm364, %v2703, 0
  %v2726 = vsel %vm364, %v2704, 0
  %v2728 = vsel %vm433, %v2712, 0
  %2730 = vmatprep.subr.mxu0 0.0
  %2731 = vmatpush1.msra.mxu0 %v2706
  %2732 = vmatprep.subr.mxu0 0.0
  %2733 = vmatpush1.msra.mxu0 %v2708
  %2734 = vmatprep.subr.mxu0 0.0
  %2735 = vmatpush1.msra.mxu0 %v2710
  %2736 = vmatprep.subr.mxu0 0.0
  %2737 = vmatpush1.msra.mxu0 %v2728
  %2738 = vmatprep.subr.mxu0 0.0
  %2739 = vmatpush1.msra.mxu0 0.0
  %2740 = vmatprep.subr.mxu0 0.0
  %2741 = vmatpush1.msra.mxu0 0.0
  %2742 = vmatprep.subr.mxu0 0.0
  %2743 = vmatpush1.msra.mxu0 0.0
  %2744 = vmatprep.subr.mxu0 0.0
  %2745 = vmatpush1.msra.mxu0 0.0
  %2746 = vmatprep.subr.mxu0 0.0
  %2747 = vmatpush1.msra.mxu0 0.0
  %2748 = vmatprep.subr.mxu0 0.0
  %2749 = vmatpush1.msra.mxu0 0.0
  %2750 = vmatprep.subr.mxu0 0.0
  %2751 = vmatpush1.msra.mxu0 0.0
  %2752 = vmatprep.subr.mxu0 0.0
  %2753 = vmatpush1.msra.mxu0 0.0
  %2754 = vmatprep.subr.mxu0 0.0
  %2755 = vmatpush1.msra.mxu0 0.0
  %2756 = vmatprep.subr.mxu0 0.0
  %2757 = vmatpush1.msra.mxu0 0.0
  %2758 = vmatprep.subr.mxu0 0.0
  %2759 = vmatpush1.msra.mxu0 0.0
  %2760 = vmatprep.subr.mxu0 0.0
  %2761 = vmatpush1.msra.mxu0 0.0
  %2762 = vmatprep.subr.mxu0 0.0
  %2763 = vmatpush1.msra.mxu0 0.0
  %2764 = vmatprep.subr.mxu0 0.0
  %2765 = vmatpush1.msra.mxu0 0.0
  %2766 = vmatprep.subr.mxu0 0.0
  %2767 = vmatpush1.msra.mxu0 0.0
  %2768 = vmatprep.subr.mxu0 0.0
  %2769 = vmatpush1.msra.mxu0 0.0
  %2770 = vmatprep.subr.mxu0 0.0
  %2771 = vmatpush1.msra.mxu0 0.0
  %2772 = vmatprep.subr.mxu0 0.0
  %2773 = vmatpush1.msra.mxu0 0.0
  %2774 = vmatprep.subr.mxu0 0.0
  %2775 = vmatpush1.msra.mxu0 0.0
  %2776 = vmatprep.subr.mxu0 0.0
  %2777 = vmatpush1.msra.mxu0 0.0
  %2778 = vmatprep.subr.mxu0 0.0
  %2779 = vmatpush1.msra.mxu0 0.0
  %2780 = vmatprep.subr.mxu0 0.0
  %2781 = vmatpush1.msra.mxu0 0.0
  %2782 = vmatprep.subr.mxu0 0.0
  %2783 = vmatpush1.msra.mxu0 0.0
  %2784 = vmatprep.subr.mxu0 0.0
  %2785 = vmatpush1.msra.mxu0 0.0
  %2786 = vmatprep.subr.mxu0 0.0
  %2787 = vmatpush1.msra.mxu0 0.0
  %2788 = vmatprep.subr.mxu0 0.0
  %2789 = vmatpush1.msra.mxu0 0.0
  %2790 = vmatprep.subr.mxu0 0.0
  %2791 = vmatpush1.msra.mxu0 0.0
  %2792 = vmatprep.subr.mxu0 0.0
  %2793 = vmatpush1.msra.mxu0 0.0
  %2794 = vmatprep.mubr.f32.mxu0 0.0
  %2795 = vmatmul.mubr.f32.gmra.mrb[0].mxu0 %v2717
  %v2796 = vpop.f32.mrb[0].mxu0
  %v2797 = vadd.f32 0.0, %v2796
  %v2798 = vpop.f32.mrb[0].mxu0
  %2799 = vmatprep.mubr.f32.mxu0 0.0
  %2800 = vmatmul.mubr.f32.gmra.mrb[0].mxu0 %v2720
  %v2801 = vpop.f32.mrb[0].mxu0
  %v2802 = vadd.f32 0.0, %v2801
  %v2803 = vpop.f32.mrb[0].mxu0
  %2804 = vmatprep.mubr.f32.mxu0 0.0
  %2805 = vmatmul.mubr.f32.gmra.mrb[0].mxu0 %v2723
  %v2806 = vpop.f32.mrb[0].mxu0
  %v2807 = vadd.f32 0.0, %v2806
  %v2808 = vpop.f32.mrb[0].mxu0
  %2809 = vmatprep.mubr.f32.mxu0 0.0
  %2810 = vmatmul.mubr.f32.gmra.mrb[0].mxu0 %v2726
  %v2811 = vpop.f32.mrb[0].mxu0
  %v2812 = vadd.f32 0.0, %v2811
  %v2813 = vpop.f32.mrb[0].mxu0
  %2814 = vdwg.mxu0
  %2815 = vrot.lane.b32.xlu0 %v1988, 104
  %v2816 = vpop.permute.xlu0 %2815
  %2817 = vrot.lane.b32.xlu0 %v1993, 104
  %v2818 = vpop.permute.xlu0 %2817
  %2819 = vrot.lane.b32.xlu0 %v1998, 104
  %v2820 = vpop.permute.xlu0 %2819
  %2821 = vrot.lane.b32.xlu0 %v2003, 104
  %v2822 = vpop.permute.xlu0 %2821
  %2823 = vrot.lane.b32.xlu0 %v1988, 72
  %v2824 = vpop.permute.xlu0 %2823
  %2825 = vrot.lane.b32.xlu0 %v1993, 72
  %v2826 = vpop.permute.xlu0 %2825
  %2827 = vrot.lane.b32.xlu0 %v1998, 72
  %v2828 = vpop.permute.xlu0 %2827
  %2829 = vrot.lane.b32.xlu0 %v2003, 72
  %v2830 = vpop.permute.xlu0 %2829
  %v2831 = vsel %vm262, %v2816, 0
  %v2833 = vsel %vm262, %v2818, 0
  %v2835 = vsel %vm262, %v2820, 0
  %v2837 = vsel %vm262, %v2822, 0
  %v2839 = vsel %vm262, %v2824, 0
  %v2841 = vsel %vm262, %v2826, 0
  %v2843 = vsel %vm262, %v2828, 0
  %v2845 = vsel %vm262, %v2830, 0
  %2847 = vmatprep.subr.mxu0 0.0
  %2848 = vmatpush1.xpose.msra.mxu0 %v2839
  %2849 = vmatprep.subr.mxu0 0.0
  %2850 = vmatpush1.xpose.msra.mxu0 %v2841
  %2851 = vmatprep.subr.mxu0 0.0
  %2852 = vmatpush1.xpose.msra.mxu0 %v2843
  %2853 = vmatprep.subr.mxu0 0.0
  %2854 = vmatpush1.xpose.msra.mxu0 %v2845
  %2855 = vmatprep.subr.mxu0 0.0
  %2856 = vmatpush1.xpose.msra.mxu0 0.0
  %2857 = vmatprep.subr.mxu0 0.0
  %2858 = vmatpush1.xpose.msra.mxu0 0.0
  %2859 = vmatprep.subr.mxu0 0.0
  %2860 = vmatpush1.xpose.msra.mxu0 0.0
  %2861 = vmatprep.subr.mxu0 0.0
  %2862 = vmatpush1.xpose.msra.mxu0 0.0
  %2863 = vmatprep.subr.mxu0 0.0
  %2864 = vmatpush1.xpose.msra.mxu0 0.0
  %2865 = vmatprep.subr.mxu0 0.0
  %2866 = vmatpush1.xpose.msra.mxu0 0.0
  %2867 = vmatprep.subr.mxu0 0.0
  %2868 = vmatpush1.xpose.msra.mxu0 0.0
  %2869 = vmatprep.subr.mxu0 0.0
  %2870 = vmatpush1.xpose.msra.mxu0 0.0
  %2871 = vmatprep.subr.mxu0 0.0
  %2872 = vmatpush1.xpose.msra.mxu0 0.0
  %2873 = vmatprep.subr.mxu0 0.0
  %2874 = vmatpush1.xpose.msra.mxu0 0.0
  %2875 = vmatprep.subr.mxu0 0.0
  %2876 = vmatpush1.xpose.msra.mxu0 0.0
  %2877 = vmatprep.subr.mxu0 0.0
  %2878 = vmatpush1.xpose.msra.mxu0 0.0
  %2879 = vmatprep.subr.mxu0 0.0
  %2880 = vmatpush1.xpose.msra.mxu0 0.0
  %2881 = vmatprep.subr.mxu0 0.0
  %2882 = vmatpush1.xpose.msra.mxu0 0.0
  %2883 = vmatprep.subr.mxu0 0.0
  %2884 = vmatpush1.xpose.msra.mxu0 0.0
  %2885 = vmatprep.subr.mxu0 0.0
  %2886 = vmatpush1.xpose.msra.mxu0 0.0
  %2887 = vmatprep.subr.mxu0 0.0
  %2888 = vmatpush1.xpose.msra.mxu0 0.0
  %2889 = vmatprep.subr.mxu0 0.0
  %2890 = vmatpush1.xpose.msra.mxu0 0.0
  %2891 = vmatprep.subr.mxu0 0.0
  %2892 = vmatpush1.xpose.msra.mxu0 0.0
  %2893 = vmatprep.subr.mxu0 0.0
  %2894 = vmatpush1.xpose.msra.mxu0 0.0
  %2895 = vmatprep.subr.mxu0 0.0
  %2896 = vmatpush1.xpose.msra.mxu0 0.0
  %2897 = vmatprep.subr.mxu0 0.0
  %2898 = vmatpush1.xpose.msra.mxu0 0.0
  %2899 = vmatprep.subr.mxu0 0.0
  %2900 = vmatpush1.xpose.msra.mxu0 0.0
  %2901 = vmatprep.subr.mxu0 0.0
  %2902 = vmatpush1.xpose.msra.mxu0 0.0
  %2903 = vmatprep.subr.mxu0 0.0
  %2904 = vmatpush1.xpose.msra.mxu0 0.0
  %2905 = vmatprep.subr.mxu0 0.0
  %2906 = vmatpush1.xpose.msra.mxu0 0.0
  %2907 = vmatprep.subr.mxu0 0.0
  %2908 = vmatpush1.xpose.msra.mxu0 0.0
  %2909 = vmatprep.subr.mxu0 0.0
  %2910 = vmatpush1.xpose.msra.mxu0 0.0
  %2911 = vmatprep.mubr.f32.mxu0 0.0
  %2912 = vmatmul.mubr.f32.gmra.mrb[0].mxu0 %v2831
  %v2913 = vpop.f32.mrb[0].mxu0
  %v2914 = vadd.f32 %v140, %v2913
  %v2915 = vpop.f32.mrb[0].mxu0
  %2916 = vmatprep.mubr.f32.mxu0 0.0
  %2917 = vmatmul.mubr.f32.gmra.mrb[0].mxu0 %v2833
  %v2918 = vpop.f32.mrb[0].mxu0
  %v2919 = vadd.f32 %v141, %v2918
  %v2920 = vpop.f32.mrb[0].mxu0
  %2921 = vmatprep.mubr.f32.mxu0 0.0
  %2922 = vmatmul.mubr.f32.gmra.mrb[0].mxu0 %v2835
  %v2923 = vpop.f32.mrb[0].mxu0
  %v2924 = vadd.f32 %v142, %v2923
  %v2925 = vpop.f32.mrb[0].mxu0
  %2926 = vmatprep.mubr.f32.mxu0 0.0
  %2927 = vmatmul.mubr.f32.gmra.mrb[0].mxu0 %v2837
  %v2928 = vpop.f32.mrb[0].mxu0
  %v2929 = vadd.f32 %v143, %v2928
  %v2930 = vpop.f32.mrb[0].mxu0
  %2931 = vdwg.mxu0
  %v2932 = vsel %vm364, %v2914, -inf
  %2933 = vmax.xlane.f32.xlu0 %v2932
  %v2934 = vpop.xlane.xlu0 %2933
  %v2935 = vsel %vm364, %v2919, -inf
  %2936 = vmax.xlane.f32.xlu0 %v2935
  %v2937 = vpop.xlane.xlu0 %2936
  %v2938 = vsel %vm364, %v2924, -inf
  %2939 = vmax.xlane.f32.xlu0 %v2938
  %v2940 = vpop.xlane.xlu0 %2939
  %v2941 = vsel %vm374, %v2929, -inf
  %2942 = vmax.xlane.f32.xlu0 %v2941
  %v2943 = vpop.xlane.xlu0 %2942
  %v2944 = vsub.f32 %v2914, %v2934
  %v2945 = vsub.f32 %v2919, %v2937
  %v2946 = vsub.f32 %v2924, %v2940
  %v2947 = vsub.f32 %v2929, %v2943
  %v2948 = vmul.f32 %v2944, 1.442695
  %v2949 = vpow.pop %v2948
  %v2950 = vmul.f32 %v2945, 1.442695
  %v2951 = vpow.pop %v2950
  %v2952 = vmul.f32 %v2946, 1.442695
  %v2953 = vpow.pop %v2952
  %v2954 = vmul.f32 %v2947, 1.442695
  %v2955 = vpow.pop %v2954
  %v2956 = vsel %vm364, %v2949, 0.0
  %2957 = vadd.xlane.f32.xlu0 %v2956
  %v2958 = vpop.xlane.xlu0 %2957
  %v2959 = vsel %vm364, %v2951, 0.0
  %2960 = vadd.xlane.f32.xlu0 %v2959
  %v2961 = vpop.xlane.xlu0 %2960
  %v2962 = vsel %vm364, %v2953, 0.0
  %2963 = vadd.xlane.f32.xlu0 %v2962
  %v2964 = vpop.xlane.xlu0 %2963
  %v2965 = vsel %vm374, %v2955, 0.0
  %2966 = vadd.xlane.f32.xlu0 %v2965
  %v2967 = vpop.xlane.xlu0 %2966
  %v2968 = vrcp.pop %v2958
  %v2969 = vrcp.pop %v2961
  %v2970 = vrcp.pop %v2964
  %v2971 = vrcp.pop %v2967
  %v2972 = vmul.f32 %v2949, %v2968
  %v2973 = vmul.f32 %v2951, %v2969
  %v2974 = vmul.f32 %v2953, %v2970
  %v2975 = vmul.f32 %v2955, %v2971
  %2976 = vrot.lane.b32.xlu0 %v1988, 40
  %v2977 = vpop.permute.xlu0 %2976
  %2978 = vrot.lane.b32.xlu0 %v1993, 40
  %v2979 = vpop.permute.xlu0 %2978
  %2980 = vrot.lane.b32.xlu0 %v1998, 40
  %v2981 = vpop.permute.xlu0 %2980
  %2982 = vrot.lane.b32.xlu0 %v2003, 40
  %v2983 = vpop.permute.xlu0 %2982
  %v2988 = vsel %vm364, %v2972, 0
  %v2991 = vsel %vm364, %v2973, 0
  %v2994 = vsel %vm364, %v2974, 0
  %v2997 = vsel %vm364, %v2975, 0
  %v2999 = vsel %vm433, %v2983, 0
  %3001 = vmatprep.subr.mxu0 0.0
  %3002 = vmatpush1.msra.mxu0 %v2977
  %3003 = vmatprep.subr.mxu0 0.0
  %3004 = vmatpush1.msra.mxu0 %v2979
  %3005 = vmatprep.subr.mxu0 0.0
  %3006 = vmatpush1.msra.mxu0 %v2981
  %3007 = vmatprep.subr.mxu0 0.0
  %3008 = vmatpush1.msra.mxu0 %v2999
  %3009 = vmatprep.subr.mxu0 0.0
  %3010 = vmatpush1.msra.mxu0 0.0
  %3011 = vmatprep.subr.mxu0 0.0
  %3012 = vmatpush1.msra.mxu0 0.0
  %3013 = vmatprep.subr.mxu0 0.0
  %3014 = vmatpush1.msra.mxu0 0.0
  %3015 = vmatprep.subr.mxu0 0.0
  %3016 = vmatpush1.msra.mxu0 0.0
  %3017 = vmatprep.subr.mxu0 0.0
  %3018 = vmatpush1.msra.mxu0 0.0
  %3019 = vmatprep.subr.mxu0 0.0
  %3020 = vmatpush1.msra.mxu0 0.0
  %3021 = vmatprep.subr.mxu0 0.0
  %3022 = vmatpush1.msra.mxu0 0.0
  %3023 = vmatprep.subr.mxu0 0.0
  %3024 = vmatpush1.msra.mxu0 0.0
  %3025 = vmatprep.subr.mxu0 0.0
  %3026 = vmatpush1.msra.mxu0 0.0
  %3027 = vmatprep.subr.mxu0 0.0
  %3028 = vmatpush1.msra.mxu0 0.0
  %3029 = vmatprep.subr.mxu0 0.0
  %3030 = vmatpush1.msra.mxu0 0.0
  %3031 = vmatprep.subr.mxu0 0.0
  %3032 = vmatpush1.msra.mxu0 0.0
  %3033 = vmatprep.subr.mxu0 0.0
  %3034 = vmatpush1.msra.mxu0 0.0
  %3035 = vmatprep.subr.mxu0 0.0
  %3036 = vmatpush1.msra.mxu0 0.0
  %3037 = vmatprep.subr.mxu0 0.0
  %3038 = vmatpush1.msra.mxu0 0.0
  %3039 = vmatprep.subr.mxu0 0.0
  %3040 = vmatpush1.msra.mxu0 0.0
  %3041 = vmatprep.subr.mxu0 0.0
  %3042 = vmatpush1.msra.mxu0 0.0
  %3043 = vmatprep.subr.mxu0 0.0
  %3044 = vmatpush1.msra.mxu0 0.0
  %3045 = vmatprep.subr.mxu0 0.0
  %3046 = vmatpush1.msra.mxu0 0.0
  %3047 = vmatprep.subr.mxu0 0.0
  %3048 = vmatpush1.msra.mxu0 0.0
  %3049 = vmatprep.subr.mxu0 0.0
  %3050 = vmatpush1.msra.mxu0 0.0
  %3051 = vmatprep.subr.mxu0 0.0
  %3052 = vmatpush1.msra.mxu0 0.0
  %3053 = vmatprep.subr.mxu0 0.0
  %3054 = vmatpush1.msra.mxu0 0.0
  %3055 = vmatprep.subr.mxu0 0.0
  %3056 = vmatpush1.msra.mxu0 0.0
  %3057 = vmatprep.subr.mxu0 0.0
  %3058 = vmatpush1.msra.mxu0 0.0
  %3059 = vmatprep.subr.mxu0 0.0
  %3060 = vmatpush1.msra.mxu0 0.0
  %3061 = vmatprep.subr.mxu0 0.0
  %3062 = vmatpush1.msra.mxu0 0.0
  %3063 = vmatprep.subr.mxu0 0.0
  %3064 = vmatpush1.msra.mxu0 0.0
  %3065 = vmatprep.mubr.f32.mxu0 0.0
  %3066 = vmatmul.mubr.f32.gmra.mrb[0].mxu0 %v2988
  %v3067 = vpop.f32.mrb[0].mxu0
  %v3068 = vadd.f32 0.0, %v3067
  %v3069 = vpop.f32.mrb[0].mxu0
  %3070 = vmatprep.mubr.f32.mxu0 0.0
  %3071 = vmatmul.mubr.f32.gmra.mrb[0].mxu0 %v2991
  %v3072 = vpop.f32.mrb[0].mxu0
  %v3073 = vadd.f32 0.0, %v3072
  %v3074 = vpop.f32.mrb[0].mxu0
  %3075 = vmatprep.mubr.f32.mxu0 0.0
  %3076 = vmatmul.mubr.f32.gmra.mrb[0].mxu0 %v2994
  %v3077 = vpop.f32.mrb[0].mxu0
  %v3078 = vadd.f32 0.0, %v3077
  %v3079 = vpop.f32.mrb[0].mxu0
  %3080 = vmatprep.mubr.f32.mxu0 0.0
  %3081 = vmatmul.mubr.f32.gmra.mrb[0].mxu0 %v2997
  %v3082 = vpop.f32.mrb[0].mxu0
  %v3083 = vadd.f32 0.0, %v3082
  %v3084 = vpop.f32.mrb[0].mxu0
  %3085 = vdwg.mxu0
  %3090 = vrot.lane.b32.xlu0 %v2526, 8
  %v3091 = vpop.permute.xlu0 %3090
  %3092 = vrot.lane.b32.xlu0 %v2531, 8
  %v3093 = vpop.permute.xlu0 %3092
  %3094 = vrot.lane.b32.xlu0 %v2536, 8
  %v3095 = vpop.permute.xlu0 %3094
  %3096 = vrot.lane.b32.xlu0 %v2541, 8
  %v3097 = vpop.permute.xlu0 %3096
  %3106 = vrot.lane.b32.xlu0 %v2797, 16
  %v3107 = vpop.permute.xlu0 %3106
  %3108 = vrot.lane.b32.xlu0 %v2802, 16
  %v3109 = vpop.permute.xlu0 %3108
  %3110 = vrot.lane.b32.xlu0 %v2807, 16
  %v3111 = vpop.permute.xlu0 %3110
  %3112 = vrot.lane.b32.xlu0 %v2812, 16
  %v3113 = vpop.permute.xlu0 %3112
  %3122 = vrot.lane.b32.xlu0 %v3068, 24
  %v3123 = vpop.permute.xlu0 %3122
  %3124 = vrot.lane.b32.xlu0 %v3073, 24
  %v3125 = vpop.permute.xlu0 %3124
  %3126 = vrot.lane.b32.xlu0 %v3078, 24
  %v3127 = vpop.permute.xlu0 %3126
  %3128 = vrot.lane.b32.xlu0 %v3083, 24
  %v3129 = vpop.permute.xlu0 %3128
  %v3134 = vsel %vm262, %v2255, %v3091
  %v3135 = vsel %vm262, %v2260, %v3093
  %v3136 = vsel %vm262, %v2265, %v3095
  %v3137 = vsel %vm262, %v2270, %v3097
  %v3138 = vsel %vm1386, %v3134, %v3107
  %v3139 = vsel %vm1386, %v3135, %v3109
  %v3140 = vsel %vm1386, %v3136, %v3111
  %v3141 = vsel %vm1386, %v3137, %v3113
  %v3142 = vsel %vm1391, %v3138, %v3123
  %v3143 = vsel %vm1391, %v3139, %v3125
  %v3144 = vsel %vm1391, %v3140, %v3127
  %v3145 = vsel %vm1391, %v3141, %v3129
  %v3146 = vld [vmem:[%s1 + $0x1c8] sm:$0xff]
  %v3147 = vld [vmem:[%s1 + $0x1d0] sm:$0xff]
  %v3148 = vld [vmem:[%s1 + $0x1d8] sm:$0xff]
  %v3149 = vld [vmem:[%s1 + $0x1e0] sm:$0xff]
  %v3150 = vld [vmem:[%s1 + $0x1e8] sm:$0x1]
  %v3151 = vlaneseq
  %v3152 = vshrl.u32 %v3151, 7
  %v3153 = vsub.s32 0, %v3152
  %v3154 = vrot.slane %v3150, %v3153
  %v3156 = vsel %vm30, %v3142, 0
  %v3159 = vsel %vm30, %v3143, 0
  %v3162 = vsel %vm30, %v3144, 0
  %v3165 = vsel %vm30, %v3145, 0
  %3167 = vmatprep.subr.mxu0 0.0
  %3168 = vmatpush1.msra.mxu0 %v3146
  %3169 = vmatprep.subr.mxu0 0.0
  %3170 = vmatpush1.msra.mxu0 %v3147
  %3171 = vmatprep.subr.mxu0 0.0
  %3172 = vmatpush1.msra.mxu0 %v3148
  %3173 = vmatprep.subr.mxu0 0.0
  %3174 = vmatpush1.msra.mxu0 %v3149
  %3175 = vmatprep.subr.mxu0 0.0
  %3176 = vmatpush1.msra.mxu0 0.0
  %3177 = vmatprep.subr.mxu0 0.0
  %3178 = vmatpush1.msra.mxu0 0.0
  %3179 = vmatprep.subr.mxu0 0.0
  %3180 = vmatpush1.msra.mxu0 0.0
  %3181 = vmatprep.subr.mxu0 0.0
  %3182 = vmatpush1.msra.mxu0 0.0
  %3183 = vmatprep.subr.mxu0 0.0
  %3184 = vmatpush1.msra.mxu0 0.0
  %3185 = vmatprep.subr.mxu0 0.0
  %3186 = vmatpush1.msra.mxu0 0.0
  %3187 = vmatprep.subr.mxu0 0.0
  %3188 = vmatpush1.msra.mxu0 0.0
  %3189 = vmatprep.subr.mxu0 0.0
  %3190 = vmatpush1.msra.mxu0 0.0
  %3191 = vmatprep.subr.mxu0 0.0
  %3192 = vmatpush1.msra.mxu0 0.0
  %3193 = vmatprep.subr.mxu0 0.0
  %3194 = vmatpush1.msra.mxu0 0.0
  %3195 = vmatprep.subr.mxu0 0.0
  %3196 = vmatpush1.msra.mxu0 0.0
  %3197 = vmatprep.subr.mxu0 0.0
  %3198 = vmatpush1.msra.mxu0 0.0
  %3199 = vmatprep.subr.mxu0 0.0
  %3200 = vmatpush1.msra.mxu0 0.0
  %3201 = vmatprep.subr.mxu0 0.0
  %3202 = vmatpush1.msra.mxu0 0.0
  %3203 = vmatprep.subr.mxu0 0.0
  %3204 = vmatpush1.msra.mxu0 0.0
  %3205 = vmatprep.subr.mxu0 0.0
  %3206 = vmatpush1.msra.mxu0 0.0
  %3207 = vmatprep.subr.mxu0 0.0
  %3208 = vmatpush1.msra.mxu0 0.0
  %3209 = vmatprep.subr.mxu0 0.0
  %3210 = vmatpush1.msra.mxu0 0.0
  %3211 = vmatprep.subr.mxu0 0.0
  %3212 = vmatpush1.msra.mxu0 0.0
  %3213 = vmatprep.subr.mxu0 0.0
  %3214 = vmatpush1.msra.mxu0 0.0
  %3215 = vmatprep.subr.mxu0 0.0
  %3216 = vmatpush1.msra.mxu0 0.0
  %3217 = vmatprep.subr.mxu0 0.0
  %3218 = vmatpush1.msra.mxu0 0.0
  %3219 = vmatprep.subr.mxu0 0.0
  %3220 = vmatpush1.msra.mxu0 0.0
  %3221 = vmatprep.subr.mxu0 0.0
  %3222 = vmatpush1.msra.mxu0 0.0
  %3223 = vmatprep.subr.mxu0 0.0
  %3224 = vmatpush1.msra.mxu0 0.0
  %3225 = vmatprep.subr.mxu0 0.0
  %3226 = vmatpush1.msra.mxu0 0.0
  %3227 = vmatprep.subr.mxu0 0.0
  %3228 = vmatpush1.msra.mxu0 0.0
  %3229 = vmatprep.subr.mxu0 0.0
  %3230 = vmatpush1.msra.mxu0 0.0
  %3231 = vmatprep.mubr.f32.mxu0 0.0
  %3232 = vmatmul.mubr.f32.gmra.mrb[0].mxu0 %v3156
  %v3233 = vpop.f32.mrb[0].mxu0
  %v3234 = vadd.f32 %v3154, %v3233
  %v3235 = vpop.f32.mrb[0].mxu0
  %3236 = vmatprep.mubr.f32.mxu0 0.0
  %3237 = vmatmul.mubr.f32.gmra.mrb[0].mxu0 %v3159
  %v3238 = vpop.f32.mrb[0].mxu0
  %v3239 = vadd.f32 %v3154, %v3238
  %v3240 = vpop.f32.mrb[0].mxu0
  %3241 = vmatprep.mubr.f32.mxu0 0.0
  %3242 = vmatmul.mubr.f32.gmra.mrb[0].mxu0 %v3162
  %v3243 = vpop.f32.mrb[0].mxu0
  %v3244 = vadd.f32 %v3154, %v3243
  %v3245 = vpop.f32.mrb[0].mxu0
  %3246 = vmatprep.mubr.f32.mxu0 0.0
  %3247 = vmatmul.mubr.f32.gmra.mrb[0].mxu0 %v3165
  %v3248 = vpop.f32.mrb[0].mxu0
  %v3249 = vadd.f32 %v3154, %v3248
  %v3250 = vpop.f32.mrb[0].mxu0
  %3251 = vdwg.mxu0
  %v3252 = vadd.f32 %v1896, %v3234
  %v3253 = vadd.f32 %v1897, %v3239
  %v3254 = vadd.f32 %v1898, %v3244
  %v3255 = vadd.f32 %v1899, %v3249
  %v3256 = vld [vmem:[%s1 + $0x1f0] sm:$0x1]
  %v3257 = vld [vmem:[%s1 + $0x1f8] sm:$0x1]
  %v3258 = vsel %vm30, %v3252, 0.0
  %3259 = vadd.xlane.f32.xlu0 %v3258
  %v3260 = vpop.xlane.xlu0 %3259
  %v3261 = vsel %vm30, %v3253, 0.0
  %3262 = vadd.xlane.f32.xlu0 %v3261
  %v3263 = vpop.xlane.xlu0 %3262
  %v3264 = vsel %vm30, %v3254, 0.0
  %3265 = vadd.xlane.f32.xlu0 %v3264
  %v3266 = vpop.xlane.xlu0 %3265
  %v3267 = vsel %vm1517, %v3255, 0.0
  %3268 = vadd.xlane.f32.xlu0 %v3267
  %v3269 = vpop.xlane.xlu0 %3268
  %v3270 = vmul.f32 %v3260, %v1521
  %v3271 = vmul.f32 %v3263, %v1521
  %v3272 = vmul.f32 %v3266, %v1521
  %v3273 = vmul.f32 %v3269, %v1521
  %v3274 = vsub.f32 %v3252, %v3270
  %v3275 = vsub.f32 %v3253, %v3271
  %v3276 = vsub.f32 %v3254, %v3272
  %v3277 = vsub.f32 %v3255, %v3273
  %v3278 = vmul.f32 %v3274, %v3274
  %v3279 = vmul.f32 %v3275, %v3275
  %v3280 = vmul.f32 %v3276, %v3276
  %v3281 = vmul.f32 %v3277, %v3277
  %v3282 = vsel %vm30, %v3278, 0.0
  %3283 = vadd.xlane.f32.xlu0 %v3282
  %v3284 = vpop.xlane.xlu0 %3283
  %v3285 = vsel %vm30, %v3279, 0.0
  %3286 = vadd.xlane.f32.xlu0 %v3285
  %v3287 = vpop.xlane.xlu0 %3286
  %v3288 = vsel %vm30, %v3280, 0.0
  %3289 = vadd.xlane.f32.xlu0 %v3288
  %v3290 = vpop.xlane.xlu0 %3289
  %v3291 = vsel %vm1517, %v3281, 0.0
  %3292 = vadd.xlane.f32.xlu0 %v3291
  %v3293 = vpop.xlane.xlu0 %3292
  %v3294 = vmul.f32 %v3284, %v1521
  %v3295 = vmul.f32 %v3287, %v1521
  %v3296 = vmul.f32 %v3290, %v1521
  %v3297 = vmul.f32 %v3293, %v1521
  %v3298 = vadd.f32 %v3294, 1e-05
  %v3299 = vadd.f32 %v3295, 1e-05
  %v3300 = vadd.f32 %v3296, 1e-05
  %v3301 = vadd.f32 %v3297, 1e-05
  %v3302 = vrsqrt.pop %v3298
  %v3303 = vrsqrt.pop %v3299
  %v3304 = vrsqrt.pop %v3300
  %v3305 = vrsqrt.pop %v3301
  %v3306 = vmul.f32 %v3274, %v3302
  %v3307 = vmul.f32 %v3275, %v3303
  %v3308 = vmul.f32 %v3276, %v3304
  %v3309 = vmul.f32 %v3277, %v3305
  %v3310 = vlaneseq
  %v3311 = vshrl.u32 %v3310, 7
  %v3312 = vsub.s32 0, %v3311
  %v3313 = vrot.slane %v3256, %v3312
  %v3314 = vmul.f32 %v3306, %v3313
  %v3315 = vmul.f32 %v3307, %v3313
  %v3316 = vmul.f32 %v3308, %v3313
  %v3317 = vmul.f32 %v3309, %v3313
  %v3318 = vlaneseq
  %v3319 = vshrl.u32 %v3318, 7
  %v3320 = vsub.s32 0, %v3319
  %v3321 = vrot.slane %v3257, %v3320
  %v3322 = vadd.f32 %v3314, %v3321
  %v3323 = vadd.f32 %v3315, %v3321
  %v3324 = vadd.f32 %v3316, %v3321
  %v3325 = vadd.f32 %v3317, %v3321
  %v3326 = vld [vmem:[%s1 + $0x200] sm:$0xff]
  %v3327 = vld [vmem:[%s1 + $0x208] sm:$0xff]
  %v3328 = vld [vmem:[%s1 + $0x210] sm:$0xff]
  %v3329 = vld [vmem:[%s1 + $0x218] sm:$0xff]
  %v3330 = vld [vmem:[%s1 + $0x220] sm:$0x1]
  %v3331 = vlaneseq
  %v3332 = vshrl.u32 %v3331, 7
  %v3333 = vsub.s32 0, %v3332
  %v3334 = vrot.slane %v3330, %v3333
  %v3336 = vsel %vm30, %v3322, 0
  %v3339 = vsel %vm30, %v3323, 0
  %v3342 = vsel %vm30, %v3324, 0
  %v3345 = vsel %vm30, %v3325, 0
  %3347 = vmatprep.subr.mxu0 0.0
  %3348 = vmatpush1.msra.mxu0 %v3326
  %3349 = vmatprep.subr.mxu0 0.0
  %3350 = vmatpush1.msra.mxu0 %v3327
  %3351 = vmatprep.subr.mxu0 0.0
  %3352 = vmatpush1.msra.mxu0 %v3328
  %3353 = vmatprep.subr.mxu0 0.0
  %3354 = vmatpush1.msra.mxu0 %v3329
  %3355 = vmatprep.subr.mxu0 0.0
  %3356 = vmatpush1.msra.mxu0 0.0
  %3357 = vmatprep.subr.mxu0 0.0
  %3358 = vmatpush1.msra.mxu0 0.0
  %3359 = vmatprep.subr.mxu0 0.0
  %3360 = vmatpush1.msra.mxu0 0.0
  %3361 = vmatprep.subr.mxu0 0.0
  %3362 = vmatpush1.msra.mxu0 0.0
  %3363 = vmatprep.subr.mxu0 0.0
  %3364 = vmatpush1.msra.mxu0 0.0
  %3365 = vmatprep.subr.mxu0 0.0
  %3366 = vmatpush1.msra.mxu0 0.0
  %3367 = vmatprep.subr.mxu0 0.0
  %3368 = vmatpush1.msra.mxu0 0.0
  %3369 = vmatprep.subr.mxu0 0.0
  %3370 = vmatpush1.msra.mxu0 0.0
  %3371 = vmatprep.subr.mxu0 0.0
  %3372 = vmatpush1.msra.mxu0 0.0
  %3373 = vmatprep.subr.mxu0 0.0
  %3374 = vmatpush1.msra.mxu0 0.0
  %3375 = vmatprep.subr.mxu0 0.0
  %3376 = vmatpush1.msra.mxu0 0.0
  %3377 = vmatprep.subr.mxu0 0.0
  %3378 = vmatpush1.msra.mxu0 0.0
  %3379 = vmatprep.subr.mxu0 0.0
  %3380 = vmatpush1.msra.mxu0 0.0
  %3381 = vmatprep.subr.mxu0 0.0
  %3382 = vmatpush1.msra.mxu0 0.0
  %3383 = vmatprep.subr.mxu0 0.0
  %3384 = vmatpush1.msra.mxu0 0.0
  %3385 = vmatprep.subr.mxu0 0.0
  %3386 = vmatpush1.msra.mxu0 0.0
  %3387 = vmatprep.subr.mxu0 0.0
  %3388 = vmatpush1.msra.mxu0 0.0
  %3389 = vmatprep.subr.mxu0 0.0
  %3390 = vmatpush1.msra.mxu0 0.0
  %3391 = vmatprep.subr.mxu0 0.0
  %3392 = vmatpush1.msra.mxu0 0.0
  %3393 = vmatprep.subr.mxu0 0.0
  %3394 = vmatpush1.msra.mxu0 0.0
  %3395 = vmatprep.subr.mxu0 0.0
  %3396 = vmatpush1.msra.mxu0 0.0
  %3397 = vmatprep.subr.mxu0 0.0
  %3398 = vmatpush1.msra.mxu0 0.0
  %3399 = vmatprep.subr.mxu0 0.0
  %3400 = vmatpush1.msra.mxu0 0.0
  %3401 = vmatprep.subr.mxu0 0.0
  %3402 = vmatpush1.msra.mxu0 0.0
  %3403 = vmatprep.subr.mxu0 0.0
  %3404 = vmatpush1.msra.mxu0 0.0
  %3405 = vmatprep.subr.mxu0 0.0
  %3406 = vmatpush1.msra.mxu0 0.0
  %3407 = vmatprep.subr.mxu0 0.0
  %3408 = vmatpush1.msra.mxu0 0.0
  %3409 = vmatprep.subr.mxu0 0.0
  %3410 = vmatpush1.msra.mxu0 0.0
  %3411 = vmatprep.mubr.f32.mxu0 0.0
  %3412 = vmatmul.mubr.f32.gmra.mrb[0].mxu0 %v3336
  %v3413 = vpop.f32.mrb[0].mxu0
  %v3414 = vadd.f32 %v3334, %v3413
  %v3415 = vpop.f32.mrb[0].mxu0
  %3416 = vmatprep.mubr.f32.mxu0 0.0
  %3417 = vmatmul.mubr.f32.gmra.mrb[0].mxu0 %v3339
  %v3418 = vpop.f32.mrb[0].mxu0
  %v3419 = vadd.f32 %v3334, %v3418
  %v3420 = vpop.f32.mrb[0].mxu0
  %3421 = vmatprep.mubr.f32.mxu0 0.0
  %3422 = vmatmul.mubr.f32.gmra.mrb[0].mxu0 %v3342
  %v3423 = vpop.f32.mrb[0].mxu0
  %v3424 = vadd.f32 %v3334, %v3423
  %v3425 = vpop.f32.mrb[0].mxu0
  %3426 = vmatprep.mubr.f32.mxu0 0.0
  %3427 = vmatmul.mubr.f32.gmra.mrb[0].mxu0 %v3345
  %v3428 = vpop.f32.mrb[0].mxu0
  %v3429 = vadd.f32 %v3334, %v3428
  %v3430 = vpop.f32.mrb[0].mxu0
  %3431 = vdwg.mxu0
  %v3432 = vmul.f32 %v3414, %v3414
  %v3433 = vmul.f32 %v3419, %v3419
  %v3434 = vmul.f32 %v3424, %v3424
  %v3435 = vmul.f32 %v3429, %v3429
  %v3436 = vmul.f32 %v3414, %v3432
  %v3437 = vmul.f32 %v3419, %v3433
  %v3438 = vmul.f32 %v3424, %v3434
  %v3439 = vmul.f32 %v3429, %v3435
  %v3440 = vmul.f32 %v3436, 0.044715
  %v3441 = vmul.f32 %v3437, 0.044715
  %v3442 = vmul.f32 %v3438, 0.044715
  %v3443 = vmul.f32 %v3439, 0.044715
  %v3444 = vadd.f32 %v3414, %v3440
  %v3445 = vadd.f32 %v3419, %v3441
  %v3446 = vadd.f32 %v3424, %v3442
  %v3447 = vadd.f32 %v3429, %v3443
  %v3448 = vmul.f32 %v3444, 0.7978846
  %v3449 = vmul.f32 %v3445, 0.7978846
  %v3450 = vmul.f32 %v3446, 0.7978846
  %v3451 = vmul.f32 %v3447, 0.7978846
  %v3452 = vtanh.pop %v3448
  %v3453 = vtanh.pop %v3449
  %v3454 = vtanh.pop %v3450
  %v3455 = vtanh.pop %v3451
  %v3456 = vadd.f32 %v3452, 1.0
  %v3457 = vadd.f32 %v3453, 1.0
  %v3458 = vadd.f32 %v3454, 1.0
  %v3459 = vadd.f32 %v3455, 1.0
  %v3460 = vmul.f32 %v3456, 0.5
  %v3461 = vmul.f32 %v3457, 0.5
  %v3462 = vmul.f32 %v3458, 0.5
  %v3463 = vmul.f32 %v3459, 0.5
  %v3464 = vmul.f32 %v3414, %v3460
  %v3465 = vmul.f32 %v3419, %v3461
  %v3466 = vmul.f32 %v3424, %v3462
  %v3467 = vmul.f32 %v3429, %v3463
  %v3468 = vld [vmem:[%s1 + $0x228] sm:$0xff]
  %v3469 = vld [vmem:[%s1 + $0x230] sm:$0xff]
  %v3470 = vld [vmem:[%s1 + $0x238] sm:$0xff]
  %v3471 = vld [vmem:[%s1 + $0x240] sm:$0xff]
  %v3472 = vld [vmem:[%s1 + $0x248] sm:$0xff]
  %v3473 = vld [vmem:[%s1 + $0x250] sm:$0xff]
  %v3474 = vld [vmem:[%s1 + $0x258] sm:$0xff]
  %v3475 = vld [vmem:[%s1 + $0x260] sm:$0xff]
  %v3476 = vld [vmem:[%s1 + $0x268] sm:$0xff]
  %v3477 = vld [vmem:[%s1 + $0x270] sm:$0xff]
  %v3478 = vld [vmem:[%s1 + $0x278] sm:$0xff]
  %v3479 = vld [vmem:[%s1 + $0x280] sm:$0xff]
  %v3480 = vld [vmem:[%s1 + $0x288] sm:$0xff]
  %v3481 = vld [vmem:[%s1 + $0x290] sm:$0xff]
  %v3482 = vld [vmem:[%s1 + $0x298] sm:$0xff]
  %v3483 = vld [vmem:[%s1 + $0x2a0] sm:$0xff]
  %v3484 = vld [vmem:[%s1 + $0x2a8] sm:$0x1]
  %v3485 = vlaneseq
  %v3486 = vshrl.u32 %v3485, 7
  %v3487 = vsub.s32 0, %v3486
  %v3488 = vrot.slane %v3484, %v3487
  %3489 = vmatprep.subr.mxu0 0.0
  %3490 = vmatpush1.msra.mxu0 %v3468
  %3491 = vmatprep.subr.mxu0 0.0
  %3492 = vmatpush1.msra.mxu0 %v3469
  %3493 = vmatprep.subr.mxu0 0.0
  %3494 = vmatpush1.msra.mxu0 %v3470
  %3495 = vmatprep.subr.mxu0 0.0
  %3496 = vmatpush1.msra.mxu0 %v3471
  %3497 = vmatprep.subr.mxu0 0.0
  %3498 = vmatpush1.msra.mxu0 %v3472
  %3499 = vmatprep.subr.mxu0 0.0
  %3500 = vmatpush1.msra.mxu0 %v3473
  %3501 = vmatprep.subr.mxu0 0.0
  %3502 = vmatpush1.msra.mxu0 %v3474
  %3503 = vmatprep.subr.mxu0 0.0
  %3504 = vmatpush1.msra.mxu0 %v3475
  %3505 = vmatprep.subr.mxu0 0.0
  %3506 = vmatpush1.msra.mxu0 %v3476
  %3507 = vmatprep.subr.mxu0 0.0
  %3508 = vmatpush1.msra.mxu0 %v3477
  %3509 = vmatprep.subr.mxu0 0.0
  %3510 = vmatpush1.msra.mxu0 %v3478
  %3511 = vmatprep.subr.mxu0 0.0
  %3512 = vmatpush1.msra.mxu0 %v3479
  %3513 = vmatprep.subr.mxu0 0.0
  %3514 = vmatpush1.msra.mxu0 %v3480
  %3515 = vmatprep.subr.mxu0 0.0
  %3516 = vmatpush1.msra.mxu0 %v3481
  %3517 = vmatprep.subr.mxu0 0.0
  %3518 = vmatpush1.msra.mxu0 %v3482
  %3519 = vmatprep.subr.mxu0 0.0
  %3520 = vmatpush1.msra.mxu0 %v3483
  %3521 = vmatprep.subr.mxu0 0.0
  %3522 = vmatpush1.msra.mxu0 0.0
  %3523 = vmatprep.subr.mxu0 0.0
  %3524 = vmatpush1.msra.mxu0 0.0
  %3525 = vmatprep.subr.mxu0 0.0
  %3526 = vmatpush1.msra.mxu0 0.0
  %3527 = vmatprep.subr.mxu0 0.0
  %3528 = vmatpush1.msra.mxu0 0.0
  %3529 = vmatprep.subr.mxu0 0.0
  %3530 = vmatpush1.msra.mxu0 0.0
  %3531 = vmatprep.subr.mxu0 0.0
  %3532 = vmatpush1.msra.mxu0 0.0
  %3533 = vmatprep.subr.mxu0 0.0
  %3534 = vmatpush1.msra.mxu0 0.0
  %3535 = vmatprep.subr.mxu0 0.0
  %3536 = vmatpush1.msra.mxu0 0.0
  %3537 = vmatprep.subr.mxu0 0.0
  %3538 = vmatpush1.msra.mxu0 0.0
  %3539 = vmatprep.subr.mxu0 0.0
  %3540 = vmatpush1.msra.mxu0 0.0
  %3541 = vmatprep.subr.mxu0 0.0
  %3542 = vmatpush1.msra.mxu0 0.0
  %3543 = vmatprep.subr.mxu0 0.0
  %3544 = vmatpush1.msra.mxu0 0.0
  %3545 = vmatprep.subr.mxu0 0.0
  %3546 = vmatpush1.msra.mxu0 0.0
  %3547 = vmatprep.subr.mxu0 0.0
  %3548 = vmatpush1.msra.mxu0 0.0
  %3549 = vmatprep.subr.mxu0 0.0
  %3550 = vmatpush1.msra.mxu0 0.0
  %3551 = vmatprep.subr.mxu0 0.0
  %3552 = vmatpush1.msra.mxu0 0.0
  %3553 = vmatprep.mubr.f32.mxu0 0.0
  %3554 = vmatmul.mubr.f32.gmra.mrb[0].mxu0 %v3464
  %v3555 = vpop.f32.mrb[0].mxu0
  %v3556 = vadd.f32 %v3488, %v3555
  %v3557 = vpop.f32.mrb[0].mxu0
  %3558 = vmatprep.mubr.f32.mxu0 0.0
  %3559 = vmatmul.mubr.f32.gmra.mrb[0].mxu0 %v3465
  %v3560 = vpop.f32.mrb[0].mxu0
  %v3561 = vadd.f32 %v3488, %v3560
  %v3562 = vpop.f32.mrb[0].mxu0
  %3563 = vmatprep.mubr.f32.mxu0 0.0
  %3564 = vmatmul.mubr.f32.gmra.mrb[0].mxu0 %v3466
  %v3565 = vpop.f32.mrb[0].mxu0
  %v3566 = vadd.f32 %v3488, %v3565
  %v3567 = vpop.f32.mrb[0].mxu0
  %3568 = vmatprep.mubr.f32.mxu0 0.0
  %3569 = vmatmul.mubr.f32.gmra.mrb[0].mxu0 %v3467
  %v3570 = vpop.f32.mrb[0].mxu0
  %v3571 = vadd.f32 %v3488, %v3570
  %v3572 = vpop.f32.mrb[0].mxu0
  %3573 = vdwg.mxu0
  %v3574 = vadd.f32 %v3322, %v3556
  %v3575 = vadd.f32 %v3323, %v3561
  %v3576 = vadd.f32 %v3324, %v3566
  %v3577 = vadd.f32 %v3325, %v3571
  %v3578 = vld [vmem:[%s1 + $0x2b0] sm:$0x1]
  %v3579 = vld [vmem:[%s1 + $0x2b8] sm:$0x1]
  %v3580 = vsel %vm30, %v3574, 0.0
  %3581 = vadd.xlane.f32.xlu0 %v3580
  %v3582 = vpop.xlane.xlu0 %3581
  %v3583 = vsel %vm30, %v3575, 0.0
  %3584 = vadd.xlane.f32.xlu0 %v3583
  %v3585 = vpop.xlane.xlu0 %3584
  %v3586 = vsel %vm30, %v3576, 0.0
  %3587 = vadd.xlane.f32.xlu0 %v3586
  %v3588 = vpop.xlane.xlu0 %3587
  %v3589 = vsel %vm1517, %v3577, 0.0
  %3590 = vadd.xlane.f32.xlu0 %v3589
  %v3591 = vpop.xlane.xlu0 %3590
  %v3592 = vmul.f32 %v3582, %v1521
  %v3593 = vmul.f32 %v3585, %v1521
  %v3594 = vmul.f32 %v3588, %v1521
  %v3595 = vmul.f32 %v3591, %v1521
  %v3596 = vsub.f32 %v3574, %v3592
  %v3597 = vsub.f32 %v3575, %v3593
  %v3598 = vsub.f32 %v3576, %v3594
  %v3599 = vsub.f32 %v3577, %v3595
  %v3600 = vmul.f32 %v3596, %v3596
  %v3601 = vmul.f32 %v3597, %v3597
  %v3602 = vmul.f32 %v3598, %v3598
  %v3603 = vmul.f32 %v3599, %v3599
  %v3604 = vsel %vm30, %v3600, 0.0
  %3605 = vadd.xlane.f32.xlu0 %v3604
  %v3606 = vpop.xlane.xlu0 %3605
  %v3607 = vsel %vm30, %v3601, 0.0
  %3608 = vadd.xlane.f32.xlu0 %v3607
  %v3609 = vpop.xlane.xlu0 %3608
  %v3610 = vsel %vm30, %v3602, 0.0
  %3611 = vadd.xlane.f32.xlu0 %v3610
  %v3612 = vpop.xlane.xlu0 %3611
  %v3613 = vsel %vm1517, %v3603, 0.0
  %3614 = vadd.xlane.f32.xlu0 %v3613
  %v3615 = vpop.xlane.xlu0 %3614
  %v3616 = vmul.f32 %v3606, %v1521
  %v3617 = vmul.f32 %v3609, %v1521
  %v3618 = vmul.f32 %v3612, %v1521
  %v3619 = vmul.f32 %v3615, %v1521
  %v3620 = vadd.f32 %v3616, 1e-05
  %v3621 = vadd.f32 %v3617, 1e-05
  %v3622 = vadd.f32 %v3618, 1e-05
  %v3623 = vadd.f32 %v3619, 1e-05
  %v3624 = vrsqrt.pop %v3620
  %v3625 = vrsqrt.pop %v3621
  %v3626 = vrsqrt.pop %v3622
  %v3627 = vrsqrt.pop %v3623
  %v3628 = vmul.f32 %v3596, %v3624
  %v3629 = vmul.f32 %v3597, %v3625
  %v3630 = vmul.f32 %v3598, %v3626
  %v3631 = vmul.f32 %v3599, %v3627
  %v3632 = vlaneseq
  %v3633 = vshrl.u32 %v3632, 7
  %v3634 = vsub.s32 0, %v3633
  %v3635 = vrot.slane %v3578, %v3634
  %v3636 = vmul.f32 %v3628, %v3635
  %v3637 = vmul.f32 %v3629, %v3635
  %v3638 = vmul.f32 %v3630, %v3635
  %v3639 = vmul.f32 %v3631, %v3635
  %v3640 = vlaneseq
  %v3641 = vshrl.u32 %v3640, 7
  %v3642 = vsub.s32 0, %v3641
  %v3643 = vrot.slane %v3579, %v3642
  %v3644 = vadd.f32 %v3636, %v3643
  %v3645 = vadd.f32 %v3637, %v3643
  %v3646 = vadd.f32 %v3638, %v3643
  %v3647 = vadd.f32 %v3639, %v3643
  %v3648 = vld [vmem:[%s2 + $0x40] sm:$0x7]
  %v3649 = vld [vmem:[%s2] sm:$0xff]
  %v3650 = vld [vmem:[%s2 + $0x10] sm:$0xff]
  %v3651 = vld [vmem:[%s2 + $0x20] sm:$0xff]
  %v3652 = vld [vmem:[%s2 + $0x30] sm:$0xff]
  %v3653 = vlaneseq
  %v3654 = vshrl.u32 %v3653, 7
  %v3655 = vsub.s32 0, %v3654
  %v3656 = vrot.slane %v3648, %v3655
  %v3658 = vsel %vm30, %v3644, 0
  %v3661 = vsel %vm30, %v3645, 0
  %v3664 = vsel %vm30, %v3646, 0
  %v3667 = vsel %vm30, %v3647, 0
  %3669 = vmatprep.subr.mxu0 0.0
  %3670 = vmatpush1.msra.mxu0 %v3649
  %3671 = vmatprep.subr.mxu0 0.0
  %3672 = vmatpush1.msra.mxu0 %v3650
  %3673 = vmatprep.subr.mxu0 0.0
  %3674 = vmatpush1.msra.mxu0 %v3651
  %3675 = vmatprep.subr.mxu0 0.0
  %3676 = vmatpush1.msra.mxu0 %v3652
  %3677 = vmatprep.subr.mxu0 0.0
  %3678 = vmatpush1.msra.mxu0 0.0
  %3679 = vmatprep.subr.mxu0 0.0
  %3680 = vmatpush1.msra.mxu0 0.0
  %3681 = vmatprep.subr.mxu0 0.0
  %3682 = vmatpush1.msra.mxu0 0.0
  %3683 = vmatprep.subr.mxu0 0.0
  %3684 = vmatpush1.msra.mxu0 0.0
  %3685 = vmatprep.subr.mxu0 0.0
  %3686 = vmatpush1.msra.mxu0 0.0
  %3687 = vmatprep.subr.mxu0 0.0
  %3688 = vmatpush1.msra.mxu0 0.0
  %3689 = vmatprep.subr.mxu0 0.0
  %3690 = vmatpush1.msra.mxu0 0.0
  %3691 = vmatprep.subr.mxu0 0.0
  %3692 = vmatpush1.msra.mxu0 0.0
  %3693 = vmatprep.subr.mxu0 0.0
  %3694 = vmatpush1.msra.mxu0 0.0
  %3695 = vmatprep.subr.mxu0 0.0
  %3696 = vmatpush1.msra.mxu0 0.0
  %3697 = vmatprep.subr.mxu0 0.0
  %3698 = vmatpush1.msra.mxu0 0.0
  %3699 = vmatprep.subr.mxu0 0.0
  %3700 = vmatpush1.msra.mxu0 0.0
  %3701 = vmatprep.subr.mxu0 0.0
  %3702 = vmatpush1.msra.mxu0 0.0
  %3703 = vmatprep.subr.mxu0 0.0
  %3704 = vmatpush1.msra.mxu0 0.0
  %3705 = vmatprep.subr.mxu0 0.0
  %3706 = vmatpush1.msra.mxu0 0.0
  %3707 = vmatprep.subr.mxu0 0.0
  %3708 = vmatpush1.msra.mxu0 0.0
  %3709 = vmatprep.subr.mxu0 0.0
  %3710 = vmatpush1.msra.mxu0 0.0
  %3711 = vmatprep.subr.mxu0 0.0
  %3712 = vmatpush1.msra.mxu0 0.0
  %3713 = vmatprep.subr.mxu0 0.0
  %3714 = vmatpush1.msra.mxu0 0.0
  %3715 = vmatprep.subr.mxu0 0.0
  %3716 = vmatpush1.msra.mxu0 0.0
  %3717 = vmatprep.subr.mxu0 0.0
  %3718 = vmatpush1.msra.mxu0 0.0
  %3719 = vmatprep.subr.mxu0 0.0
  %3720 = vmatpush1.msra.mxu0 0.0
  %3721 = vmatprep.subr.mxu0 0.0
  %3722 = vmatpush1.msra.mxu0 0.0
  %3723 = vmatprep.subr.mxu0 0.0
  %3724 = vmatpush1.msra.mxu0 0.0
  %3725 = vmatprep.subr.mxu0 0.0
  %3726 = vmatpush1.msra.mxu0 0.0
  %3727 = vmatprep.subr.mxu0 0.0
  %3728 = vmatpush1.msra.mxu0 0.0
  %3729 = vmatprep.subr.mxu0 0.0
  %3730 = vmatpush1.msra.mxu0 0.0
  %3731 = vmatprep.subr.mxu0 0.0
  %3732 = vmatpush1.msra.mxu0 0.0
  %3733 = vmatprep.mubr.f32.mxu0 0.0
  %3734 = vmatmul.mubr.f32.gmra.mrb[0].mxu0 %v3658
  %v3735 = vpop.f32.mrb[0].mxu0
  %v3736 = vadd.f32 %v3656, %v3735
  %v3737 = vpop.f32.mrb[0].mxu0
  %3738 = vmatprep.mubr.f32.mxu0 0.0
  %3739 = vmatmul.mubr.f32.gmra.mrb[0].mxu0 %v3661
  %v3740 = vpop.f32.mrb[0].mxu0
  %v3741 = vadd.f32 %v3656, %v3740
  %v3742 = vpop.f32.mrb[0].mxu0
  %3743 = vmatprep.mubr.f32.mxu0 0.0
  %3744 = vmatmul.mubr.f32.gmra.mrb[0].mxu0 %v3664
  %v3745 = vpop.f32.mrb[0].mxu0
  %v3746 = vadd.f32 %v3656, %v3745
  %v3747 = vpop.f32.mrb[0].mxu0
  %3748 = vmatprep.mubr.f32.mxu0 0.0
  %3749 = vmatmul.mubr.f32.gmra.mrb[0].mxu0 %v3667
  %v3750 = vpop.f32.mrb[0].mxu0
  %v3751 = vadd.f32 %v3656, %v3750
  %v3752 = vpop.f32.mrb[0].mxu0
  %3753 = vdwg.mxu0
  %vm3754 = vcmask 392192
  %v3755 = vsel %vm3754, %v3736, 0.0
  %3756 = vadd.xlane.f32.xlu0 %v3755
  %v3757 = vpop.xlane.xlu0 %3756
  %v3758 = vsel %vm3754, %v3741, 0.0
  %3759 = vadd.xlane.f32.xlu0 %v3758
  %v3760 = vpop.xlane.xlu0 %3759
  %v3761 = vsel %vm3754, %v3746, 0.0
  %3762 = vadd.xlane.f32.xlu0 %v3761
  %v3763 = vpop.xlane.xlu0 %3762
  %vm3764 = vcmask 390144
  %v3765 = vsel %vm3764, %v3751, 0.0
  %3766 = vadd.xlane.f32.xlu0 %v3765
  %v3767 = vpop.xlane.xlu0 %3766
  %v3768 = vrcp.pop 48.0
  %v3769 = vmul.f32 %v3757, %v3768
  %v3770 = vmul.f32 %v3760, %v3768
  %v3771 = vmul.f32 %v3763, %v3768
  %v3772 = vmul.f32 %v3767, %v3768
  %v3773 = vsub.f32 %v3736, %v3769
  %v3774 = vsub.f32 %v3741, %v3770
  %v3775 = vsub.f32 %v3746, %v3771
  %v3776 = vsub.f32 %v3751, %v3772
  %v3777 = vmul.f32 %v3773, %v3773
  %v3778 = vmul.f32 %v3774, %v3774
  %v3779 = vmul.f32 %v3775, %v3775
  %v3780 = vmul.f32 %v3776, %v3776
  %v3781 = vsel %vm3754, %v3777, 0.0
  %3782 = vadd.xlane.f32.xlu0 %v3781
  %v3783 = vpop.xlane.xlu0 %3782
  %v3784 = vsel %vm3754, %v3778, 0.0
  %3785 = vadd.xlane.f32.xlu0 %v3784
  %v3786 = vpop.xlane.xlu0 %3785
  %v3787 = vsel %vm3754, %v3779, 0.0
  %3788 = vadd.xlane.f32.xlu0 %v3787
  %v3789 = vpop.xlane.xlu0 %3788
  %v3790 = vsel %vm3764, %v3780, 0.0
  %3791 = vadd.xlane.f32.xlu0 %v3790
  %v3792 = vpop.xlane.xlu0 %3791
  %v3793 = vmul.f32 %v3783, %v3768
  %v3794 = vmul.f32 %v3786, %v3768
  %v3795 = vmul.f32 %v3789, %v3768
  %v3796 = vmul.f32 %v3792, %v3768
  %v3797 = vadd.f32 %v3793, 1e-05
  %v3798 = vadd.f32 %v3794, 1e-05
  %v3799 = vadd.f32 %v3795, 1e-05
  %v3800 = vadd.f32 %v3796, 1e-05
  %v3801 = vrsqrt.pop %v3797
  %v3802 = vrsqrt.pop %v3798
  %v3803 = vrsqrt.pop %v3799
  %v3804 = vrsqrt.pop %v3800
  %v3805 = vmul.f32 %v3773, %v3801
  %v3806 = vmul.f32 %v3774, %v3802
  %v3807 = vmul.f32 %v3775, %v3803
  %v3808 = vmul.f32 %v3776, %v3804
  %v3809 = vlaneseq
  %v3810 = vshrl.u32 %v3809, 7
  %v3811 = vsub.s32 1, %v3810
  %v3812 = vrot.slane %v3648, %v3811
  %v3813 = vmul.f32 %v3805, %v3812
  %v3814 = vmul.f32 %v3806, %v3812
  %v3815 = vmul.f32 %v3807, %v3812
  %v3816 = vmul.f32 %v3808, %v3812
  %v3817 = vlaneseq
  %v3818 = vshrl.u32 %v3817, 7
  %v3819 = vsub.s32 2, %v3818
  %v3820 = vrot.slane %v3648, %v3819
  %v3821 = vadd.f32 %v3813, %v3820
  %v3822 = vadd.f32 %v3814, %v3820
  %v3823 = vadd.f32 %v3815, %v3820
  %v3824 = vadd.f32 %v3816, %v3820
  %v3825 = vxor.u32 %v3821, 2147483648
  %v3826 = vxor.u32 %v3822, 2147483648
  %v3827 = vxor.u32 %v3823, 2147483648
  %v3828 = vxor.u32 %v3824, 2147483648
  %v3829 = vmul.f32 %v3825, 1.442695
  %v3830 = vpow.pop %v3829
  %v3831 = vmul.f32 %v3826, 1.442695
  %v3832 = vpow.pop %v3831
  %v3833 = vmul.f32 %v3827, 1.442695
  %v3834 = vpow.pop %v3833
  %v3835 = vmul.f32 %v3828, 1.442695
  %v3836 = vpow.pop %v3835
  %v3837 = vadd.f32 %v3830, 1.0
  %v3838 = vadd.f32 %v3832, 1.0
  %v3839 = vadd.f32 %v3834, 1.0
  %v3840 = vadd.f32 %v3836, 1.0
  %v3841 = vrcp.pop %v3837
  %v3842 = vmul.f32 1.0, %v3841
  %v3843 = vrcp.pop %v3838
  %v3844 = vmul.f32 1.0, %v3843
  %v3845 = vrcp.pop %v3839
  %v3846 = vmul.f32 1.0, %v3845
  %v3847 = vrcp.pop %v3840
  %v3848 = vmul.f32 1.0, %v3847
  %v3849 = vmul.f32 %v3821, %v3842
  %v3850 = vmul.f32 %v3822, %v3844
  %v3851 = vmul.f32 %v3823, %v3846
  %v3852 = vmul.f32 %v3824, %v3848
  %v3853 = vld [vmem:[%s2 + $0xb0] sm:$0x7]
  %v3854 = vld [vmem:[%s2 + $0x50] sm:$0xff]
  %v3855 = vld [vmem:[%s2 + $0x60] sm:$0xff]
  %v3856 = vld [vmem:[%s2 + $0x70] sm:$0xff]
  %v3857 = vld [vmem:[%s2 + $0x80] sm:$0xff]
  %v3858 = vld [vmem:[%s2 + $0x90] sm:$0xff]
  %v3859 = vld [vmem:[%s2 + $0xa0] sm:$0xff]
  %v3860 = vlaneseq
  %v3861 = vshrl.u32 %v3860, 7
  %v3862 = vsub.s32 0, %v3861
  %v3863 = vrot.slane %v3853, %v3862
  %v3865 = vsel %vm3754, %v3849, 0
  %v3868 = vsel %vm3754, %v3850, 0
  %v3871 = vsel %vm3754, %v3851, 0
  %v3874 = vsel %vm3754, %v3852, 0
  %3876 = vmatprep.subr.mxu0 0.0
  %3877 = vmatpush1.msra.mxu0 %v3854
  %3878 = vmatprep.subr.mxu0 0.0
  %3879 = vmatpush1.msra.mxu0 %v3855
  %3880 = vmatprep.subr.mxu0 0.0
  %3881 = vmatpush1.msra.mxu0 %v3856
  %3882 = vmatprep.subr.mxu0 0.0
  %3883 = vmatpush1.msra.mxu0 %v3857
  %3884 = vmatprep.subr.mxu0 0.0
  %3885 = vmatpush1.msra.mxu0 %v3858
  %3886 = vmatprep.subr.mxu0 0.0
  %3887 = vmatpush1.msra.mxu0 %v3859
  %3888 = vmatprep.subr.mxu0 0.0
  %3889 = vmatpush1.msra.mxu0 0.0
  %3890 = vmatprep.subr.mxu0 0.0
  %3891 = vmatpush1.msra.mxu0 0.0
  %3892 = vmatprep.subr.mxu0 0.0
  %3893 = vmatpush1.msra.mxu0 0.0
  %3894 = vmatprep.subr.mxu0 0.0
  %3895 = vmatpush1.msra.mxu0 0.0
  %3896 = vmatprep.subr.mxu0 0.0
  %3897 = vmatpush1.msra.mxu0 0.0
  %3898 = vmatprep.subr.mxu0 0.0
  %3899 = vmatpush1.msra.mxu0 0.0
  %3900 = vmatprep.subr.mxu0 0.0
  %3901 = vmatpush1.msra.mxu0 0.0
  %3902 = vmatprep.subr.mxu0 0.0
  %3903 = vmatpush1.msra.mxu0 0.0
  %3904 = vmatprep.subr.mxu0 0.0
  %3905 = vmatpush1.msra.mxu0 0.0
  %3906 = vmatprep.subr.mxu0 0.0
  %3907 = vmatpush1.msra.mxu0 0.0
  %3908 = vmatprep.subr.mxu0 0.0
  %3909 = vmatpush1.msra.mxu0 0.0
  %3910 = vmatprep.subr.mxu0 0.0
  %3911 = vmatpush1.msra.mxu0 0.0
  %3912 = vmatprep.subr.mxu0 0.0
  %3913 = vmatpush1.msra.mxu0 0.0
  %3914 = vmatprep.subr.mxu0 0.0
  %3915 = vmatpush1.msra.mxu0 0.0
  %3916 = vmatprep.subr.mxu0 0.0
  %3917 = vmatpush1.msra.mxu0 0.0
  %3918 = vmatprep.subr.mxu0 0.0
  %3919 = vmatpush1.msra.mxu0 0.0
  %3920 = vmatprep.subr.mxu0 0.0
  %3921 = vmatpush1.msra.mxu0 0.0
  %3922 = vmatprep.subr.mxu0 0.0
  %3923 = vmatpush1.msra.mxu0 0.0
  %3924 = vmatprep.subr.mxu0 0.0
  %3925 = vmatpush1.msra.mxu0 0.0
  %3926 = vmatprep.subr.mxu0 0.0
  %3927 = vmatpush1.msra.mxu0 0.0
  %3928 = vmatprep.subr.mxu0 0.0
  %3929 = vmatpush1.msra.mxu0 0.0
  %3930 = vmatprep.subr.mxu0 0.0
  %3931 = vmatpush1.msra.mxu0 0.0
  %3932 = vmatprep.subr.mxu0 0.0
  %3933 = vmatpush1.msra.mxu0 0.0
  %3934 = vmatprep.subr.mxu0 0.0
  %3935 = vmatpush1.msra.mxu0 0.0
  %3936 = vmatprep.subr.mxu0 0.0
  %3937 = vmatpush1.msra.mxu0 0.0
  %3938 = vmatprep.subr.mxu0 0.0
  %3939 = vmatpush1.msra.mxu0 0.0
  %3940 = vmatprep.mubr.f32.mxu0 0.0
  %3941 = vmatmul.mubr.f32.gmra.mrb[0].mxu0 %v3865
  %v3942 = vpop.f32.mrb[0].mxu0
  %v3943 = vadd.f32 %v3863, %v3942
  %v3944 = vpop.f32.mrb[0].mxu0
  %3945 = vmatprep.mubr.f32.mxu0 0.0
  %3946 = vmatmul.mubr.f32.gmra.mrb[0].mxu0 %v3868
  %v3947 = vpop.f32.mrb[0].mxu0
  %v3948 = vadd.f32 %v3863, %v3947
  %v3949 = vpop.f32.mrb[0].mxu0
  %3950 = vmatprep.mubr.f32.mxu0 0.0
  %3951 = vmatmul.mubr.f32.gmra.mrb[0].mxu0 %v3871
  %v3952 = vpop.f32.mrb[0].mxu0
  %v3953 = vadd.f32 %v3863, %v3952
  %v3954 = vpop.f32.mrb[0].mxu0
  %3955 = vmatprep.mubr.f32.mxu0 0.0
  %3956 = vmatmul.mubr.f32.gmra.mrb[0].mxu0 %v3874
  %v3957 = vpop.f32.mrb[0].mxu0
  %v3958 = vadd.f32 %v3863, %v3957
  %v3959 = vpop.f32.mrb[0].mxu0
  %3960 = vdwg.mxu0
  %vm3961 = vcmask 588800
  %v3962 = vsel %vm3961, %v3943, 0.0
  %3963 = vadd.xlane.f32.xlu0 %v3962
  %v3964 = vpop.xlane.xlu0 %3963
  %v3965 = vsel %vm3961, %v3948, 0.0
  %3966 = vadd.xlane.f32.xlu0 %v3965
  %v3967 = vpop.xlane.xlu0 %3966
  %v3968 = vsel %vm3961, %v3953, 0.0
  %3969 = vadd.xlane.f32.xlu0 %v3968
  %v3970 = vpop.xlane.xlu0 %3969
  %vm3971 = vcmask 586752
  %v3972 = vsel %vm3971, %v3958, 0.0
  %3973 = vadd.xlane.f32.xlu0 %v3972
  %v3974 = vpop.xlane.xlu0 %3973
  %v3975 = vrcp.pop 72.0
  %v3976 = vmul.f32 %v3964, %v3975
  %v3977 = vmul.f32 %v3967, %v3975
  %v3978 = vmul.f32 %v3970, %v3975
  %v3979 = vmul.f32 %v3974, %v3975
  %v3980 = vsub.f32 %v3943, %v3976
  %v3981 = vsub.f32 %v3948, %v3977
  %v3982 = vsub.f32 %v3953, %v3978
  %v3983 = vsub.f32 %v3958, %v3979
  %v3984 = vmul.f32 %v3980, %v3980
  %v3985 = vmul.f32 %v3981, %v3981
  %v3986 = vmul.f32 %v3982, %v3982
  %v3987 = vmul.f32 %v3983, %v3983
  %v3988 = vsel %vm3961, %v3984, 0.0
  %3989 = vadd.xlane.f32.xlu0 %v3988
  %v3990 = vpop.xlane.xlu0 %3989
  %v3991 = vsel %vm3961, %v3985, 0.0
  %3992 = vadd.xlane.f32.xlu0 %v3991
  %v3993 = vpop.xlane.xlu0 %3992
  %v3994 = vsel %vm3961, %v3986, 0.0
  %3995 = vadd.xlane.f32.xlu0 %v3994
  %v3996 = vpop.xlane.xlu0 %3995
  %v3997 = vsel %vm3971, %v3987, 0.0
  %3998 = vadd.xlane.f32.xlu0 %v3997
  %v3999 = vpop.xlane.xlu0 %3998
  %v4000 = vmul.f32 %v3990, %v3975
  %v4001 = vmul.f32 %v3993, %v3975
  %v4002 = vmul.f32 %v3996, %v3975
  %v4003 = vmul.f32 %v3999, %v3975
  %v4004 = vadd.f32 %v4000, 1e-05
  %v4005 = vadd.f32 %v4001, 1e-05
  %v4006 = vadd.f32 %v4002, 1e-05
  %v4007 = vadd.f32 %v4003, 1e-05
  %v4008 = vrsqrt.pop %v4004
  %v4009 = vrsqrt.pop %v4005
  %v4010 = vrsqrt.pop %v4006
  %v4011 = vrsqrt.pop %v4007
  %v4012 = vmul.f32 %v3980, %v4008
  %v4013 = vmul.f32 %v3981, %v4009
  %v4014 = vmul.f32 %v3982, %v4010
  %v4015 = vmul.f32 %v3983, %v4011
  %v4016 = vlaneseq
  %v4017 = vshrl.u32 %v4016, 7
  %v4018 = vsub.s32 1, %v4017
  %v4019 = vrot.slane %v3853, %v4018
  %v4020 = vmul.f32 %v4012, %v4019
  %v4021 = vmul.f32 %v4013, %v4019
  %v4022 = vmul.f32 %v4014, %v4019
  %v4023 = vmul.f32 %v4015, %v4019
  %v4024 = vlaneseq
  %v4025 = vshrl.u32 %v4024, 7
  %v4026 = vsub.s32 2, %v4025
  %v4027 = vrot.slane %v3853, %v4026
  %v4028 = vadd.f32 %v4020, %v4027
  %v4029 = vadd.f32 %v4021, %v4027
  %v4030 = vadd.f32 %v4022, %v4027
  %v4031 = vadd.f32 %v4023, %v4027
  %v4032 = vxor.u32 %v4028, 2147483648
  %v4033 = vxor.u32 %v4029, 2147483648
  %v4034 = vxor.u32 %v4030, 2147483648
  %v4035 = vxor.u32 %v4031, 2147483648
  %v4036 = vmul.f32 %v4032, 1.442695
  %v4037 = vpow.pop %v4036
  %v4038 = vmul.f32 %v4033, 1.442695
  %v4039 = vpow.pop %v4038
  %v4040 = vmul.f32 %v4034, 1.442695
  %v4041 = vpow.pop %v4040
  %v4042 = vmul.f32 %v4035, 1.442695
  %v4043 = vpow.pop %v4042
  %v4044 = vadd.f32 %v4037, 1.0
  %v4045 = vadd.f32 %v4039, 1.0
  %v4046 = vadd.f32 %v4041, 1.0
  %v4047 = vadd.f32 %v4043, 1.0
  %v4048 = vrcp.pop %v4044
  %v4049 = vmul.f32 1.0, %v4048
  %v4050 = vrcp.pop %v4045
  %v4051 = vmul.f32 1.0, %v4050
  %v4052 = vrcp.pop %v4046
  %v4053 = vmul.f32 1.0, %v4052
  %v4054 = vrcp.pop %v4047
  %v4055 = vmul.f32 1.0, %v4054
  %v4056 = vmul.f32 %v4028, %v4049
  %v4057 = vmul.f32 %v4029, %v4051
  %v4058 = vmul.f32 %v4030, %v4053
  %v4059 = vmul.f32 %v4031, %v4055
  %v4060 = vld [vmem:[%s2 + $0x150] sm:$0x7]
  %v4061 = vld [vmem:[%s2 + $0xc0] sm:$0xff]
  %v4062 = vld [vmem:[%s2 + $0xd0] sm:$0xff]
  %v4063 = vld [vmem:[%s2 + $0xe0] sm:$0xff]
  %v4064 = vld [vmem:[%s2 + $0xf0] sm:$0xff]
  %v4065 = vld [vmem:[%s2 + $0x100] sm:$0xff]
  %v4066 = vld [vmem:[%s2 + $0x110] sm:$0xff]
  %v4067 = vld [vmem:[%s2 + $0x120] sm:$0xff]
  %v4068 = vld [vmem:[%s2 + $0x130] sm:$0xff]
  %v4069 = vld [vmem:[%s2 + $0x140] sm:$0xff]
  %v4070 = vlaneseq
  %v4071 = vshrl.u32 %v4070, 7
  %v4072 = vsub.s32 0, %v4071
  %v4073 = vrot.slane %v4060, %v4072
  %v4075 = vsel %vm3961, %v4056, 0
  %v4078 = vsel %vm3961, %v4057, 0
  %v4081 = vsel %vm3961, %v4058, 0
  %v4084 = vsel %vm3961, %v4059, 0
  %4086 = vmatprep.subr.mxu0 0.0
  %4087 = vmatpush1.msra.mxu0 %v4061
  %4088 = vmatprep.subr.mxu0 0.0
  %4089 = vmatpush1.msra.mxu0 %v4062
  %4090 = vmatprep.subr.mxu0 0.0
  %4091 = vmatpush1.msra.mxu0 %v4063
  %4092 = vmatprep.subr.mxu0 0.0
  %4093 = vmatpush1.msra.mxu0 %v4064
  %4094 = vmatprep.subr.mxu0 0.0
  %4095 = vmatpush1.msra.mxu0 %v4065
  %4096 = vmatprep.subr.mxu0 0.0
  %4097 = vmatpush1.msra.mxu0 %v4066
  %4098 = vmatprep.subr.mxu0 0.0
  %4099 = vmatpush1.msra.mxu0 %v4067
  %4100 = vmatprep.subr.mxu0 0.0
  %4101 = vmatpush1.msra.mxu0 %v4068
  %4102 = vmatprep.subr.mxu0 0.0
  %4103 = vmatpush1.msra.mxu0 %v4069
  %4104 = vmatprep.subr.mxu0 0.0
  %4105 = vmatpush1.msra.mxu0 0.0
  %4106 = vmatprep.subr.mxu0 0.0
  %4107 = vmatpush1.msra.mxu0 0.0
  %4108 = vmatprep.subr.mxu0 0.0
  %4109 = vmatpush1.msra.mxu0 0.0
  %4110 = vmatprep.subr.mxu0 0.0
  %4111 = vmatpush1.msra.mxu0 0.0
  %4112 = vmatprep.subr.mxu0 0.0
  %4113 = vmatpush1.msra.mxu0 0.0
  %4114 = vmatprep.subr.mxu0 0.0
  %4115 = vmatpush1.msra.mxu0 0.0
  %4116 = vmatprep.subr.mxu0 0.0
  %4117 = vmatpush1.msra.mxu0 0.0
  %4118 = vmatprep.subr.mxu0 0.0
  %4119 = vmatpush1.msra.mxu0 0.0
  %4120 = vmatprep.subr.mxu0 0.0
  %4121 = vmatpush1.msra.mxu0 0.0
  %4122 = vmatprep.subr.mxu0 0.0
  %4123 = vmatpush1.msra.mxu0 0.0
  %4124 = vmatprep.subr.mxu0 0.0
  %4125 = vmatpush1.msra.mxu0 0.0
  %4126 = vmatprep.subr.mxu0 0.0
  %4127 = vmatpush1.msra.mxu0 0.0
  %4128 = vmatprep.subr.mxu0 0.0
  %4129 = vmatpush1.msra.mxu0 0.0
  %4130 = vmatprep.subr.mxu0 0.0
  %4131 = vmatpush1.msra.mxu0 0.0
  %4132 = vmatprep.subr.mxu0 0.0
  %4133 = vmatpush1.msra.mxu0 0.0
  %4134 = vmatprep.subr.mxu0 0.0
  %4135 = vmatpush1.msra.mxu0 0.0
  %4136 = vmatprep.subr.mxu0 0.0
  %4137 = vmatpush1.msra.mxu0 0.0
  %4138 = vmatprep.subr.mxu0 0.0
  %4139 = vmatpush1.msra.mxu0 0.0
  %4140 = vmatprep.subr.mxu0 0.0
  %4141 = vmatpush1.msra.mxu0 0.0
  %4142 = vmatprep.subr.mxu0 0.0
  %4143 = vmatpush1.msra.mxu0 0.0
  %4144 = vmatprep.subr.mxu0 0.0
  %4145 = vmatpush1.msra.mxu0 0.0
  %4146 = vmatprep.subr.mxu0 0.0
  %4147 = vmatpush1.msra.mxu0 0.0
  %4148 = vmatprep.subr.mxu0 0.0
  %4149 = vmatpush1.msra.mxu0 0.0
  %4150 = vmatprep.mubr.f32.mxu0 0.0
  %4151 = vmatmul.mubr.f32.gmra.mrb[0].mxu0 %v4075
  %v4152 = vpop.f32.mrb[0].mxu0
  %v4153 = vadd.f32 %v4073, %v4152
  %v4154 = vpop.f32.mrb[0].mxu0
  %4155 = vmatprep.mubr.f32.mxu0 0.0
  %4156 = vmatmul.mubr.f32.gmra.mrb[0].mxu0 %v4078
  %v4157 = vpop.f32.mrb[0].mxu0
  %v4158 = vadd.f32 %v4073, %v4157
  %v4159 = vpop.f32.mrb[0].mxu0
  %4160 = vmatprep.mubr.f32.mxu0 0.0
  %4161 = vmatmul.mubr.f32.gmra.mrb[0].mxu0 %v4081
  %v4162 = vpop.f32.mrb[0].mxu0
  %v4163 = vadd.f32 %v4073, %v4162
  %v4164 = vpop.f32.mrb[0].mxu0
  %4165 = vmatprep.mubr.f32.mxu0 0.0
  %4166 = vmatmul.mubr.f32.gmra.mrb[0].mxu0 %v4084
  %v4167 = vpop.f32.mrb[0].mxu0
  %v4168 = vadd.f32 %v4073, %v4167
  %v4169 = vpop.f32.mrb[0].mxu0
  %4170 = vdwg.mxu0
  %vm4171 = vcmask 949248
  %v4172 = vsel %vm4171, %v4153, 0.0
  %4173 = vadd.xlane.f32.xlu0 %v4172
  %v4174 = vpop.xlane.xlu0 %4173
  %v4175 = vsel %vm4171, %v4158, 0.0
  %4176 = vadd.xlane.f32.xlu0 %v4175
  %v4177 = vpop.xlane.xlu0 %4176
  %v4178 = vsel %vm4171, %v4163, 0.0
  %4179 = vadd.xlane.f32.xlu0 %v4178
  %v4180 = vpop.xlane.xlu0 %4179
  %vm4181 = vcmask 947200
  %v4182 = vsel %vm4181, %v4168, 0.0
  %4183 = vadd.xlane.f32.xlu0 %v4182
  %v4184 = vpop.xlane.xlu0 %4183
  %v4185 = vrcp.pop 116.0
  %v4186 = vmul.f32 %v4174, %v4185
  %v4187 = vmul.f32 %v4177, %v4185
  %v4188 = vmul.f32 %v4180, %v4185
  %v4189 = vmul.f32 %v4184, %v4185
  %v4190 = vsub.f32 %v4153, %v4186
  %v4191 = vsub.f32 %v4158, %v4187
  %v4192 = vsub.f32 %v4163, %v4188
  %v4193 = vsub.f32 %v4168, %v4189
  %v4194 = vmul.f32 %v4190, %v4190
  %v4195 = vmul.f32 %v4191, %v4191
  %v4196 = vmul.f32 %v4192, %v4192
  %v4197 = vmul.f32 %v4193, %v4193
  %v4198 = vsel %vm4171, %v4194, 0.0
  %4199 = vadd.xlane.f32.xlu0 %v4198
  %v4200 = vpop.xlane.xlu0 %4199
  %v4201 = vsel %vm4171, %v4195, 0.0
  %4202 = vadd.xlane.f32.xlu0 %v4201
  %v4203 = vpop.xlane.xlu0 %4202
  %v4204 = vsel %vm4171, %v4196, 0.0
  %4205 = vadd.xlane.f32.xlu0 %v4204
  %v4206 = vpop.xlane.xlu0 %4205
  %v4207 = vsel %vm4181, %v4197, 0.0
  %4208 = vadd.xlane.f32.xlu0 %v4207
  %v4209 = vpop.xlane.xlu0 %4208
  %v4210 = vmul.f32 %v4200, %v4185
  %v4211 = vmul.f32 %v4203, %v4185
  %v4212 = vmul.f32 %v4206, %v4185
  %v4213 = vmul.f32 %v4209, %v4185
  %v4214 = vadd.f32 %v4210, 1e-05
  %v4215 = vadd.f32 %v4211, 1e-05
  %v4216 = vadd.f32 %v4212, 1e-05
  %v4217 = vadd.f32 %v4213, 1e-05
  %v4218 = vrsqrt.pop %v4214
  %v4219 = vrsqrt.pop %v4215
  %v4220 = vrsqrt.pop %v4216
  %v4221 = vrsqrt.pop %v4217
  %v4222 = vmul.f32 %v4190, %v4218
  %v4223 = vmul.f32 %v4191, %v4219
  %v4224 = vmul.f32 %v4192, %v4220
  %v4225 = vmul.f32 %v4193, %v4221
  %v4226 = vlaneseq
  %v4227 = vshrl.u32 %v4226, 7
  %v4228 = vsub.s32 1, %v4227
  %v4229 = vrot.slane %v4060, %v4228
  %v4230 = vmul.f32 %v4222, %v4229
  %v4231 = vmul.f32 %v4223, %v4229
  %v4232 = vmul.f32 %v4224, %v4229
  %v4233 = vmul.f32 %v4225, %v4229
  %v4234 = vlaneseq
  %v4235 = vshrl.u32 %v4234, 7
  %v4236 = vsub.s32 2, %v4235
  %v4237 = vrot.slane %v4060, %v4236
  %v4238 = vadd.f32 %v4230, %v4237
  %v4239 = vadd.f32 %v4231, %v4237
  %v4240 = vadd.f32 %v4232, %v4237
  %v4241 = vadd.f32 %v4233, %v4237
  %v4242 = vxor.u32 %v4238, 2147483648
  %v4243 = vxor.u32 %v4239, 2147483648
  %v4244 = vxor.u32 %v4240, 2147483648
  %v4245 = vxor.u32 %v4241, 2147483648
  %v4246 = vmul.f32 %v4242, 1.442695
  %v4247 = vpow.pop %v4246
  %v4248 = vmul.f32 %v4243, 1.442695
  %v4249 = vpow.pop %v4248
  %v4250 = vmul.f32 %v4244, 1.442695
  %v4251 = vpow.pop %v4250
  %v4252 = vmul.f32 %v4245, 1.442695
  %v4253 = vpow.pop %v4252
  %v4254 = vadd.f32 %v4247, 1.0
  %v4255 = vadd.f32 %v4249, 1.0
  %v4256 = vadd.f32 %v4251, 1.0
  %v4257 = vadd.f32 %v4253, 1.0
  %v4258 = vrcp.pop %v4254
  %v4259 = vmul.f32 1.0, %v4258
  %v4260 = vrcp.pop %v4255
  %v4261 = vmul.f32 1.0, %v4260
  %v4262 = vrcp.pop %v4256
  %v4263 = vmul.f32 1.0, %v4262
  %v4264 = vrcp.pop %v4257
  %v4265 = vmul.f32 1.0, %v4264
  %v4266 = vmul.f32 %v4238, %v4259
  %v4267 = vmul.f32 %v4239, %v4261
  %v4268 = vmul.f32 %v4240, %v4263
  %v4269 = vmul.f32 %v4241, %v4265
  %v4270 = vld [vmem:[%s2 + $0x160] sm:$0xff]
  %v4271 = vld [vmem:[%s2 + $0x168] sm:$0xff]
  %v4272 = vld [vmem:[%s2 + $0x170] sm:$0xff]
  %v4273 = vld [vmem:[%s2 + $0x178] sm:$0xff]
  %v4274 = vld [vmem:[%s2 + $0x180] sm:$0xff]
  %v4275 = vld [vmem:[%s2 + $0x188] sm:$0xff]
  %v4276 = vld [vmem:[%s2 + $0x190] sm:$0xff]
  %v4277 = vld [vmem:[%s2 + $0x198] sm:$0xff]
  %v4278 = vld [vmem:[%s2 + $0x1a0] sm:$0xff]
  %v4279 = vld [vmem:[%s2 + $0x1a8] sm:$0xff]
  %v4280 = vld [vmem:[%s2 + $0x1b0] sm:$0xff]
  %v4281 = vld [vmem:[%s2 + $0x1b8] sm:$0xff]
  %v4282 = vld [vmem:[%s2 + $0x1c0] sm:$0xff]
  %v4283 = vld [vmem:[%s2 + $0x1c8] sm:$0xff]
  %v4284 = vld [vmem:[%s2 + $0x1d0] sm:$0xff]
  %v4285 = vld [vmem:[%s2 + $0x1d8] sm:$0xff]
  %v4286 = vld [vmem:[%s2 + $0x1e0] sm:$0xff]
  %v4287 = vld [vmem:[%s2 + $0x1e8] sm:$0xff]
  %v4288 = vld [vmem:[%s2 + $0x1f0] sm:$0xff]
  %v4289 = vld [vmem:[%s2 + $0x1f8] sm:$0xff]
  %v4290 = vld [vmem:[%s2 + $0x200] sm:$0xff]
  %v4291 = vld [vmem:[%s2 + $0x208] sm:$0xff]
  %v4292 = vld [vmem:[%s2 + $0x210] sm:$0xff]
  %v4293 = vld [vmem:[%s2 + $0x218] sm:$0xff]
  %v4294 = vld [vmem:[%s2 + $0x220] sm:$0xff]
  %v4295 = vld [vmem:[%s2 + $0x228] sm:$0xff]
  %v4296 = vld [vmem:[%s2 + $0x230] sm:$0xff]
  %v4297 = vld [vmem:[%s2 + $0x238] sm:$0xff]
  %v4298 = vld [vmem:[%s2 + $0x240] sm:$0xf]
  %v4299 = vld [vmem:[%s2 + $0x248] sm:$0xf]
  %s4300 = scalar_lea.vmem %s2, 592
  %v4301 = vld [vmem:[%s4300] ss:$8 sm:$0x3]
  %v4303 = vlaneseq
  %v4304 = vshrl.u32 %v4303, 7
  %v4305 = vsub.s32 0, %v4304
  %v4306 = vrot.slane %v4301, %v4305
  %v4307 = vlaneseq
  %v4308 = vshrl.u32 %v4307, 7
  %v4309 = vsub.s32 1, %v4308
  %v4310 = vrot.slane %v4301, %v4309
  %v4314 = vsel %vm4171, %v4266, 0
  %v4317 = vsel %vm4171, %v4267, 0
  %v4320 = vsel %vm4171, %v4268, 0
  %v4323 = vsel %vm4171, %v4269, 0
  %vm4325 = vcmask 1043456
  %v4327 = vsel %vm4325, %v4298, 0
  %v4330 = vsel %vm4325, %v4299, 0
  %4332 = vmatprep.subr.mxu0 %v4271
  %4333 = vmatpush1.msra.mxu0 %v4270
  %4334 = vmatprep.subr.mxu0 %v4273
  %4335 = vmatpush1.msra.mxu0 %v4272
  %4336 = vmatprep.subr.mxu0 %v4275
  %4337 = vmatpush1.msra.mxu0 %v4274
  %4338 = vmatprep.subr.mxu0 %v4277
  %4339 = vmatpush1.msra.mxu0 %v4276
  %4340 = vmatprep.subr.mxu0 %v4279
  %4341 = vmatpush1.msra.mxu0 %v4278
  %4342 = vmatprep.subr.mxu0 %v4281
  %4343 = vmatpush1.msra.mxu0 %v4280
  %4344 = vmatprep.subr.mxu0 %v4283
  %4345 = vmatpush1.msra.mxu0 %v4282
  %4346 = vmatprep.subr.mxu0 %v4285
  %4347 = vmatpush1.msra.mxu0 %v4284
  %4348 = vmatprep.subr.mxu0 %v4287
  %4349 = vmatpush1.msra.mxu0 %v4286
  %4350 = vmatprep.subr.mxu0 %v4289
  %4351 = vmatpush1.msra.mxu0 %v4288
  %4352 = vmatprep.subr.mxu0 %v4291
  %4353 = vmatpush1.msra.mxu0 %v4290
  %4354 = vmatprep.subr.mxu0 %v4293
  %4355 = vmatpush1.msra.mxu0 %v4292
  %4356 = vmatprep.subr.mxu0 %v4295
  %4357 = vmatpush1.msra.mxu0 %v4294
  %4358 = vmatprep.subr.mxu0 %v4297
  %4359 = vmatpush1.msra.mxu0 %v4296
  %4360 = vmatprep.subr.mxu0 %v4330
  %4361 = vmatpush1.msra.mxu0 %v4327
  %4362 = vmatprep.subr.mxu0 0.0
  %4363 = vmatpush1.msra.mxu0 0.0
  %4364 = vmatprep.subr.mxu0 0.0
  %4365 = vmatpush1.msra.mxu0 0.0
  %4366 = vmatprep.subr.mxu0 0.0
  %4367 = vmatpush1.msra.mxu0 0.0
  %4368 = vmatprep.subr.mxu0 0.0
  %4369 = vmatpush1.msra.mxu0 0.0
  %4370 = vmatprep.subr.mxu0 0.0
  %4371 = vmatpush1.msra.mxu0 0.0
  %4372 = vmatprep.subr.mxu0 0.0
  %4373 = vmatpush1.msra.mxu0 0.0
  %4374 = vmatprep.subr.mxu0 0.0
  %4375 = vmatpush1.msra.mxu0 0.0
  %4376 = vmatprep.subr.mxu0 0.0
  %4377 = vmatpush1.msra.mxu0 0.0
  %4378 = vmatprep.subr.mxu0 0.0
  %4379 = vmatpush1.msra.mxu0 0.0
  %4380 = vmatprep.subr.mxu0 0.0
  %4381 = vmatpush1.msra.mxu0 0.0
  %4382 = vmatprep.subr.mxu0 0.0
  %4383 = vmatpush1.msra.mxu0 0.0
  %4384 = vmatprep.subr.mxu0 0.0
  %4385 = vmatpush1.msra.mxu0 0.0
  %4386 = vmatprep.subr.mxu0 0.0
  %4387 = vmatpush1.msra.mxu0 0.0
  %4388 = vmatprep.subr.mxu0 0.0
  %4389 = vmatpush1.msra.mxu0 0.0
  %4390 = vmatprep.subr.mxu0 0.0
  %4391 = vmatpush1.msra.mxu0 0.0
  %4392 = vmatprep.subr.mxu0 0.0
  %4393 = vmatpush1.msra.mxu0 0.0
  %4394 = vmatprep.subr.mxu0 0.0
  %4395 = vmatpush1.msra.mxu0 0.0
  %4396 = vmatprep.mubr.f32.mxu0 0.0
  %4397 = vmatmul.mubr.f32.gmra.mrb[0].mxu0 %v4314
  %v4398 = vpop.f32.mrb[0].mxu0
  %v4399 = vadd.f32 %v4306, %v4398
  %v4400 = vpop.f32.mrb[0].mxu0
  %v4401 = vadd.f32 %v4310, %v4400
  %4402 = vmatprep.mubr.f32.mxu0 0.0
  %4403 = vmatmul.mubr.f32.gmra.mrb[0].mxu0 %v4317
  %v4404 = vpop.f32.mrb[0].mxu0
  %v4405 = vadd.f32 %v4306, %v4404
  %v4406 = vpop.f32.mrb[0].mxu0
  %v4407 = vadd.f32 %v4310, %v4406
  %4408 = vmatprep.mubr.f32.mxu0 0.0
  %4409 = vmatmul.mubr.f32.gmra.mrb[0].mxu0 %v4320
  %v4410 = vpop.f32.mrb[0].mxu0
  %v4411 = vadd.f32 %v4306, %v4410
  %v4412 = vpop.f32.mrb[0].mxu0
  %v4413 = vadd.f32 %v4310, %v4412
  %4414 = vmatprep.mubr.f32.mxu0 0.0
  %4415 = vmatmul.mubr.f32.gmra.mrb[0].mxu0 %v4323
  %v4416 = vpop.f32.mrb[0].mxu0
  %v4417 = vadd.f32 %v4306, %v4416
  %v4418 = vpop.f32.mrb[0].mxu0
  %v4419 = vadd.f32 %v4310, %v4418
  %4420 = vdwg.mxu0
  %v4421 = vtanh.pop %v4399
  %v4422 = vtanh.pop %v4401
  %v4423 = vtanh.pop %v4405
  %v4424 = vtanh.pop %v4407
  %v4425 = vtanh.pop %v4411
  %v4426 = vtanh.pop %v4413
  %v4427 = vtanh.pop %v4417
  %v4428 = vtanh.pop %v4419
  %v4429 = vld [vmem:[%s2 + $0x2a0] sm:$0x7]
  %v4430 = vld [vmem:[%s2 + $0x260] sm:$0xff]
  %v4431 = vld [vmem:[%s2 + $0x270] sm:$0xff]
  %v4432 = vld [vmem:[%s2 + $0x280] sm:$0xff]
  %v4433 = vld [vmem:[%s2 + $0x290] sm:$0xff]
  %v4434 = vlaneseq
  %v4435 = vshrl.u32 %v4434, 7
  %v4436 = vsub.s32 0, %v4435
  %v4437 = vrot.slane %v4429, %v4436
  %4438 = vmatprep.subr.mxu0 0.0
  %4439 = vmatpush1.msra.mxu0 %v4430
  %4440 = vmatprep.subr.mxu0 0.0
  %4441 = vmatpush1.msra.mxu0 %v4431
  %4442 = vmatprep.subr.mxu0 0.0
  %4443 = vmatpush1.msra.mxu0 %v4432
  %4444 = vmatprep.subr.mxu0 0.0
  %4445 = vmatpush1.msra.mxu0 %v4433
  %4446 = vmatprep.subr.mxu0 0.0
  %4447 = vmatpush1.msra.mxu0 0.0
  %4448 = vmatprep.subr.mxu0 0.0
  %4449 = vmatpush1.msra.mxu0 0.0
  %4450 = vmatprep.subr.mxu0 0.0
  %4451 = vmatpush1.msra.mxu0 0.0
  %4452 = vmatprep.subr.mxu0 0.0
  %4453 = vmatpush1.msra.mxu0 0.0
  %4454 = vmatprep.subr.mxu0 0.0
  %4455 = vmatpush1.msra.mxu0 0.0
  %4456 = vmatprep.subr.mxu0 0.0
  %4457 = vmatpush1.msra.mxu0 0.0
  %4458 = vmatprep.subr.mxu0 0.0
  %4459 = vmatpush1.msra.mxu0 0.0
  %4460 = vmatprep.subr.mxu0 0.0
  %4461 = vmatpush1.msra.mxu0 0.0
  %4462 = vmatprep.subr.mxu0 0.0
  %4463 = vmatpush1.msra.mxu0 0.0
  %4464 = vmatprep.subr.mxu0 0.0
  %4465 = vmatpush1.msra.mxu0 0.0
  %4466 = vmatprep.subr.mxu0 0.0
  %4467 = vmatpush1.msra.mxu0 0.0
  %4468 = vmatprep.subr.mxu0 0.0
  %4469 = vmatpush1.msra.mxu0 0.0
  %4470 = vmatprep.subr.mxu0 0.0
  %4471 = vmatpush1.msra.mxu0 0.0
  %4472 = vmatprep.subr.mxu0 0.0
  %4473 = vmatpush1.msra.mxu0 0.0
  %4474 = vmatprep.subr.mxu0 0.0
  %4475 = vmatpush1.msra.mxu0 0.0
  %4476 = vmatprep.subr.mxu0 0.0
  %4477 = vmatpush1.msra.mxu0 0.0
  %4478 = vmatprep.subr.mxu0 0.0
  %4479 = vmatpush1.msra.mxu0 0.0
  %4480 = vmatprep.subr.mxu0 0.0
  %4481 = vmatpush1.msra.mxu0 0.0
  %4482 = vmatprep.subr.mxu0 0.0
  %4483 = vmatpush1.msra.mxu0 0.0
  %4484 = vmatprep.subr.mxu0 0.0
  %4485 = vmatpush1.msra.mxu0 0.0
  %4486 = vmatprep.subr.mxu0 0.0
  %4487 = vmatpush1.msra.mxu0 0.0
  %4488 = vmatprep.subr.mxu0 0.0
  %4489 = vmatpush1.msra.mxu0 0.0
  %4490 = vmatprep.subr.mxu0 0.0
  %4491 = vmatpush1.msra.mxu0 0.0
  %4492 = vmatprep.subr.mxu0 0.0
  %4493 = vmatpush1.msra.mxu0 0.0
  %4494 = vmatprep.subr.mxu0 0.0
  %4495 = vmatpush1.msra.mxu0 0.0
  %4496 = vmatprep.subr.mxu0 0.0
  %4497 = vmatpush1.msra.mxu0 0.0
  %4498 = vmatprep.subr.mxu0 0.0
  %4499 = vmatpush1.msra.mxu0 0.0
  %4500 = vmatprep.subr.mxu0 0.0
  %4501 = vmatpush1.msra.mxu0 0.0
  %4502 = vmatprep.mubr.f32.mxu0 0.0
  %4503 = vmatmul.mubr.f32.gmra.mrb[0].mxu0 %v3658
  %v4504 = vpop.f32.mrb[0].mxu0
  %v4505 = vadd.f32 %v4437, %v4504
  %v4506 = vpop.f32.mrb[0].mxu0
  %4507 = vmatprep.mubr.f32.mxu0 0.0
  %4508 = vmatmul.mubr.f32.gmra.mrb[0].mxu0 %v3661
  %v4509 = vpop.f32.mrb[0].mxu0
  %v4510 = vadd.f32 %v4437, %v4509
  %v4511 = vpop.f32.mrb[0].mxu0
  %4512 = vmatprep.mubr.f32.mxu0 0.0
  %4513 = vmatmul.mubr.f32.gmra.mrb[0].mxu0 %v3664
  %v4514 = vpop.f32.mrb[0].mxu0
  %v4515 = vadd.f32 %v4437, %v4514
  %v4516 = vpop.f32.mrb[0].mxu0
  %4517 = vmatprep.mubr.f32.mxu0 0.0
  %4518 = vmatmul.mubr.f32.gmra.mrb[0].mxu0 %v3667
  %v4519 = vpop.f32.mrb[0].mxu0
  %v4520 = vadd.f32 %v4437, %v4519
  %v4521 = vpop.f32.mrb[0].mxu0
  %4522 = vdwg.mxu0
  %v4523 = vsel %vm3754, %v4505, 0.0
  %4524 = vadd.xlane.f32.xlu0 %v4523
  %v4525 = vpop.xlane.xlu0 %4524
  %v4526 = vsel %vm3754, %v4510, 0.0
  %4527 = vadd.xlane.f32.xlu0 %v4526
  %v4528 = vpop.xlane.xlu0 %4527
  %v4529 = vsel %vm3754, %v4515, 0.0
  %4530 = vadd.xlane.f32.xlu0 %v4529
  %v4531 = vpop.xlane.xlu0 %4530
  %v4532 = vsel %vm3764, %v4520, 0.0
  %4533 = vadd.xlane.f32.xlu0 %v4532
  %v4534 = vpop.xlane.xlu0 %4533
  %v4535 = vmul.f32 %v4525, %v3768
  %v4536 = vmul.f32 %v4528, %v3768
  %v4537 = vmul.f32 %v4531, %v3768
  %v4538 = vmul.f32 %v4534, %v3768
  %v4539 = vsub.f32 %v4505, %v4535
  %v4540 = vsub.f32 %v4510, %v4536
  %v4541 = vsub.f32 %v4515, %v4537
  %v4542 = vsub.f32 %v4520, %v4538
  %v4543 = vmul.f32 %v4539, %v4539
  %v4544 = vmul.f32 %v4540, %v4540
  %v4545 = vmul.f32 %v4541, %v4541
  %v4546 = vmul.f32 %v4542, %v4542
  %v4547 = vsel %vm3754, %v4543, 0.0
  %4548 = vadd.xlane.f32.xlu0 %v4547
  %v4549 = vpop.xlane.xlu0 %4548
  %v4550 = vsel %vm3754, %v4544, 0.0
  %4551 = vadd.xlane.f32.xlu0 %v4550
  %v4552 = vpop.xlane.xlu0 %4551
  %v4553 = vsel %vm3754, %v4545, 0.0
  %4554 = vadd.xlane.f32.xlu0 %v4553
  %v4555 = vpop.xlane.xlu0 %4554
  %v4556 = vsel %vm3764, %v4546, 0.0
  %4557 = vadd.xlane.f32.xlu0 %v4556
  %v4558 = vpop.xlane.xlu0 %4557
  %v4559 = vmul.f32 %v4549, %v3768
  %v4560 = vmul.f32 %v4552, %v3768
  %v4561 = vmul.f32 %v4555, %v3768
  %v4562 = vmul.f32 %v4558, %v3768
  %v4563 = vadd.f32 %v4559, 1e-05
  %v4564 = vadd.f32 %v4560, 1e-05
  %v4565 = vadd.f32 %v4561, 1e-05
  %v4566 = vadd.f32 %v4562, 1e-05
  %v4567 = vrsqrt.pop %v4563
  %v4568 = vrsqrt.pop %v4564
  %v4569 = vrsqrt.pop %v4565
  %v4570 = vrsqrt.pop %v4566
  %v4571 = vmul.f32 %v4539, %v4567
  %v4572 = vmul.f32 %v4540, %v4568
  %v4573 = vmul.f32 %v4541, %v4569
  %v4574 = vmul.f32 %v4542, %v4570
  %v4575 = vlaneseq
  %v4576 = vshrl.u32 %v4575, 7
  %v4577 = vsub.s32 1, %v4576
  %v4578 = vrot.slane %v4429, %v4577
  %v4579 = vmul.f32 %v4571, %v4578
  %v4580 = vmul.f32 %v4572, %v4578
  %v4581 = vmul.f32 %v4573, %v4578
  %v4582 = vmul.f32 %v4574, %v4578
  %v4583 = vlaneseq
  %v4584 = vshrl.u32 %v4583, 7
  %v4585 = vsub.s32 2, %v4584
  %v4586 = vrot.slane %v4429, %v4585
  %v4587 = vadd.f32 %v4579, %v4586
  %v4588 = vadd.f32 %v4580, %v4586
  %v4589 = vadd.f32 %v4581, %v4586
  %v4590 = vadd.f32 %v4582, %v4586
  %v4591 = vxor.u32 %v4587, 2147483648
  %v4592 = vxor.u32 %v4588, 2147483648
  %v4593 = vxor.u32 %v4589, 2147483648
  %v4594 = vxor.u32 %v4590, 2147483648
  %v4595 = vmul.f32 %v4591, 1.442695
  %v4596 = vpow.pop %v4595
  %v4597 = vmul.f32 %v4592, 1.442695
  %v4598 = vpow.pop %v4597
  %v4599 = vmul.f32 %v4593, 1.442695
  %v4600 = vpow.pop %v4599
  %v4601 = vmul.f32 %v4594, 1.442695
  %v4602 = vpow.pop %v4601
  %v4603 = vadd.f32 %v4596, 1.0
  %v4604 = vadd.f32 %v4598, 1.0
  %v4605 = vadd.f32 %v4600, 1.0
  %v4606 = vadd.f32 %v4602, 1.0
  %v4607 = vrcp.pop %v4603
  %v4608 = vmul.f32 1.0, %v4607
  %v4609 = vrcp.pop %v4604
  %v4610 = vmul.f32 1.0, %v4609
  %v4611 = vrcp.pop %v4605
  %v4612 = vmul.f32 1.0, %v4611
  %v4613 = vrcp.pop %v4606
  %v4614 = vmul.f32 1.0, %v4613
  %v4615 = vmul.f32 %v4587, %v4608
  %v4616 = vmul.f32 %v4588, %v4610
  %v4617 = vmul.f32 %v4589, %v4612
  %v4618 = vmul.f32 %v4590, %v4614
  %v4619 = vld [vmem:[%s2 + $0x310] sm:$0x7]
  %v4620 = vld [vmem:[%s2 + $0x2b0] sm:$0xff]
  %v4621 = vld [vmem:[%s2 + $0x2c0] sm:$0xff]
  %v4622 = vld [vmem:[%s2 + $0x2d0] sm:$0xff]
  %v4623 = vld [vmem:[%s2 + $0x2e0] sm:$0xff]
  %v4624 = vld [vmem:[%s2 + $0x2f0] sm:$0xff]
  %v4625 = vld [vmem:[%s2 + $0x300] sm:$0xff]
  %v4626 = vlaneseq
  %v4627 = vshrl.u32 %v4626, 7
  %v4628 = vsub.s32 0, %v4627
  %v4629 = vrot.slane %v4619, %v4628
  %v4631 = vsel %vm3754, %v4615, 0
  %v4634 = vsel %vm3754, %v4616, 0
  %v4637 = vsel %vm3754, %v4617, 0
  %v4640 = vsel %vm3754, %v4618, 0
  %4642 = vmatprep.subr.mxu0 0.0
  %4643 = vmatpush1.msra.mxu0 %v4620
  %4644 = vmatprep.subr.mxu0 0.0
  %4645 = vmatpush1.msra.mxu0 %v4621
  %4646 = vmatprep.subr.mxu0 0.0
  %4647 = vmatpush1.msra.mxu0 %v4622
  %4648 = vmatprep.subr.mxu0 0.0
  %4649 = vmatpush1.msra.mxu0 %v4623
  %4650 = vmatprep.subr.mxu0 0.0
  %4651 = vmatpush1.msra.mxu0 %v4624
  %4652 = vmatprep.subr.mxu0 0.0
  %4653 = vmatpush1.msra.mxu0 %v4625
  %4654 = vmatprep.subr.mxu0 0.0
  %4655 = vmatpush1.msra.mxu0 0.0
  %4656 = vmatprep.subr.mxu0 0.0
  %4657 = vmatpush1.msra.mxu0 0.0
  %4658 = vmatprep.subr.mxu0 0.0
  %4659 = vmatpush1.msra.mxu0 0.0
  %4660 = vmatprep.subr.mxu0 0.0
  %4661 = vmatpush1.msra.mxu0 0.0
  %4662 = vmatprep.subr.mxu0 0.0
  %4663 = vmatpush1.msra.mxu0 0.0
  %4664 = vmatprep.subr.mxu0 0.0
  %4665 = vmatpush1.msra.mxu0 0.0
  %4666 = vmatprep.subr.mxu0 0.0
  %4667 = vmatpush1.msra.mxu0 0.0
  %4668 = vmatprep.subr.mxu0 0.0
  %4669 = vmatpush1.msra.mxu0 0.0
  %4670 = vmatprep.subr.mxu0 0.0
  %4671 = vmatpush1.msra.mxu0 0.0
  %4672 = vmatprep.subr.mxu0 0.0
  %4673 = vmatpush1.msra.mxu0 0.0
  %4674 = vmatprep.subr.mxu0 0.0
  %4675 = vmatpush1.msra.mxu0 0.0
  %4676 = vmatprep.subr.mxu0 0.0
  %4677 = vmatpush1.msra.mxu0 0.0
  %4678 = vmatprep.subr.mxu0 0.0
  %4679 = vmatpush1.msra.mxu0 0.0
  %4680 = vmatprep.subr.mxu0 0.0
  %4681 = vmatpush1.msra.mxu0 0.0
  %4682 = vmatprep.subr.mxu0 0.0
  %4683 = vmatpush1.msra.mxu0 0.0
  %4684 = vmatprep.subr.mxu0 0.0
  %4685 = vmatpush1.msra.mxu0 0.0
  %4686 = vmatprep.subr.mxu0 0.0
  %4687 = vmatpush1.msra.mxu0 0.0
  %4688 = vmatprep.subr.mxu0 0.0
  %4689 = vmatpush1.msra.mxu0 0.0
  %4690 = vmatprep.subr.mxu0 0.0
  %4691 = vmatpush1.msra.mxu0 0.0
  %4692 = vmatprep.subr.mxu0 0.0
  %4693 = vmatpush1.msra.mxu0 0.0
  %4694 = vmatprep.subr.mxu0 0.0
  %4695 = vmatpush1.msra.mxu0 0.0
  %4696 = vmatprep.subr.mxu0 0.0
  %4697 = vmatpush1.msra.mxu0 0.0
  %4698 = vmatprep.subr.mxu0 0.0
  %4699 = vmatpush1.msra.mxu0 0.0
  %4700 = vmatprep.subr.mxu0 0.0
  %4701 = vmatpush1.msra.mxu0 0.0
  %4702 = vmatprep.subr.mxu0 0.0
  %4703 = vmatpush1.msra.mxu0 0.0
  %4704 = vmatprep.subr.mxu0 0.0
  %4705 = vmatpush1.msra.mxu0 0.0
  %4706 = vmatprep.mubr.f32.mxu0 0.0
  %4707 = vmatmul.mubr.f32.gmra.mrb[0].mxu0 %v4631
  %v4708 = vpop.f32.mrb[0].mxu0
  %v4709 = vadd.f32 %v4629, %v4708
  %v4710 = vpop.f32.mrb[0].mxu0
  %4711 = vmatprep.mubr.f32.mxu0 0.0
  %4712 = vmatmul.mubr.f32.gmra.mrb[0].mxu0 %v4634
  %v4713 = vpop.f32.mrb[0].mxu0
  %v4714 = vadd.f32 %v4629, %v4713
  %v4715 = vpop.f32.mrb[0].mxu0
  %4716 = vmatprep.mubr.f32.mxu0 0.0
  %4717 = vmatmul.mubr.f32.gmra.mrb[0].mxu0 %v4637
  %v4718 = vpop.f32.mrb[0].mxu0
  %v4719 = vadd.f32 %v4629, %v4718
  %v4720 = vpop.f32.mrb[0].mxu0
  %4721 = vmatprep.mubr.f32.mxu0 0.0
  %4722 = vmatmul.mubr.f32.gmra.mrb[0].mxu0 %v4640
  %v4723 = vpop.f32.mrb[0].mxu0
  %v4724 = vadd.f32 %v4629, %v4723
  %v4725 = vpop.f32.mrb[0].mxu0
  %4726 = vdwg.mxu0
  %v4727 = vsel %vm3961, %v4709, 0.0
  %4728 = vadd.xlane.f32.xlu0 %v4727
  %v4729 = vpop.xlane.xlu0 %4728
  %v4730 = vsel %vm3961, %v4714, 0.0
  %4731 = vadd.xlane.f32.xlu0 %v4730
  %v4732 = vpop.xlane.xlu0 %4731
  %v4733 = vsel %vm3961, %v4719, 0.0
  %4734 = vadd.xlane.f32.xlu0 %v4733
  %v4735 = vpop.xlane.xlu0 %4734
  %v4736 = vsel %vm3971, %v4724, 0.0
  %4737 = vadd.xlane.f32.xlu0 %v4736
  %v4738 = vpop.xlane.xlu0 %4737
  %v4739 = vmul.f32 %v4729, %v3975
  %v4740 = vmul.f32 %v4732, %v3975
  %v4741 = vmul.f32 %v4735, %v3975
  %v4742 = vmul.f32 %v4738, %v3975
  %v4743 = vsub.f32 %v4709, %v4739
  %v4744 = vsub.f32 %v4714, %v4740
  %v4745 = vsub.f32 %v4719, %v4741
  %v4746 = vsub.f32 %v4724, %v4742
  %v4747 = vmul.f32 %v4743, %v4743
  %v4748 = vmul.f32 %v4744, %v4744
  %v4749 = vmul.f32 %v4745, %v4745
  %v4750 = vmul.f32 %v4746, %v4746
  %v4751 = vsel %vm3961, %v4747, 0.0
  %4752 = vadd.xlane.f32.xlu0 %v4751
  %v4753 = vpop.xlane.xlu0 %4752
  %v4754 = vsel %vm3961, %v4748, 0.0
  %4755 = vadd.xlane.f32.xlu0 %v4754
  %v4756 = vpop.xlane.xlu0 %4755
  %v4757 = vsel %vm3961, %v4749, 0.0
  %4758 = vadd.xlane.f32.xlu0 %v4757
  %v4759 = vpop.xlane.xlu0 %4758
  %v4760 = vsel %vm3971, %v4750, 0.0
  %4761 = vadd.xlane.f32.xlu0 %v4760
  %v4762 = vpop.xlane.xlu0 %4761
  %v4763 = vmul.f32 %v4753, %v3975
  %v4764 = vmul.f32 %v4756, %v3975
  %v4765 = vmul.f32 %v4759, %v3975
  %v4766 = vmul.f32 %v4762, %v3975
  %v4767 = vadd.f32 %v4763, 1e-05
  %v4768 = vadd.f32 %v4764, 1e-05
  %v4769 = vadd.f32 %v4765, 1e-05
  %v4770 = vadd.f32 %v4766, 1e-05
  %v4771 = vrsqrt.pop %v4767
  %v4772 = vrsqrt.pop %v4768
  %v4773 = vrsqrt.pop %v4769
  %v4774 = vrsqrt.pop %v4770
  %v4775 = vmul.f32 %v4743, %v4771
  %v4776 = vmul.f32 %v4744, %v4772
  %v4777 = vmul.f32 %v4745, %v4773
  %v4778 = vmul.f32 %v4746, %v4774
  %v4779 = vlaneseq
  %v4780 = vshrl.u32 %v4779, 7
  %v4781 = vsub.s32 1, %v4780
  %v4782 = vrot.slane %v4619, %v4781
  %v4783 = vmul.f32 %v4775, %v4782
  %v4784 = vmul.f32 %v4776, %v4782
  %v4785 = vmul.f32 %v4777, %v4782
  %v4786 = vmul.f32 %v4778, %v4782
  %v4787 = vlaneseq
  %v4788 = vshrl.u32 %v4787, 7
  %v4789 = vsub.s32 2, %v4788
  %v4790 = vrot.slane %v4619, %v4789
  %v4791 = vadd.f32 %v4783, %v4790
  %v4792 = vadd.f32 %v4784, %v4790
  %v4793 = vadd.f32 %v4785, %v4790
  %v4794 = vadd.f32 %v4786, %v4790
  %v4795 = vxor.u32 %v4791, 2147483648
  %v4796 = vxor.u32 %v4792, 2147483648
  %v4797 = vxor.u32 %v4793, 2147483648
  %v4798 = vxor.u32 %v4794, 2147483648
  %v4799 = vmul.f32 %v4795, 1.442695
  %v4800 = vpow.pop %v4799
  %v4801 = vmul.f32 %v4796, 1.442695
  %v4802 = vpow.pop %v4801
  %v4803 = vmul.f32 %v4797, 1.442695
  %v4804 = vpow.pop %v4803
  %v4805 = vmul.f32 %v4798, 1.442695
  %v4806 = vpow.pop %v4805
  %v4807 = vadd.f32 %v4800, 1.0
  %v4808 = vadd.f32 %v4802, 1.0
  %v4809 = vadd.f32 %v4804, 1.0
  %v4810 = vadd.f32 %v4806, 1.0
  %v4811 = vrcp.pop %v4807
  %v4812 = vmul.f32 1.0, %v4811
  %v4813 = vrcp.pop %v4808
  %v4814 = vmul.f32 1.0, %v4813
  %v4815 = vrcp.pop %v4809
  %v4816 = vmul.f32 1.0, %v4815
  %v4817 = vrcp.pop %v4810
  %v4818 = vmul.f32 1.0, %v4817
  %v4819 = vmul.f32 %v4791, %v4812
  %v4820 = vmul.f32 %v4792, %v4814
  %v4821 = vmul.f32 %v4793, %v4816
  %v4822 = vmul.f32 %v4794, %v4818
  %v4823 = vld [vmem:[%s2 + $0x3b0] sm:$0x7]
  %v4824 = vld [vmem:[%s2 + $0x320] sm:$0xff]
  %v4825 = vld [vmem:[%s2 + $0x330] sm:$0xff]
  %v4826 = vld [vmem:[%s2 + $0x340] sm:$0xff]
  %v4827 = vld [vmem:[%s2 + $0x350] sm:$0xff]
  %v4828 = vld [vmem:[%s2 + $0x360] sm:$0xff]
  %v4829 = vld [vmem:[%s2 + $0x370] sm:$0xff]
  %v4830 = vld [vmem:[%s2 + $0x380] sm:$0xff]
  %v4831 = vld [vmem:[%s2 + $0x390] sm:$0xff]
  %v4832 = vld [vmem:[%s2 + $0x3a0] sm:$0xff]
  %v4833 = vlaneseq
  %v4834 = vshrl.u32 %v4833, 7
  %v4835 = vsub.s32 0, %v4834
  %v4836 = vrot.slane %v4823, %v4835
  %v4838 = vsel %vm3961, %v4819, 0
  %v4841 = vsel %vm3961, %v4820, 0
  %v4844 = vsel %vm3961, %v4821, 0
  %v4847 = vsel %vm3961, %v4822, 0
  %4849 = vmatprep.subr.mxu0 0.0
  %4850 = vmatpush1.msra.mxu0 %v4824
  %4851 = vmatprep.subr.mxu0 0.0
  %4852 = vmatpush1.msra.mxu0 %v4825
  %4853 = vmatprep.subr.mxu0 0.0
  %4854 = vmatpush1.msra.mxu0 %v4826
  %4855 = vmatprep.subr.mxu0 0.0
  %4856 = vmatpush1.msra.mxu0 %v4827
  %4857 = vmatprep.subr.mxu0 0.0
  %4858 = vmatpush1.msra.mxu0 %v4828
  %4859 = vmatprep.subr.mxu0 0.0
  %4860 = vmatpush1.msra.mxu0 %v4829
  %4861 = vmatprep.subr.mxu0 0.0
  %4862 = vmatpush1.msra.mxu0 %v4830
  %4863 = vmatprep.subr.mxu0 0.0
  %4864 = vmatpush1.msra.mxu0 %v4831
  %4865 = vmatprep.subr.mxu0 0.0
  %4866 = vmatpush1.msra.mxu0 %v4832
  %4867 = vmatprep.subr.mxu0 0.0
  %4868 = vmatpush1.msra.mxu0 0.0
  %4869 = vmatprep.subr.mxu0 0.0
  %4870 = vmatpush1.msra.mxu0 0.0
  %4871 = vmatprep.subr.mxu0 0.0
  %4872 = vmatpush1.msra.mxu0 0.0
  %4873 = vmatprep.subr.mxu0 0.0
  %4874 = vmatpush1.msra.mxu0 0.0
  %4875 = vmatprep.subr.mxu0 0.0
  %4876 = vmatpush1.msra.mxu0 0.0
  %4877 = vmatprep.subr.mxu0 0.0
  %4878 = vmatpush1.msra.mxu0 0.0
  %4879 = vmatprep.subr.mxu0 0.0
  %4880 = vmatpush1.msra.mxu0 0.0
  %4881 = vmatprep.subr.mxu0 0.0
  %4882 = vmatpush1.msra.mxu0 0.0
  %4883 = vmatprep.subr.mxu0 0.0
  %4884 = vmatpush1.msra.mxu0 0.0
  %4885 = vmatprep.subr.mxu0 0.0
  %4886 = vmatpush1.msra.mxu0 0.0
  %4887 = vmatprep.subr.mxu0 0.0
  %4888 = vmatpush1.msra.mxu0 0.0
  %4889 = vmatprep.subr.mxu0 0.0
  %4890 = vmatpush1.msra.mxu0 0.0
  %4891 = vmatprep.subr.mxu0 0.0
  %4892 = vmatpush1.msra.mxu0 0.0
  %4893 = vmatprep.subr.mxu0 0.0
  %4894 = vmatpush1.msra.mxu0 0.0
  %4895 = vmatprep.subr.mxu0 0.0
  %4896 = vmatpush1.msra.mxu0 0.0
  %4897 = vmatprep.subr.mxu0 0.0
  %4898 = vmatpush1.msra.mxu0 0.0
  %4899 = vmatprep.subr.mxu0 0.0
  %4900 = vmatpush1.msra.mxu0 0.0
  %4901 = vmatprep.subr.mxu0 0.0
  %4902 = vmatpush1.msra.mxu0 0.0
  %4903 = vmatprep.subr.mxu0 0.0
  %4904 = vmatpush1.msra.mxu0 0.0
  %4905 = vmatprep.subr.mxu0 0.0
  %4906 = vmatpush1.msra.mxu0 0.0
  %4907 = vmatprep.subr.mxu0 0.0
  %4908 = vmatpush1.msra.mxu0 0.0
  %4909 = vmatprep.subr.mxu0 0.0
  %4910 = vmatpush1.msra.mxu0 0.0
  %4911 = vmatprep.subr.mxu0 0.0
  %4912 = vmatpush1.msra.mxu0 0.0
  %4913 = vmatprep.mubr.f32.mxu0 0.0
  %4914 = vmatmul.mubr.f32.gmra.mrb[0].mxu0 %v4838
  %v4915 = vpop.f32.mrb[0].mxu0
  %v4916 = vadd.f32 %v4836, %v4915
  %v4917 = vpop.f32.mrb[0].mxu0
  %4918 = vmatprep.mubr.f32.mxu0 0.0
  %4919 = vmatmul.mubr.f32.gmra.mrb[0].mxu0 %v4841
  %v4920 = vpop.f32.mrb[0].mxu0
  %v4921 = vadd.f32 %v4836, %v4920
  %v4922 = vpop.f32.mrb[0].mxu0
  %4923 = vmatprep.mubr.f32.mxu0 0.0
  %4924 = vmatmul.mubr.f32.gmra.mrb[0].mxu0 %v4844
  %v4925 = vpop.f32.mrb[0].mxu0
  %v4926 = vadd.f32 %v4836, %v4925
  %v4927 = vpop.f32.mrb[0].mxu0
  %4928 = vmatprep.mubr.f32.mxu0 0.0
  %4929 = vmatmul.mubr.f32.gmra.mrb[0].mxu0 %v4847
  %v4930 = vpop.f32.mrb[0].mxu0
  %v4931 = vadd.f32 %v4836, %v4930
  %v4932 = vpop.f32.mrb[0].mxu0
  %4933 = vdwg.mxu0
  %v4934 = vsel %vm4171, %v4916, 0.0
  %4935 = vadd.xlane.f32.xlu0 %v4934
  %v4936 = vpop.xlane.xlu0 %4935
  %v4937 = vsel %vm4171, %v4921, 0.0
  %4938 = vadd.xlane.f32.xlu0 %v4937
  %v4939 = vpop.xlane.xlu0 %4938
  %v4940 = vsel %vm4171, %v4926, 0.0
  %4941 = vadd.xlane.f32.xlu0 %v4940
  %v4942 = vpop.xlane.xlu0 %4941
  %v4943 = vsel %vm4181, %v4931, 0.0
  %4944 = vadd.xlane.f32.xlu0 %v4943
  %v4945 = vpop.xlane.xlu0 %4944
  %v4946 = vmul.f32 %v4936, %v4185
  %v4947 = vmul.f32 %v4939, %v4185
  %v4948 = vmul.f32 %v4942, %v4185
  %v4949 = vmul.f32 %v4945, %v4185
  %v4950 = vsub.f32 %v4916, %v4946
  %v4951 = vsub.f32 %v4921, %v4947
  %v4952 = vsub.f32 %v4926, %v4948
  %v4953 = vsub.f32 %v4931, %v4949
  %v4954 = vmul.f32 %v4950, %v4950
  %v4955 = vmul.f32 %v4951, %v4951
  %v4956 = vmul.f32 %v4952, %v4952
  %v4957 = vmul.f32 %v4953, %v4953
  %v4958 = vsel %vm4171, %v4954, 0.0
  %4959 = vadd.xlane.f32.xlu0 %v4958
  %v4960 = vpop.xlane.xlu0 %4959
  %v4961 = vsel %vm4171, %v4955, 0.0
  %4962 = vadd.xlane.f32.xlu0 %v4961
  %v4963 = vpop.xlane.xlu0 %4962
  %v4964 = vsel %vm4171, %v4956, 0.0
  %4965 = vadd.xlane.f32.xlu0 %v4964
  %v4966 = vpop.xlane.xlu0 %4965
  %v4967 = vsel %vm4181, %v4957, 0.0
  %4968 = vadd.xlane.f32.xlu0 %v4967
  %v4969 = vpop.xlane.xlu0 %4968
  %v4970 = vmul.f32 %v4960, %v4185
  %v4971 = vmul.f32 %v4963, %v4185
  %v4972 = vmul.f32 %v4966, %v4185
  %v4973 = vmul.f32 %v4969, %v4185
  %v4974 = vadd.f32 %v4970, 1e-05
  %v4975 = vadd.f32 %v4971, 1e-05
  %v4976 = vadd.f32 %v4972, 1e-05
  %v4977 = vadd.f32 %v4973, 1e-05
  %v4978 = vrsqrt.pop %v4974
  %v4979 = vrsqrt.pop %v4975
  %v4980 = vrsqrt.pop %v4976
  %v4981 = vrsqrt.pop %v4977
  %v4982 = vmul.f32 %v4950, %v4978
  %v4983 = vmul.f32 %v4951, %v4979
  %v4984 = vmul.f32 %v4952, %v4980
  %v4985 = vmul.f32 %v4953, %v4981
  %v4986 = vlaneseq
  %v4987 = vshrl.u32 %v4986, 7
  %v4988 = vsub.s32 1, %v4987
  %v4989 = vrot.slane %v4823, %v4988
  %v4990 = vmul.f32 %v4982, %v4989
  %v4991 = vmul.f32 %v4983, %v4989
  %v4992 = vmul.f32 %v4984, %v4989
  %v4993 = vmul.f32 %v4985, %v4989
  %v4994 = vlaneseq
  %v4995 = vshrl.u32 %v4994, 7
  %v4996 = vsub.s32 2, %v4995
  %v4997 = vrot.slane %v4823, %v4996
  %v4998 = vadd.f32 %v4990, %v4997
  %v4999 = vadd.f32 %v4991, %v4997
  %v5000 = vadd.f32 %v4992, %v4997
  %v5001 = vadd.f32 %v4993, %v4997
  %v5002 = vxor.u32 %v4998, 2147483648
  %v5003 = vxor.u32 %v4999, 2147483648
  %v5004 = vxor.u32 %v5000, 2147483648
  %v5005 = vxor.u32 %v5001, 2147483648
  %v5006 = vmul.f32 %v5002, 1.442695
  %v5007 = vpow.pop %v5006
  %v5008 = vmul.f32 %v5003, 1.442695
  %v5009 = vpow.pop %v5008
  %v5010 = vmul.f32 %v5004, 1.442695
  %v5011 = vpow.pop %v5010
  %v5012 = vmul.f32 %v5005, 1.442695
  %v5013 = vpow.pop %v5012
  %v5014 = vadd.f32 %v5007, 1.0
  %v5015 = vadd.f32 %v5009, 1.0
  %v5016 = vadd.f32 %v5011, 1.0
  %v5017 = vadd.f32 %v5013, 1.0
  %v5018 = vrcp.pop %v5014
  %v5019 = vmul.f32 1.0, %v5018
  %v5020 = vrcp.pop %v5015
  %v5021 = vmul.f32 1.0, %v5020
  %v5022 = vrcp.pop %v5016
  %v5023 = vmul.f32 1.0, %v5022
  %v5024 = vrcp.pop %v5017
  %v5025 = vmul.f32 1.0, %v5024
  %v5026 = vmul.f32 %v4998, %v5019
  %v5027 = vmul.f32 %v4999, %v5021
  %v5028 = vmul.f32 %v5000, %v5023
  %v5029 = vmul.f32 %v5001, %v5025
  %v5030 = vld [vmem:[%s2 + $0x3c0] sm:$0xff]
  %v5031 = vld [vmem:[%s2 + $0x3c8] sm:$0xff]
  %v5032 = vld [vmem:[%s2 + $0x3d0] sm:$0xff]
  %v5033 = vld [vmem:[%s2 + $0x3d8] sm:$0xff]
  %v5034 = vld [vmem:[%s2 + $0x3e0] sm:$0xff]
  %v5035 = vld [vmem:[%s2 + $0x3e8] sm:$0xff]
  %v5036 = vld [vmem:[%s2 + $0x3f0] sm:$0xff]
  %v5037 = vld [vmem:[%s2 + $0x3f8] sm:$0xff]
  %v5038 = vld [vmem:[%s2 + $0x400] sm:$0xff]
  %v5039 = vld [vmem:[%s2 + $0x408] sm:$0xff]
  %v5040 = vld [vmem:[%s2 + $0x410] sm:$0xff]
  %v5041 = vld [vmem:[%s2 + $0x418] sm:$0xff]
  %v5042 = vld [vmem:[%s2 + $0x420] sm:$0xff]
  %v5043 = vld [vmem:[%s2 + $0x428] sm:$0xff]
  %v5044 = vld [vmem:[%s2 + $0x430] sm:$0xff]
  %v5045 = vld [vmem:[%s2 + $0x438] sm:$0xff]
  %v5046 = vld [vmem:[%s2 + $0x440] sm:$0xff]
  %v5047 = vld [vmem:[%s2 + $0x448] sm:$0xff]
  %v5048 = vld [vmem:[%s2 + $0x450] sm:$0xff]
  %v5049 = vld [vmem:[%s2 + $0x458] sm:$0xff]
  %v5050 = vld [vmem:[%s2 + $0x460] sm:$0xff]
  %v5051 = vld [vmem:[%s2 + $0x468] sm:$0xff]
  %v5052 = vld [vmem:[%s2 + $0x470] sm:$0xff]
  %v5053 = vld [vmem:[%s2 + $0x478] sm:$0xff]
  %v5054 = vld [vmem:[%s2 + $0x480] sm:$0xff]
  %v5055 = vld [vmem:[%s2 + $0x488] sm:$0xff]
  %v5056 = vld [vmem:[%s2 + $0x490] sm:$0xff]
  %v5057 = vld [vmem:[%s2 + $0x498] sm:$0xff]
  %v5058 = vld [vmem:[%s2 + $0x4a0] sm:$0xf]
  %v5059 = vld [vmem:[%s2 + $0x4a8] sm:$0xf]
  %s5060 = scalar_lea.vmem %s2, 1200
  %v5061 = vld [vmem:[%s5060] ss:$8 sm:$0x3]
  %v5063 = vlaneseq
  %v5064 = vshrl.u32 %v5063, 7
  %v5065 = vsub.s32 0, %v5064
  %v5066 = vrot.slane %v5061, %v5065
  %v5067 = vlaneseq
  %v5068 = vshrl.u32 %v5067, 7
  %v5069 = vsub.s32 1, %v5068
  %v5070 = vrot.slane %v5061, %v5069
  %v5074 = vsel %vm4171, %v5026, 0
  %v5077 = vsel %vm4171, %v5027, 0
  %v5080 = vsel %vm4171, %v5028, 0
  %v5083 = vsel %vm4171, %v5029, 0
  %v5086 = vsel %vm4325, %v5058, 0
  %v5089 = vsel %vm4325, %v5059, 0
  %5091 = vmatprep.subr.mxu0 %v5031
  %5092 = vmatpush1.msra.mxu0 %v5030
  %5093 = vmatprep.subr.mxu0 %v5033
  %5094 = vmatpush1.msra.mxu0 %v5032
  %5095 = vmatprep.subr.mxu0 %v5035
  %5096 = vmatpush1.msra.mxu0 %v5034
  %5097 = vmatprep.subr.mxu0 %v5037
  %5098 = vmatpush1.msra.mxu0 %v5036
  %5099 = vmatprep.subr.mxu0 %v5039
  %5100 = vmatpush1.msra.mxu0 %v5038
  %5101 = vmatprep.subr.mxu0 %v5041
  %5102 = vmatpush1.msra.mxu0 %v5040
  %5103 = vmatprep.subr.mxu0 %v5043
  %5104 = vmatpush1.msra.mxu0 %v5042
  %5105 = vmatprep.subr.mxu0 %v5045
  %5106 = vmatpush1.msra.mxu0 %v5044
  %5107 = vmatprep.subr.mxu0 %v5047
  %5108 = vmatpush1.msra.mxu0 %v5046
  %5109 = vmatprep.subr.mxu0 %v5049
  %5110 = vmatpush1.msra.mxu0 %v5048
  %5111 = vmatprep.subr.mxu0 %v5051
  %5112 = vmatpush1.msra.mxu0 %v5050
  %5113 = vmatprep.subr.mxu0 %v5053
  %5114 = vmatpush1.msra.mxu0 %v5052
  %5115 = vmatprep.subr.mxu0 %v5055
  %5116 = vmatpush1.msra.mxu0 %v5054
  %5117 = vmatprep.subr.mxu0 %v5057
  %5118 = vmatpush1.msra.mxu0 %v5056
  %5119 = vmatprep.subr.mxu0 %v5089
  %5120 = vmatpush1.msra.mxu0 %v5086
  %5121 = vmatprep.subr.mxu0 0.0
  %5122 = vmatpush1.msra.mxu0 0.0
  %5123 = vmatprep.subr.mxu0 0.0
  %5124 = vmatpush1.msra.mxu0 0.0
  %5125 = vmatprep.subr.mxu0 0.0
  %5126 = vmatpush1.msra.mxu0 0.0
  %5127 = vmatprep.subr.mxu0 0.0
  %5128 = vmatpush1.msra.mxu0 0.0
  %5129 = vmatprep.subr.mxu0 0.0
  %5130 = vmatpush1.msra.mxu0 0.0
  %5131 = vmatprep.subr.mxu0 0.0
  %5132 = vmatpush1.msra.mxu0 0.0
  %5133 = vmatprep.subr.mxu0 0.0
  %5134 = vmatpush1.msra.mxu0 0.0
  %5135 = vmatprep.subr.mxu0 0.0
  %5136 = vmatpush1.msra.mxu0 0.0
  %5137 = vmatprep.subr.mxu0 0.0
  %5138 = vmatpush1.msra.mxu0 0.0
  %5139 = vmatprep.subr.mxu0 0.0
  %5140 = vmatpush1.msra.mxu0 0.0
  %5141 = vmatprep.subr.mxu0 0.0
  %5142 = vmatpush1.msra.mxu0 0.0
  %5143 = vmatprep.subr.mxu0 0.0
  %5144 = vmatpush1.msra.mxu0 0.0
  %5145 = vmatprep.subr.mxu0 0.0
  %5146 = vmatpush1.msra.mxu0 0.0
  %5147 = vmatprep.subr.mxu0 0.0
  %5148 = vmatpush1.msra.mxu0 0.0
  %5149 = vmatprep.subr.mxu0 0.0
  %5150 = vmatpush1.msra.mxu0 0.0
  %5151 = vmatprep.subr.mxu0 0.0
  %5152 = vmatpush1.msra.mxu0 0.0
  %5153 = vmatprep.subr.mxu0 0.0
  %5154 = vmatpush1.msra.mxu0 0.0
  %5155 = vmatprep.mubr.f32.mxu0 0.0
  %5156 = vmatmul.mubr.f32.gmra.mrb[0].mxu0 %v5074
  %v5157 = vpop.f32.mrb[0].mxu0
  %v5158 = vpop.f32.mrb[0].mxu0
  %5159 = vmatprep.mubr.f32.mxu0 0.0
  %5160 = vmatmul.mubr.f32.gmra.mrb[0].mxu0 %v5077
  %v5161 = vpop.f32.mrb[0].mxu0
  %v5162 = vadd.f32 %v5066, %v5161
  %v5163 = vpop.f32.mrb[0].mxu0
  %v5164 = vadd.f32 %v5070, %v5163
  %5165 = vmatprep.mubr.f32.mxu0 0.0
  %5166 = vmatmul.mubr.f32.gmra.mrb[0].mxu0 %v5080
  %v5167 = vpop.f32.mrb[0].mxu0
  %v5168 = vpop.f32.mrb[0].mxu0
  %5169 = vmatprep.mubr.f32.mxu0 0.0
  %5170 = vmatmul.mubr.f32.gmra.mrb[0].mxu0 %v5083
  %v5171 = vpop.f32.mrb[0].mxu0
  %v5172 = vadd.f32 %v5066, %v5171
  %v5173 = vpop.f32.mrb[0].mxu0
  %v5174 = vadd.f32 %v5070, %v5173
  %5175 = vdwg.mxu0
  %v5176 = vtanh.pop %v5162
  %v5177 = vtanh.pop %v5164
  %v5178 = vtanh.pop %v5172
  %v5179 = vtanh.pop %v5174
  %5180 = vst [vmem:[%s3] sm:$0xff] %v4421
  %vm5181 = vcmask 424960
  %5182 = vst.msk [vmem:[%s3 + $0x8] sm:$0xff] %vm5181, %v4422
  %5183 = vst [vmem:[%s3 + $0x10] sm:$0x1f] %v4423
  %vm5184 = vcmask 421888
  %5185 = vst.msk [vmem:[%s3 + $0x18] sm:$0x1f] %vm5184, %v4424
  %5186 = vst [vmem:[%s3 + $0x10] sm:$0x60] %v5176
  %vm5187 = vcmask 423941
  %5188 = vst.msk [vmem:[%s3 + $0x18] sm:$0x60] %vm5187, %v5177
  %5189 = vst [vmem:[%s3 + $0x10] sm:$0x80] %v4423
  %vm5190 = vcmask 424967
  %5191 = vst.msk [vmem:[%s3 + $0x18] sm:$0x80] %vm5190, %v4424
  %5192 = vst [vmem:[%s3 + $0x20] sm:$0xff] %v4425
  %5193 = vst.msk [vmem:[%s3 + $0x28] sm:$0xff] %vm5181, %v4426
  %5194 = vst [vmem:[%s3 + $0x30] sm:$0xf] %v4427
  %vm5195 = vcmask 420864
  %5196 = vst.msk [vmem:[%s3 + $0x38] sm:$0xf] %vm5195, %v4428
  %5197 = vst [vmem:[%s3 + $0x30] sm:$0x30] %v5178
  %vm5198 = vcmask 422916
  %5199 = vst.msk [vmem:[%s3 + $0x38] sm:$0x30] %vm5198, %v5179
  // Predicated region
  $region14: #{fwd.1} parent=0 // pred_check
    _
  $region15: #{fwd.1} parent=0 // pred_check_branch
    %5201 = sbr.rel (0) target = $region17
  $region16: #{fwd.1} parent=0 // pred_region
    _
  $region17: #{fwd.1} parent=0 // pred_fallthru
    _
  // Predicated region
  $region18: #{fwd.1} parent=0 // pred_check
    _
  $region19: #{fwd.1} parent=0 // pred_check_branch
    %5203 = sbr.rel (0) target = $region21
  $region20: #{fwd.1} parent=0 // pred_region
    _
  $region21: #{fwd.1} parent=0 // pred_fallthru
    _

</llo_original>
